<compile_context>
chip_gen: v5e
topology: v5e:2x2
jax: 0.10.0
libtpu: 0.0.40
codegen_flags: <defaults>
</compile_context>

<pallas_src>
import jax
import jax.numpy as jnp
from jax import lax
from jax.experimental import pallas as pl
from jax.experimental.pallas import tpu as pltpu


def _round_up(n, m):
    return ((n + m - 1) // m) * m


def _lstm_cluster_kernel(x_ref, mask_ref, we_ref, be_ref,
                         wih_ref, whh_ref, b_ref, o_ref, gin_ref):
    # x_ref:   (TB, L, F)     mask_ref: (TB, L)
    # we_ref:  (F, E)         be_ref:   (1, E)
    # wih_ref: (E, 4H)        whh_ref:  (H, 4H)   b_ref: (1, 4H)
    # o_ref:   (TB, H)        gin_ref:  (TB, L, 4H) VMEM scratch
    TB, L, F = x_ref.shape
    H = o_ref.shape[1]
    NH = 4 * H

    # ---------------- Hoisted, recurrence-independent work ----------------
    # Two large MXU matmuls with M = TB*L instead of L tiny per-step matmuls.
    # Flatten (TB, L, F) -> (TB*L, F): last dim unchanged, cheap relayout
    # (exactly free when L == 8: each (L, F) block is one sublane tile).
    x2 = x_ref[...].reshape(TB * L, F)
    e = jnp.dot(x2, we_ref[...], preferred_element_type=jnp.float32) + be_ref[...]
    e = jnp.maximum(e, 0.0)          # ReLU; mask is folded in after W_ih (commutes)
    # Input-to-hidden gate pre-activations for every timestep at once.
    gin_ref[...] = jnp.dot(e, wih_ref[...],
                           preferred_element_type=jnp.float32).reshape(TB, L, NH)

    mask = mask_ref[...]             # (TB, L)   lane-dense block, read once
    whh = whh_ref[...]               # (H, 4H)
    b = b_ref[...]                   # (1, 4H)   = b_ih + b_hh

    h = jnp.zeros((TB, H), jnp.float32)
    c = jnp.zeros((TB, H), jnp.float32)

    # ---------------- Serial LSTM recurrence, fully unrolled ----------------
    # L is static and small; a Python loop gives constant time indices so the
    # scheduler can hoist the mask multiply / gin loads off the carry chain.
    for t in range(L):
        # Row scaling by the {0,1} mask commutes with the W_ih matmul, so
        # scaling the precomputed pre-activations == masking the embedding.
        m_t = mask[:, t:t + 1]                                    # (TB, 1)
        gates = (gin_ref[:, t, :] * m_t
                 + jnp.dot(h, whh, preferred_element_type=jnp.float32)
                 + b)                                             # (TB, 4H)
        # Full-vreg (4H = 128 lane) EUP ops, then static slices (i, f, g, o).
        sig = jax.nn.sigmoid(gates)
        tnh = jnp.tanh(gates)
        i_g = sig[:, 0:H]
        f_g = sig[:, H:2 * H]
        g_g = tnh[:, 2 * H:3 * H]
        o_g = sig[:, 3 * H:4 * H]
        c = f_g * c + i_g * g_g
        h = o_g * jnp.tanh(c)

    o_ref[...] = h.astype(o_ref.dtype)


def lstm_cluster_forward(x, mask, params, *, tb=128):
    """x: [..., L, F], mask: [..., L] (or None)  ->  [..., H]"""
    orig_shape = x.shape
    L, F = orig_shape[-2], orig_shape[-1]
    xf = x.reshape(-1, L, F).astype(jnp.float32)
    B = xf.shape[0]
    if mask is None:
        mf = jnp.ones((B, L), jnp.float32)
    else:
        mf = mask.reshape(-1, L).astype(jnp.float32)

    we, be, wih, whh, b = (params["we"], params["be"], params["wih"],
                           params["whh"], params["b"])
    E = we.shape[1]
    H = whh.shape[0]

    # Batch tile: large for real workloads, shrunk (to a multiple of 8) for
    # small batches.  Batch is zero-padded to a tile multiple; padded rows are
    # sliced off below (they are NOT neutral to the recurrence, only discarded).
    tb = max(8, min(tb, _round_up(B, 8)))
    Bp = _round_up(B, tb)
    if Bp != B:
        xf = jnp.pad(xf, ((0, Bp - B), (0, 0), (0, 0)))
        mf = jnp.pad(mf, ((0, Bp - B), (0, 0)))

    out = pl.pallas_call(
        _lstm_cluster_kernel,
        out_shape=jax.ShapeDtypeStruct((Bp, H), jnp.float32),
        grid_spec=pltpu.PrefetchScalarGridSpec(
            num_scalar_prefetch=0,
            grid=(Bp // tb,),                      # keep >= 2 steps on v7x when B allows
            in_specs=[
                pl.BlockSpec((tb, L, F), lambda i: (i, 0, 0)),   # x
                pl.BlockSpec((tb, L), lambda i: (i, 0)),         # mask (lane-dense)
                pl.BlockSpec((F, E), lambda i: (0, 0)),          # We
                pl.BlockSpec((1, E), lambda i: (0, 0)),          # be
                pl.BlockSpec((E, 4 * H), lambda i: (0, 0)),      # W_ih
                pl.BlockSpec((H, 4 * H), lambda i: (0, 0)),      # W_hh
                pl.BlockSpec((1, 4 * H), lambda i: (0, 0)),      # b_ih + b_hh
            ],
            out_specs=pl.BlockSpec((tb, H), lambda i: (i, 0)),
            scratch_shapes=[pltpu.VMEM((tb, L, 4 * H), jnp.float32)],  # hoisted g_in
        ),
        compiler_params=pltpu.CompilerParams(
            dimension_semantics=("parallel",),
            # Explicit limit with headroom: well under v7x's 64 MiB physical
            # VMEM; this kernel only needs a few MiB per batch tile.
            vmem_limit_bytes=48 * 1024 * 1024,
        ),
    )(xf, mf, we, be, wih, whh, b)

    out = out[:B]
    return out.reshape(orig_shape[:-2] + (H,))


def _reference_forward(x, mask, params):
    """Pure-JAX reference with identical semantics."""
    orig_shape = x.shape
    L, F = orig_shape[-2], orig_shape[-1]
    xf = x.reshape(-1, L, F).astype(jnp.float32)
    mf = mask.reshape(-1, L).astype(jnp.float32)
    we, be, wih, whh, b = (params["we"], params["be"], params["wih"],
                           params["whh"], params["b"])
    H = whh.shape[0]
    B = xf.shape[0]
    e = jnp.maximum(jnp.einsum("blf,fe->ble", xf, we) + be[0], 0.0)
    e = e * mf[..., None]

    def step(carry, e_t):
        h, c = carry
        gates = e_t @ wih + h @ whh + b[0]
        i_g = jax.nn.sigmoid(gates[:, 0:H])
        f_g = jax.nn.sigmoid(gates[:, H:2 * H])
        g_g = jnp.tanh(gates[:, 2 * H:3 * H])
        o_g = jax.nn.sigmoid(gates[:, 3 * H:4 * H])
        c = f_g * c + i_g * g_g
        h = o_g * jnp.tanh(c)
        return (h, c), None

    (h, _), _ = lax.scan(step,
                         (jnp.zeros((B, H), jnp.float32),
                          jnp.zeros((B, H), jnp.float32)),
                         jnp.swapaxes(e, 0, 1))
    return h.reshape(orig_shape[:-2] + (H,))


if __name__ == "__main__":
    # Small shapes: L=8, F=16, embed E=32, hidden H=32.
    L, F, E, H = 8, 16, 32, 32

    key = jax.random.PRNGKey(0)
    kx, km = jax.random.split(key)

    # Deterministic synthetic parameters.
    pkey = jax.random.PRNGKey(42)
    k1, k2, k3, k4, k5 = jax.random.split(pkey, 5)
    params = {
        "we":  0.1 * jax.random.normal(k1, (F, E), dtype=jnp.float32),
        "be":  0.1 * jax.random.normal(k2, (1, E), dtype=jnp.float32),
        "wih": 0.1 * jax.random.normal(k3, (E, 4 * H), dtype=jnp.float32),
        "whh": 0.1 * jax.random.normal(k4, (H, 4 * H), dtype=jnp.float32),
        "b":   0.1 * jax.random.normal(k5, (1, 4 * H), dtype=jnp.float32),
    }

    # Case 1: batch divisible by the tile (no padding path).
    x1 = jax.random.normal(kx, (2, 8, L, F), dtype=jnp.float32)
    m1 = (jax.random.uniform(km, (2, 8, L)) > 0.3).astype(jnp.float32)
    out1 = jax.block_until_ready(lstm_cluster_forward(x1, m1, params))
    assert out1.shape == (2, 8, H), out1.shape
    ref1 = jax.block_until_ready(_reference_forward(x1, m1, params))
    assert jnp.allclose(out1, ref1, atol=1e-5, rtol=1e-5), (
        float(jnp.max(jnp.abs(out1 - ref1))))

    # Case 2: ragged batch (exercises pad-to-tile + slice-off of padded rows).
    x2 = jax.random.normal(kx, (2, 7, L, F), dtype=jnp.float32)
    m2 = (jax.random.uniform(km, (2, 7, L)) > 0.3).astype(jnp.float32)
    out2 = jax.block_until_ready(lstm_cluster_forward(x2, m2, params))
    assert out2.shape == (2, 7, H), out2.shape
    ref2 = jax.block_until_ready(_reference_forward(x2, m2, params))
    assert jnp.allclose(out2, ref2, atol=1e-5, rtol=1e-5), (
        float(jnp.max(jnp.abs(out2 - ref2))))

    print("KERNEL_OK")
</pallas_src>

<mosaic_0001>
module attributes {stable_mosaic.version = 11 : i64} {
  func.func @_lstm_cluster_kernel(%arg0: i32, %arg1: memref<16x8x16xf32, #tpu.memory_space<vmem>>, %arg2: memref<16x8xf32, #tpu.memory_space<vmem>>, %arg3: memref<16x32xf32, #tpu.memory_space<vmem>>, %arg4: memref<1x32xf32, #tpu.memory_space<vmem>>, %arg5: memref<32x128xf32, #tpu.memory_space<vmem>>, %arg6: memref<32x128xf32, #tpu.memory_space<vmem>>, %arg7: memref<1x128xf32, #tpu.memory_space<vmem>>, %arg8: memref<16x32xf32, #tpu.memory_space<vmem>>, %arg9: memref<16x8x128xf32, #tpu.memory_space<vmem>>) attributes {dimension_semantics = [#tpu.dimension_semantics<parallel>], iteration_bounds = array<i64: 1>, scalar_prefetch = 0 : i64, scratch_operands = 1 : i64, tpu.core_type = #tpu.core_type<tc>, window_params = [{transform_indices = @transform_0, window_bounds = array<i64: 16, 8, 16>}, {transform_indices = @transform_1, window_bounds = array<i64: 16, 8>}, {pipeline_mode = #tpu.pipeline_mode<synchronous>, transform_indices = @transform_2, window_bounds = array<i64: 16, 32>}, {pipeline_mode = #tpu.pipeline_mode<synchronous>, transform_indices = @transform_3, window_bounds = array<i64: 1, 32>}, {pipeline_mode = #tpu.pipeline_mode<synchronous>, transform_indices = @transform_4, window_bounds = array<i64: 32, 128>}, {pipeline_mode = #tpu.pipeline_mode<synchronous>, transform_indices = @transform_5, window_bounds = array<i64: 32, 128>}, {pipeline_mode = #tpu.pipeline_mode<synchronous>, transform_indices = @transform_6, window_bounds = array<i64: 1, 128>}, {transform_indices = @transform_7, window_bounds = array<i64: 16, 32>}]} {
    %c0 = arith.constant 0 : index
    %c0_0 = arith.constant 0 : index
    %c0_1 = arith.constant 0 : index
    %0 = vector.load %arg1[%c0, %c0_0, %c0_1] : memref<16x8x16xf32, #tpu.memory_space<vmem>>, vector<16x8x16xf32>
    %1 = vector.shape_cast %0 : vector<16x8x16xf32> to vector<128x16xf32>
    %c0_2 = arith.constant 0 : index
    %c0_3 = arith.constant 0 : index
    %2 = vector.load %arg3[%c0_2, %c0_3] : memref<16x32xf32, #tpu.memory_space<vmem>>, vector<16x32xf32>
    %cst = arith.constant dense<0.000000e+00> : vector<128x32xf32>
    %3 = tpu.matmul %1, %2, %cst {dimension_numbers = #tpu.dot_dimension_numbers<[1], [0], [0], [1], [0, 0, 1, 1], [], []>} : vector<128x16xf32>, vector<16x32xf32>, vector<128x32xf32> -> vector<128x32xf32>
    %c0_4 = arith.constant 0 : index
    %c0_5 = arith.constant 0 : index
    %4 = vector.load %arg4[%c0_4, %c0_5] : memref<1x32xf32, #tpu.memory_space<vmem>>, vector<1x32xf32>
    %5 = vector.broadcast %4 : vector<1x32xf32> to vector<128x32xf32>
    %6 = arith.addf %3, %5 : vector<128x32xf32>
    %cst_6 = arith.constant 0.000000e+00 : f32
    %7 = vector.broadcast %cst_6 : f32 to vector<128x32xf32>
    %8 = arith.maximumf %6, %7 : vector<128x32xf32>
    %c0_7 = arith.constant 0 : index
    %c0_8 = arith.constant 0 : index
    %9 = vector.load %arg5[%c0_7, %c0_8] : memref<32x128xf32, #tpu.memory_space<vmem>>, vector<32x128xf32>
    %cst_9 = arith.constant dense<0.000000e+00> : vector<128x128xf32>
    %10 = tpu.matmul %8, %9, %cst_9 {dimension_numbers = #tpu.dot_dimension_numbers<[1], [0], [0], [1], [0, 0, 1, 1], [], []>} : vector<128x32xf32>, vector<32x128xf32>, vector<128x128xf32> -> vector<128x128xf32>
    %11 = vector.shape_cast %10 : vector<128x128xf32> to vector<16x8x128xf32>
    %c0_10 = arith.constant 0 : index
    %c0_11 = arith.constant 0 : index
    %c0_12 = arith.constant 0 : index
    %12 = vector.load %arg9[%c0_10, %c0_11, %c0_12] : memref<16x8x128xf32, #tpu.memory_space<vmem>>, vector<16x8x128xf32>
    tpu.vector_store %arg9[%c0_10, %c0_11, %c0_12], %11 {strides = array<i32>} : memref<16x8x128xf32, #tpu.memory_space<vmem>>, vector<16x8x128xf32>,
    %c0_13 = arith.constant 0 : index
    %c0_14 = arith.constant 0 : index
    %13 = vector.load %arg2[%c0_13, %c0_14] : memref<16x8xf32, #tpu.memory_space<vmem>>, vector<16x8xf32>
    %c0_15 = arith.constant 0 : index
    %c0_16 = arith.constant 0 : index
    %14 = vector.load %arg6[%c0_15, %c0_16] : memref<32x128xf32, #tpu.memory_space<vmem>>, vector<32x128xf32>
    %c0_17 = arith.constant 0 : index
    %c0_18 = arith.constant 0 : index
    %15 = vector.load %arg7[%c0_17, %c0_18] : memref<1x128xf32, #tpu.memory_space<vmem>>, vector<1x128xf32>
    %cst_19 = arith.constant 0.000000e+00 : f32
    %16 = vector.broadcast %cst_19 : f32 to vector<16x32xf32>
    %cst_20 = arith.constant 0.000000e+00 : f32
    %17 = vector.broadcast %cst_20 : f32 to vector<16x32xf32>
    %18 = vector.extract_strided_slice %13 {offsets = [0, 0], sizes = [16, 1], strides = [1, 1]} : vector<16x8xf32> to vector<16x1xf32>
    %c0_21 = arith.constant 0 : index
    %c0_22 = arith.constant 0 : index
    %c0_23 = arith.constant 0 : index
    %19 = vector.load %arg9[%c0_21, %c0_22, %c0_23] : memref<16x8x128xf32, #tpu.memory_space<vmem>>, vector<16x1x128xf32>
    %20 = vector.shape_cast %19 : vector<16x1x128xf32> to vector<16x128xf32>
    %21 = vector.broadcast %18 : vector<16x1xf32> to vector<16x128xf32>
    %22 = arith.mulf %20, %21 : vector<16x128xf32>
    %cst_24 = arith.constant dense<0.000000e+00> : vector<16x128xf32>
    %23 = tpu.matmul %16, %14, %cst_24 {dimension_numbers = #tpu.dot_dimension_numbers<[1], [0], [0], [1], [0, 0, 1, 1], [], []>} : vector<16x32xf32>, vector<32x128xf32>, vector<16x128xf32> -> vector<16x128xf32>
    %24 = arith.addf %22, %23 : vector<16x128xf32>
    %25 = vector.broadcast %15 : vector<1x128xf32> to vector<16x128xf32>
    %26 = arith.addf %24, %25 : vector<16x128xf32>
    %27 = arith.negf %26 : vector<16x128xf32>
    %28 = math.exp %27 : vector<16x128xf32>
    %cst_25 = arith.constant 1.000000e+00 : f32
    %29 = vector.broadcast %cst_25 : f32 to vector<16x128xf32>
    %30 = arith.addf %29, %28 : vector<16x128xf32>
    %31 = arith.divf %29, %30 : vector<16x128xf32>
    %32 = math.tanh %26 : vector<16x128xf32>
    %33 = vector.extract_strided_slice %31 {offsets = [0, 0], sizes = [16, 32], strides = [1, 1]} : vector<16x128xf32> to vector<16x32xf32>
    %34 = vector.extract_strided_slice %31 {offsets = [0, 32], sizes = [16, 32], strides = [1, 1]} : vector<16x128xf32> to vector<16x32xf32>
    %35 = vector.extract_strided_slice %32 {offsets = [0, 64], sizes = [16, 32], strides = [1, 1]} : vector<16x128xf32> to vector<16x32xf32>
    %36 = vector.extract_strided_slice %31 {offsets = [0, 96], sizes = [16, 32], strides = [1, 1]} : vector<16x128xf32> to vector<16x32xf32>
    %37 = arith.mulf %34, %17 : vector<16x32xf32>
    %38 = arith.mulf %33, %35 : vector<16x32xf32>
    %39 = arith.addf %37, %38 : vector<16x32xf32>
    %40 = math.tanh %39 : vector<16x32xf32>
    %41 = arith.mulf %36, %40 : vector<16x32xf32>
    %42 = vector.extract_strided_slice %13 {offsets = [0, 1], sizes = [16, 1], strides = [1, 1]} : vector<16x8xf32> to vector<16x1xf32>
    %c0_26 = arith.constant 0 : index
    %c1 = arith.constant 1 : index
    %c0_27 = arith.constant 0 : index
    %43 = vector.load %arg9[%c0_26, %c1, %c0_27] : memref<16x8x128xf32, #tpu.memory_space<vmem>>, vector<16x1x128xf32>
    %44 = vector.shape_cast %43 : vector<16x1x128xf32> to vector<16x128xf32>
    %45 = vector.broadcast %42 : vector<16x1xf32> to vector<16x128xf32>
    %46 = arith.mulf %44, %45 : vector<16x128xf32>
    %cst_28 = arith.constant dense<0.000000e+00> : vector<16x128xf32>
    %47 = tpu.matmul %41, %14, %cst_28 {dimension_numbers = #tpu.dot_dimension_numbers<[1], [0], [0], [1], [0, 0, 1, 1], [], []>} : vector<16x32xf32>, vector<32x128xf32>, vector<16x128xf32> -> vector<16x128xf32>
    %48 = arith.addf %46, %47 : vector<16x128xf32>
    %49 = vector.broadcast %15 : vector<1x128xf32> to vector<16x128xf32>
    %50 = arith.addf %48, %49 : vector<16x128xf32>
    %51 = arith.negf %50 : vector<16x128xf32>
    %52 = math.exp %51 : vector<16x128xf32>
    %cst_29 = arith.constant 1.000000e+00 : f32
    %53 = vector.broadcast %cst_29 : f32 to vector<16x128xf32>
    %54 = arith.addf %53, %52 : vector<16x128xf32>
    %55 = arith.divf %53, %54 : vector<16x128xf32>
    %56 = math.tanh %50 : vector<16x128xf32>
    %57 = vector.extract_strided_slice %55 {offsets = [0, 0], sizes = [16, 32], strides = [1, 1]} : vector<16x128xf32> to vector<16x32xf32>
    %58 = vector.extract_strided_slice %55 {offsets = [0, 32], sizes = [16, 32], strides = [1, 1]} : vector<16x128xf32> to vector<16x32xf32>
    %59 = vector.extract_strided_slice %56 {offsets = [0, 64], sizes = [16, 32], strides = [1, 1]} : vector<16x128xf32> to vector<16x32xf32>
    %60 = vector.extract_strided_slice %55 {offsets = [0, 96], sizes = [16, 32], strides = [1, 1]} : vector<16x128xf32> to vector<16x32xf32>
    %61 = arith.mulf %58, %39 : vector<16x32xf32>
    %62 = arith.mulf %57, %59 : vector<16x32xf32>
    %63 = arith.addf %61, %62 : vector<16x32xf32>
    %64 = math.tanh %63 : vector<16x32xf32>
    %65 = arith.mulf %60, %64 : vector<16x32xf32>
    %66 = vector.extract_strided_slice %13 {offsets = [0, 2], sizes = [16, 1], strides = [1, 1]} : vector<16x8xf32> to vector<16x1xf32>
    %c0_30 = arith.constant 0 : index
    %c2 = arith.constant 2 : index
    %c0_31 = arith.constant 0 : index
    %67 = vector.load %arg9[%c0_30, %c2, %c0_31] : memref<16x8x128xf32, #tpu.memory_space<vmem>>, vector<16x1x128xf32>
    %68 = vector.shape_cast %67 : vector<16x1x128xf32> to vector<16x128xf32>
    %69 = vector.broadcast %66 : vector<16x1xf32> to vector<16x128xf32>
    %70 = arith.mulf %68, %69 : vector<16x128xf32>
    %cst_32 = arith.constant dense<0.000000e+00> : vector<16x128xf32>
    %71 = tpu.matmul %65, %14, %cst_32 {dimension_numbers = #tpu.dot_dimension_numbers<[1], [0], [0], [1], [0, 0, 1, 1], [], []>} : vector<16x32xf32>, vector<32x128xf32>, vector<16x128xf32> -> vector<16x128xf32>
    %72 = arith.addf %70, %71 : vector<16x128xf32>
    %73 = vector.broadcast %15 : vector<1x128xf32> to vector<16x128xf32>
    %74 = arith.addf %72, %73 : vector<16x128xf32>
    %75 = arith.negf %74 : vector<16x128xf32>
    %76 = math.exp %75 : vector<16x128xf32>
    %cst_33 = arith.constant 1.000000e+00 : f32
    %77 = vector.broadcast %cst_33 : f32 to vector<16x128xf32>
    %78 = arith.addf %77, %76 : vector<16x128xf32>
    %79 = arith.divf %77, %78 : vector<16x128xf32>
    %80 = math.tanh %74 : vector<16x128xf32>
    %81 = vector.extract_strided_slice %79 {offsets = [0, 0], sizes = [16, 32], strides = [1, 1]} : vector<16x128xf32> to vector<16x32xf32>
    %82 = vector.extract_strided_slice %79 {offsets = [0, 32], sizes = [16, 32], strides = [1, 1]} : vector<16x128xf32> to vector<16x32xf32>
    %83 = vector.extract_strided_slice %80 {offsets = [0, 64], sizes = [16, 32], strides = [1, 1]} : vector<16x128xf32> to vector<16x32xf32>
    %84 = vector.extract_strided_slice %79 {offsets = [0, 96], sizes = [16, 32], strides = [1, 1]} : vector<16x128xf32> to vector<16x32xf32>
    %85 = arith.mulf %82, %63 : vector<16x32xf32>
    %86 = arith.mulf %81, %83 : vector<16x32xf32>
    %87 = arith.addf %85, %86 : vector<16x32xf32>
    %88 = math.tanh %87 : vector<16x32xf32>
    %89 = arith.mulf %84, %88 : vector<16x32xf32>
    %90 = vector.extract_strided_slice %13 {offsets = [0, 3], sizes = [16, 1], strides = [1, 1]} : vector<16x8xf32> to vector<16x1xf32>
    %c0_34 = arith.constant 0 : index
    %c3 = arith.constant 3 : index
    %c0_35 = arith.constant 0 : index
    %91 = vector.load %arg9[%c0_34, %c3, %c0_35] : memref<16x8x128xf32, #tpu.memory_space<vmem>>, vector<16x1x128xf32>
    %92 = vector.shape_cast %91 : vector<16x1x128xf32> to vector<16x128xf32>
    %93 = vector.broadcast %90 : vector<16x1xf32> to vector<16x128xf32>
    %94 = arith.mulf %92, %93 : vector<16x128xf32>
    %cst_36 = arith.constant dense<0.000000e+00> : vector<16x128xf32>
    %95 = tpu.matmul %89, %14, %cst_36 {dimension_numbers = #tpu.dot_dimension_numbers<[1], [0], [0], [1], [0, 0, 1, 1], [], []>} : vector<16x32xf32>, vector<32x128xf32>, vector<16x128xf32> -> vector<16x128xf32>
    %96 = arith.addf %94, %95 : vector<16x128xf32>
    %97 = vector.broadcast %15 : vector<1x128xf32> to vector<16x128xf32>
    %98 = arith.addf %96, %97 : vector<16x128xf32>
    %99 = arith.negf %98 : vector<16x128xf32>
    %100 = math.exp %99 : vector<16x128xf32>
    %cst_37 = arith.constant 1.000000e+00 : f32
    %101 = vector.broadcast %cst_37 : f32 to vector<16x128xf32>
    %102 = arith.addf %101, %100 : vector<16x128xf32>
    %103 = arith.divf %101, %102 : vector<16x128xf32>
    %104 = math.tanh %98 : vector<16x128xf32>
    %105 = vector.extract_strided_slice %103 {offsets = [0, 0], sizes = [16, 32], strides = [1, 1]} : vector<16x128xf32> to vector<16x32xf32>
    %106 = vector.extract_strided_slice %103 {offsets = [0, 32], sizes = [16, 32], strides = [1, 1]} : vector<16x128xf32> to vector<16x32xf32>
    %107 = vector.extract_strided_slice %104 {offsets = [0, 64], sizes = [16, 32], strides = [1, 1]} : vector<16x128xf32> to vector<16x32xf32>
    %108 = vector.extract_strided_slice %103 {offsets = [0, 96], sizes = [16, 32], strides = [1, 1]} : vector<16x128xf32> to vector<16x32xf32>
    %109 = arith.mulf %106, %87 : vector<16x32xf32>
    %110 = arith.mulf %105, %107 : vector<16x32xf32>
    %111 = arith.addf %109, %110 : vector<16x32xf32>
    %112 = math.tanh %111 : vector<16x32xf32>
    %113 = arith.mulf %108, %112 : vector<16x32xf32>
    %114 = vector.extract_strided_slice %13 {offsets = [0, 4], sizes = [16, 1], strides = [1, 1]} : vector<16x8xf32> to vector<16x1xf32>
    %c0_38 = arith.constant 0 : index
    %c4 = arith.constant 4 : index
    %c0_39 = arith.constant 0 : index
    %115 = vector.load %arg9[%c0_38, %c4, %c0_39] : memref<16x8x128xf32, #tpu.memory_space<vmem>>, vector<16x1x128xf32>
    %116 = vector.shape_cast %115 : vector<16x1x128xf32> to vector<16x128xf32>
    %117 = vector.broadcast %114 : vector<16x1xf32> to vector<16x128xf32>
    %118 = arith.mulf %116, %117 : vector<16x128xf32>
    %cst_40 = arith.constant dense<0.000000e+00> : vector<16x128xf32>
    %119 = tpu.matmul %113, %14, %cst_40 {dimension_numbers = #tpu.dot_dimension_numbers<[1], [0], [0], [1], [0, 0, 1, 1], [], []>} : vector<16x32xf32>, vector<32x128xf32>, vector<16x128xf32> -> vector<16x128xf32>
    %120 = arith.addf %118, %119 : vector<16x128xf32>
    %121 = vector.broadcast %15 : vector<1x128xf32> to vector<16x128xf32>
    %122 = arith.addf %120, %121 : vector<16x128xf32>
    %123 = arith.negf %122 : vector<16x128xf32>
    %124 = math.exp %123 : vector<16x128xf32>
    %cst_41 = arith.constant 1.000000e+00 : f32
    %125 = vector.broadcast %cst_41 : f32 to vector<16x128xf32>
    %126 = arith.addf %125, %124 : vector<16x128xf32>
    %127 = arith.divf %125, %126 : vector<16x128xf32>
    %128 = math.tanh %122 : vector<16x128xf32>
    %129 = vector.extract_strided_slice %127 {offsets = [0, 0], sizes = [16, 32], strides = [1, 1]} : vector<16x128xf32> to vector<16x32xf32>
    %130 = vector.extract_strided_slice %127 {offsets = [0, 32], sizes = [16, 32], strides = [1, 1]} : vector<16x128xf32> to vector<16x32xf32>
    %131 = vector.extract_strided_slice %128 {offsets = [0, 64], sizes = [16, 32], strides = [1, 1]} : vector<16x128xf32> to vector<16x32xf32>
    %132 = vector.extract_strided_slice %127 {offsets = [0, 96], sizes = [16, 32], strides = [1, 1]} : vector<16x128xf32> to vector<16x32xf32>
    %133 = arith.mulf %130, %111 : vector<16x32xf32>
    %134 = arith.mulf %129, %131 : vector<16x32xf32>
    %135 = arith.addf %133, %134 : vector<16x32xf32>
    %136 = math.tanh %135 : vector<16x32xf32>
    %137 = arith.mulf %132, %136 : vector<16x32xf32>
    %138 = vector.extract_strided_slice %13 {offsets = [0, 5], sizes = [16, 1], strides = [1, 1]} : vector<16x8xf32> to vector<16x1xf32>
    %c0_42 = arith.constant 0 : index
    %c5 = arith.constant 5 : index
    %c0_43 = arith.constant 0 : index
    %139 = vector.load %arg9[%c0_42, %c5, %c0_43] : memref<16x8x128xf32, #tpu.memory_space<vmem>>, vector<16x1x128xf32>
    %140 = vector.shape_cast %139 : vector<16x1x128xf32> to vector<16x128xf32>
    %141 = vector.broadcast %138 : vector<16x1xf32> to vector<16x128xf32>
    %142 = arith.mulf %140, %141 : vector<16x128xf32>
    %cst_44 = arith.constant dense<0.000000e+00> : vector<16x128xf32>
    %143 = tpu.matmul %137, %14, %cst_44 {dimension_numbers = #tpu.dot_dimension_numbers<[1], [0], [0], [1], [0, 0, 1, 1], [], []>} : vector<16x32xf32>, vector<32x128xf32>, vector<16x128xf32> -> vector<16x128xf32>
    %144 = arith.addf %142, %143 : vector<16x128xf32>
    %145 = vector.broadcast %15 : vector<1x128xf32> to vector<16x128xf32>
    %146 = arith.addf %144, %145 : vector<16x128xf32>
    %147 = arith.negf %146 : vector<16x128xf32>
    %148 = math.exp %147 : vector<16x128xf32>
    %cst_45 = arith.constant 1.000000e+00 : f32
    %149 = vector.broadcast %cst_45 : f32 to vector<16x128xf32>
    %150 = arith.addf %149, %148 : vector<16x128xf32>
    %151 = arith.divf %149, %150 : vector<16x128xf32>
    %152 = math.tanh %146 : vector<16x128xf32>
    %153 = vector.extract_strided_slice %151 {offsets = [0, 0], sizes = [16, 32], strides = [1, 1]} : vector<16x128xf32> to vector<16x32xf32>
    %154 = vector.extract_strided_slice %151 {offsets = [0, 32], sizes = [16, 32], strides = [1, 1]} : vector<16x128xf32> to vector<16x32xf32>
    %155 = vector.extract_strided_slice %152 {offsets = [0, 64], sizes = [16, 32], strides = [1, 1]} : vector<16x128xf32> to vector<16x32xf32>
    %156 = vector.extract_strided_slice %151 {offsets = [0, 96], sizes = [16, 32], strides = [1, 1]} : vector<16x128xf32> to vector<16x32xf32>
    %157 = arith.mulf %154, %135 : vector<16x32xf32>
    %158 = arith.mulf %153, %155 : vector<16x32xf32>
    %159 = arith.addf %157, %158 : vector<16x32xf32>
    %160 = math.tanh %159 : vector<16x32xf32>
    %161 = arith.mulf %156, %160 : vector<16x32xf32>
    %162 = vector.extract_strided_slice %13 {offsets = [0, 6], sizes = [16, 1], strides = [1, 1]} : vector<16x8xf32> to vector<16x1xf32>
    %c0_46 = arith.constant 0 : index
    %c6 = arith.constant 6 : index
    %c0_47 = arith.constant 0 : index
    %163 = vector.load %arg9[%c0_46, %c6, %c0_47] : memref<16x8x128xf32, #tpu.memory_space<vmem>>, vector<16x1x128xf32>
    %164 = vector.shape_cast %163 : vector<16x1x128xf32> to vector<16x128xf32>
    %165 = vector.broadcast %162 : vector<16x1xf32> to vector<16x128xf32>
    %166 = arith.mulf %164, %165 : vector<16x128xf32>
    %cst_48 = arith.constant dense<0.000000e+00> : vector<16x128xf32>
    %167 = tpu.matmul %161, %14, %cst_48 {dimension_numbers = #tpu.dot_dimension_numbers<[1], [0], [0], [1], [0, 0, 1, 1], [], []>} : vector<16x32xf32>, vector<32x128xf32>, vector<16x128xf32> -> vector<16x128xf32>
    %168 = arith.addf %166, %167 : vector<16x128xf32>
    %169 = vector.broadcast %15 : vector<1x128xf32> to vector<16x128xf32>
    %170 = arith.addf %168, %169 : vector<16x128xf32>
    %171 = arith.negf %170 : vector<16x128xf32>
    %172 = math.exp %171 : vector<16x128xf32>
    %cst_49 = arith.constant 1.000000e+00 : f32
    %173 = vector.broadcast %cst_49 : f32 to vector<16x128xf32>
    %174 = arith.addf %173, %172 : vector<16x128xf32>
    %175 = arith.divf %173, %174 : vector<16x128xf32>
    %176 = math.tanh %170 : vector<16x128xf32>
    %177 = vector.extract_strided_slice %175 {offsets = [0, 0], sizes = [16, 32], strides = [1, 1]} : vector<16x128xf32> to vector<16x32xf32>
    %178 = vector.extract_strided_slice %175 {offsets = [0, 32], sizes = [16, 32], strides = [1, 1]} : vector<16x128xf32> to vector<16x32xf32>
    %179 = vector.extract_strided_slice %176 {offsets = [0, 64], sizes = [16, 32], strides = [1, 1]} : vector<16x128xf32> to vector<16x32xf32>
    %180 = vector.extract_strided_slice %175 {offsets = [0, 96], sizes = [16, 32], strides = [1, 1]} : vector<16x128xf32> to vector<16x32xf32>
    %181 = arith.mulf %178, %159 : vector<16x32xf32>
    %182 = arith.mulf %177, %179 : vector<16x32xf32>
    %183 = arith.addf %181, %182 : vector<16x32xf32>
    %184 = math.tanh %183 : vector<16x32xf32>
    %185 = arith.mulf %180, %184 : vector<16x32xf32>
    %186 = vector.extract_strided_slice %13 {offsets = [0, 7], sizes = [16, 1], strides = [1, 1]} : vector<16x8xf32> to vector<16x1xf32>
    %c0_50 = arith.constant 0 : index
    %c7 = arith.constant 7 : index
    %c0_51 = arith.constant 0 : index
    %187 = vector.load %arg9[%c0_50, %c7, %c0_51] : memref<16x8x128xf32, #tpu.memory_space<vmem>>, vector<16x1x128xf32>
    %188 = vector.shape_cast %187 : vector<16x1x128xf32> to vector<16x128xf32>
    %189 = vector.broadcast %186 : vector<16x1xf32> to vector<16x128xf32>
    %190 = arith.mulf %188, %189 : vector<16x128xf32>
    %cst_52 = arith.constant dense<0.000000e+00> : vector<16x128xf32>
    %191 = tpu.matmul %185, %14, %cst_52 {dimension_numbers = #tpu.dot_dimension_numbers<[1], [0], [0], [1], [0, 0, 1, 1], [], []>} : vector<16x32xf32>, vector<32x128xf32>, vector<16x128xf32> -> vector<16x128xf32>
    %192 = arith.addf %190, %191 : vector<16x128xf32>
    %193 = vector.broadcast %15 : vector<1x128xf32> to vector<16x128xf32>
    %194 = arith.addf %192, %193 : vector<16x128xf32>
    %195 = arith.negf %194 : vector<16x128xf32>
    %196 = math.exp %195 : vector<16x128xf32>
    %cst_53 = arith.constant 1.000000e+00 : f32
    %197 = vector.broadcast %cst_53 : f32 to vector<16x128xf32>
    %198 = arith.addf %197, %196 : vector<16x128xf32>
    %199 = arith.divf %197, %198 : vector<16x128xf32>
    %200 = math.tanh %194 : vector<16x128xf32>
    %201 = vector.extract_strided_slice %199 {offsets = [0, 0], sizes = [16, 32], strides = [1, 1]} : vector<16x128xf32> to vector<16x32xf32>
    %202 = vector.extract_strided_slice %199 {offsets = [0, 32], sizes = [16, 32], strides = [1, 1]} : vector<16x128xf32> to vector<16x32xf32>
    %203 = vector.extract_strided_slice %200 {offsets = [0, 64], sizes = [16, 32], strides = [1, 1]} : vector<16x128xf32> to vector<16x32xf32>
    %204 = vector.extract_strided_slice %199 {offsets = [0, 96], sizes = [16, 32], strides = [1, 1]} : vector<16x128xf32> to vector<16x32xf32>
    %205 = arith.mulf %202, %183 : vector<16x32xf32>
    %206 = arith.mulf %201, %203 : vector<16x32xf32>
    %207 = arith.addf %205, %206 : vector<16x32xf32>
    %208 = math.tanh %207 : vector<16x32xf32>
    %209 = arith.mulf %204, %208 : vector<16x32xf32>
    %c0_54 = arith.constant 0 : index
    %c0_55 = arith.constant 0 : index
    %210 = vector.load %arg8[%c0_54, %c0_55] : memref<16x32xf32, #tpu.memory_space<vmem>>, vector<16x32xf32>
    tpu.vector_store %arg8[%c0_54, %c0_55], %209 {strides = array<i32>} : memref<16x32xf32, #tpu.memory_space<vmem>>, vector<16x32xf32>,
    return
  }
  func.func @transform_0(%arg0: i32) -> (i32, i32, i32) {
    %c0_i32 = arith.constant 0 : i32
    %c0_i32_0 = arith.constant 0 : i32
    %c0_i32_1 = arith.constant 0 : i32
    return %arg0, %c0_i32, %c0_i32_0 : i32, i32, i32
  }
  func.func @transform_1(%arg0: i32) -> (i32, i32) {
    %c0_i32 = arith.constant 0 : i32
    %c0_i32_0 = arith.constant 0 : i32
    return %arg0, %c0_i32 : i32, i32
  }
  func.func @transform_2(%arg0: i32) -> (i32, i32) {
    %c0_i32 = arith.constant 0 : i32
    %c0_i32_0 = arith.constant 0 : i32
    %c0_i32_1 = arith.constant 0 : i32
    return %c0_i32, %c0_i32_0 : i32, i32
  }
  func.func @transform_3(%arg0: i32) -> (i32, i32) {
    %c0_i32 = arith.constant 0 : i32
    %c0_i32_0 = arith.constant 0 : i32
    %c0_i32_1 = arith.constant 0 : i32
    return %c0_i32, %c0_i32_0 : i32, i32
  }
  func.func @transform_4(%arg0: i32) -> (i32, i32) {
    %c0_i32 = arith.constant 0 : i32
    %c0_i32_0 = arith.constant 0 : i32
    %c0_i32_1 = arith.constant 0 : i32
    return %c0_i32, %c0_i32_0 : i32, i32
  }
  func.func @transform_5(%arg0: i32) -> (i32, i32) {
    %c0_i32 = arith.constant 0 : i32
    %c0_i32_0 = arith.constant 0 : i32
    %c0_i32_1 = arith.constant 0 : i32
    return %c0_i32, %c0_i32_0 : i32, i32
  }
  func.func @transform_6(%arg0: i32) -> (i32, i32) {
    %c0_i32 = arith.constant 0 : i32
    %c0_i32_0 = arith.constant 0 : i32
    %c0_i32_1 = arith.constant 0 : i32
    return %c0_i32, %c0_i32_0 : i32, i32
  }
  func.func @transform_7(%arg0: i32) -> (i32, i32) {
    %c0_i32 = arith.constant 0 : i32
    %c0_i32_0 = arith.constant 0 : i32
    return %arg0, %c0_i32 : i32, i32
  }
}

</mosaic_0001>

<llo_original>
// kernel: tpu_custom_call.1
$region0: #{tpu_custom_call.1}
  #allocation0 [shape = 'u32[]', space=smem, size = 0x4, offset = 0x4, fixed_abs, tag = 'smem constant byte address 0x4 - core index']
  #allocation1 [shape = 'u32[72,128]{1,0:T(1,128)}', space=vmem, size = 0x9000, scoped, tag = 'internal scratch']
  #allocation2 [shape = 'f32[16,8,128]{2,1,0:T(8,128)}', space=vmem, size = 0x10000, scoped, tag = 'scratch operand']
  %s0 = inlined_call_operand.hbm [shape: f32[16,8,16], index: 0, kind: input, shape index: {}]
  %s1 = inlined_call_operand.vmem [shape: f32[16,8], index: 1, kind: input, shape index: {}]
  %s2 = inlined_call_operand.vmem [shape: f32[16,32], index: 2, kind: input, shape index: {}]
  %s3 = inlined_call_operand.vmem [shape: f32[1,32], index: 3, kind: input, shape index: {}]
  %s4 = inlined_call_operand.hbm [shape: f32[32,128], index: 4, kind: input, shape index: {}]
  %s5 = inlined_call_operand.hbm [shape: f32[32,128], index: 5, kind: input, shape index: {}]
  %s6 = inlined_call_operand.vmem [shape: f32[1,128], index: 6, kind: input, shape index: {}]
  %s7 = inlined_call_operand.hbm [shape: f32[16,32], index: 7, kind: output, shape index: {}]
  %s8 = sld [smem:[#allocation0]]
  $region50: #{tpu_custom_call.1} parent=0
    _
  %s10 = ssub.s32 1, %s8
  %s11 = scalar_select 0, %s10, %s8
  $region1: #{tpu_custom_call.1} parent=0
    #allocation3 [shape = 'u8[65536]{0}', space=vmem, size = 0x10000, scoped, tag = 'input window, operand 0, single buffered']
    #allocation4 [shape = 's32[1]{0}', space=sflag, size = 0x4, scoped, tag = 'scoped memory for tpu_custom_call.1']
    #allocation5 [shape = 's32[1]{0}', space=sflag, size = 0x4, scoped, tag = 'scoped memory for tpu_custom_call.1']
    #allocation6 [shape = 'u8[16384]{0}', space=vmem, size = 0x4000, scoped, tag = 'input window, operand 4, single buffered']
    #allocation7 [shape = 's32[1]{0}', space=sflag, size = 0x4, scoped, tag = 'scoped memory for tpu_custom_call.1']
    #allocation8 [shape = 'u8[16384]{0}', space=vmem, size = 0x4000, scoped, tag = 'input window, operand 5, single buffered']
    #allocation9 [shape = 'u8[8192]{0}', space=vmem, size = 0x2000, scoped, tag = 'output window, operand 0, single buffered']
    %12 = vsyncpa [#allocation4], 0
    %13 = vsyncpa [#allocation7], 0
    %14 = vsyncpa [#allocation5], 0
    // Predicated region
    $region2: #{tpu_custom_call.1} parent=1 // pred_check
      _
    $region3: #{tpu_custom_call.1} parent=1 // pred_check_branch
      %16 = sbr.rel (0) target = $region5
    $region4: #{tpu_custom_call.1} parent=1 // pred_region
      %18 = vsyncadd [#allocation4], 0
      %s19 = sshll.u32 %s0, 4
      %s20 = int_to_ptr.hbm [resolvable:$true] %s19
      %s21 = sshll.u32 [#allocation3], 4
      %s22 = int_to_ptr.vmem [resolvable:$true] %s21
      %27 = dma.hbm_to_vmem [thread:$0]  %s20, 2048, %s22, [#allocation4], 128, 128, 8
    $region5: #{tpu_custom_call.1} parent=1 // pred_fallthru
      _
    // Predicated region
    $region6: #{tpu_custom_call.1} parent=1 // pred_check
      _
    $region7: #{tpu_custom_call.1} parent=1 // pred_check_branch
      %29 = sbr.rel (0) target = $region9
    $region8: #{tpu_custom_call.1} parent=1 // pred_region
      _
    $region9: #{tpu_custom_call.1} parent=1 // pred_fallthru
      _
    // Predicated region
    $region10: #{tpu_custom_call.1} parent=1 // pred_check
      _
    $region11: #{tpu_custom_call.1} parent=1 // pred_check_branch
      %31 = sbr.rel (0) target = $region13
    $region12: #{tpu_custom_call.1} parent=1 // pred_region
      _
    $region13: #{tpu_custom_call.1} parent=1 // pred_fallthru
      _
    // Predicated region
    $region14: #{tpu_custom_call.1} parent=1 // pred_check
      _
    $region15: #{tpu_custom_call.1} parent=1 // pred_check_branch
      %33 = sbr.rel (0) target = $region17
    $region16: #{tpu_custom_call.1} parent=1 // pred_region
      _
    $region17: #{tpu_custom_call.1} parent=1 // pred_fallthru
      _
    // Predicated region
    $region18: #{tpu_custom_call.1} parent=1 // pred_check
      _
    $region19: #{tpu_custom_call.1} parent=1 // pred_check_branch
      %35 = sbr.rel (0) target = $region21
    $region20: #{tpu_custom_call.1} parent=1 // pred_region
      %37 = vsyncadd [#allocation7], 0
      %s38 = sshll.u32 %s4, 4
      %s39 = int_to_ptr.hbm [resolvable:$true] %s38
      %s40 = sshll.u32 [#allocation6], 4
      %s41 = int_to_ptr.vmem [resolvable:$true] %s40
      %46 = dma.hbm_to_vmem [thread:$0]  %s39, 512, %s41, [#allocation7], 128, 128, 8
    $region21: #{tpu_custom_call.1} parent=1 // pred_fallthru
      _
    // Predicated region
    $region22: #{tpu_custom_call.1} parent=1 // pred_check
      _
    $region23: #{tpu_custom_call.1} parent=1 // pred_check_branch
      %48 = sbr.rel (0) target = $region25
    $region24: #{tpu_custom_call.1} parent=1 // pred_region
      %50 = vsyncadd [#allocation7], 0
      %s51 = sshll.u32 %s5, 4
      %s52 = int_to_ptr.hbm [resolvable:$true] %s51
      %s53 = sshll.u32 [#allocation8], 4
      %s54 = int_to_ptr.vmem [resolvable:$true] %s53
      %59 = dma.hbm_to_vmem [thread:$0]  %s52, 512, %s54, [#allocation7], 128, 128, 8
    $region25: #{tpu_custom_call.1} parent=1 // pred_fallthru
      _
    // Predicated region
    $region26: #{tpu_custom_call.1} parent=1 // pred_check
      _
    $region27: #{tpu_custom_call.1} parent=1 // pred_check_branch
      %61 = sbr.rel (0) target = $region29
    $region28: #{tpu_custom_call.1} parent=1 // pred_region
      _
    $region29: #{tpu_custom_call.1} parent=1 // pred_fallthru
      _
    // Predicated region
    $region30: #{tpu_custom_call.1} parent=1 // pred_check
      _
    $region31: #{tpu_custom_call.1} parent=1 // pred_check_branch
      %63 = sbr.rel (0) target = $region33
    $region32: #{tpu_custom_call.1} parent=1 // pred_region
      %65 = dma.done [#allocation4], 2048
    $region33: #{tpu_custom_call.1} parent=1 // pred_fallthru
      _
    // Predicated region
    $region34: #{tpu_custom_call.1} parent=1 // pred_check
      _
    $region35: #{tpu_custom_call.1} parent=1 // pred_check_branch
      %67 = sbr.rel (0) target = $region37
    $region36: #{tpu_custom_call.1} parent=1 // pred_region
      %69 = dma.done [#allocation7], 512
    $region37: #{tpu_custom_call.1} parent=1 // pred_fallthru
      _
    // Predicated region
    $region38: #{tpu_custom_call.1} parent=1 // pred_check
      _
    $region39: #{tpu_custom_call.1} parent=1 // pred_check_branch
      %71 = sbr.rel (0) target = $region41
    $region40: #{tpu_custom_call.1} parent=1 // pred_region
      %73 = dma.done [#allocation7], 512
    $region41: #{tpu_custom_call.1} parent=1 // pred_fallthru
      _
    %v74 = vld [vmem:[#allocation3] sm:$0xff]
    %v75 = vld [vmem:[#allocation3 + $0x8] sm:$0xff]
    %v76 = vld [vmem:[#allocation3 + $0x10] sm:$0xff]
    %v77 = vld [vmem:[#allocation3 + $0x18] sm:$0xff]
    %v78 = vld [vmem:[#allocation3 + $0x20] sm:$0xff]
    %v79 = vld [vmem:[#allocation3 + $0x28] sm:$0xff]
    %v80 = vld [vmem:[#allocation3 + $0x30] sm:$0xff]
    %v81 = vld [vmem:[#allocation3 + $0x38] sm:$0xff]
    %v82 = vld [vmem:[#allocation3 + $0x40] sm:$0xff]
    %v83 = vld [vmem:[#allocation3 + $0x48] sm:$0xff]
    %v84 = vld [vmem:[#allocation3 + $0x50] sm:$0xff]
    %v85 = vld [vmem:[#allocation3 + $0x58] sm:$0xff]
    %v86 = vld [vmem:[#allocation3 + $0x60] sm:$0xff]
    %v87 = vld [vmem:[#allocation3 + $0x68] sm:$0xff]
    %v88 = vld [vmem:[#allocation3 + $0x70] sm:$0xff]
    %v89 = vld [vmem:[#allocation3 + $0x78] sm:$0xff]
    %v90 = vld [vmem:[%s2] sm:$0xff]
    %v91 = vld [vmem:[%s2 + $0x8] sm:$0xff]
    %v92 = vld [vmem:[%s3] sm:$0x1]
    %v94 = vperm.slane %v92, 0
    %vm96 = vcmask 130048
    %v98 = vsel %vm96, %v74, 0
    %v101 = vsel %vm96, %v75, 0
    %v104 = vsel %vm96, %v76, 0
    %v107 = vsel %vm96, %v77, 0
    %v110 = vsel %vm96, %v78, 0
    %v113 = vsel %vm96, %v79, 0
    %v116 = vsel %vm96, %v80, 0
    %v119 = vsel %vm96, %v81, 0
    %v122 = vsel %vm96, %v82, 0
    %v125 = vsel %vm96, %v83, 0
    %v128 = vsel %vm96, %v84, 0
    %v131 = vsel %vm96, %v85, 0
    %v134 = vsel %vm96, %v86, 0
    %v137 = vsel %vm96, %v87, 0
    %v140 = vsel %vm96, %v88, 0
    %v143 = vsel %vm96, %v89, 0
    %145 = vmatpush.msra.mxu0 0.0
    %146 = vmatpush.msra.mxu0 0.0
    %147 = vmatpush.msra.mxu0 0.0
    %148 = vmatpush.msra.mxu0 0.0
    %149 = vmatpush.msra.mxu0 0.0
    %150 = vmatpush.msra.mxu0 0.0
    %151 = vmatpush.msra.mxu0 0.0
    %152 = vmatpush.msra.mxu0 0.0
    %153 = vmatpush.msra.mxu0 0.0
    %154 = vmatpush.msra.mxu0 0.0
    %155 = vmatpush.msra.mxu0 0.0
    %156 = vmatpush.msra.mxu0 0.0
    %157 = vmatpush.msra.mxu0 0.0
    %158 = vmatpush.msra.mxu0 0.0
    %159 = vmatpush.msra.mxu0 %v91
    %160 = vmatpush.msra.mxu0 %v90
    %161 = vmatmul.f32.gmra.mxu0 %v98
    %v162 = vpop.f32.mrf.mxu0
    %v163 = vadd.f32 %v94, %v162
    %164 = vmatmul.f32.gmra.mxu0 %v101
    %v165 = vpop.f32.mrf.mxu0
    %v166 = vadd.f32 %v94, %v165
    %167 = vmatmul.f32.gmra.mxu0 %v104
    %v168 = vpop.f32.mrf.mxu0
    %v169 = vadd.f32 %v94, %v168
    %170 = vmatmul.f32.gmra.mxu0 %v107
    %v171 = vpop.f32.mrf.mxu0
    %v172 = vadd.f32 %v94, %v171
    %173 = vmatmul.f32.gmra.mxu0 %v110
    %v174 = vpop.f32.mrf.mxu0
    %v175 = vadd.f32 %v94, %v174
    %176 = vmatmul.f32.gmra.mxu0 %v113
    %v177 = vpop.f32.mrf.mxu0
    %v178 = vadd.f32 %v94, %v177
    %179 = vmatmul.f32.gmra.mxu0 %v116
    %v180 = vpop.f32.mrf.mxu0
    %v181 = vadd.f32 %v94, %v180
    %182 = vmatmul.f32.gmra.mxu0 %v119
    %v183 = vpop.f32.mrf.mxu0
    %v184 = vadd.f32 %v94, %v183
    %185 = vmatmul.f32.gmra.mxu0 %v122
    %v186 = vpop.f32.mrf.mxu0
    %v187 = vadd.f32 %v94, %v186
    %188 = vmatmul.f32.gmra.mxu0 %v125
    %v189 = vpop.f32.mrf.mxu0
    %v190 = vadd.f32 %v94, %v189
    %191 = vmatmul.f32.gmra.mxu0 %v128
    %v192 = vpop.f32.mrf.mxu0
    %v193 = vadd.f32 %v94, %v192
    %194 = vmatmul.f32.gmra.mxu0 %v131
    %v195 = vpop.f32.mrf.mxu0
    %v196 = vadd.f32 %v94, %v195
    %197 = vmatmul.f32.gmra.mxu0 %v134
    %v198 = vpop.f32.mrf.mxu0
    %v199 = vadd.f32 %v94, %v198
    %200 = vmatmul.f32.gmra.mxu0 %v137
    %v201 = vpop.f32.mrf.mxu0
    %v202 = vadd.f32 %v94, %v201
    %203 = vmatmul.f32.gmra.mxu0 %v140
    %v204 = vpop.f32.mrf.mxu0
    %v205 = vadd.f32 %v94, %v204
    %206 = vmatmul.f32.gmra.mxu0 %v143
    %v207 = vpop.f32.mrf.mxu0
    %v208 = vadd.f32 %v94, %v207
    %209 = vdwg.mxu0
    %v210 = vmax.f32 %v163, 0.0
    %v211 = vmax.f32 %v166, 0.0
    %v212 = vmax.f32 %v169, 0.0
    %v213 = vmax.f32 %v172, 0.0
    %v214 = vmax.f32 %v175, 0.0
    %v215 = vmax.f32 %v178, 0.0
    %v216 = vmax.f32 %v181, 0.0
    %v217 = vmax.f32 %v184, 0.0
    %v218 = vmax.f32 %v187, 0.0
    %v219 = vmax.f32 %v190, 0.0
    %v220 = vmax.f32 %v193, 0.0
    %v221 = vmax.f32 %v196, 0.0
    %v222 = vmax.f32 %v199, 0.0
    %v223 = vmax.f32 %v202, 0.0
    %v224 = vmax.f32 %v205, 0.0
    %v225 = vmax.f32 %v208, 0.0
    %v226 = vld [vmem:[#allocation6] sm:$0xff]
    %v227 = vld [vmem:[#allocation6 + $0x8] sm:$0xff]
    %v228 = vld [vmem:[#allocation6 + $0x10] sm:$0xff]
    %v229 = vld [vmem:[#allocation6 + $0x18] sm:$0xff]
    %vm230 = vcmask 261120
    %v232 = vsel %vm230, %v210, 0
    %v235 = vsel %vm230, %v211, 0
    %v238 = vsel %vm230, %v212, 0
    %v241 = vsel %vm230, %v213, 0
    %v244 = vsel %vm230, %v214, 0
    %v247 = vsel %vm230, %v215, 0
    %v250 = vsel %vm230, %v216, 0
    %v253 = vsel %vm230, %v217, 0
    %v256 = vsel %vm230, %v218, 0
    %v259 = vsel %vm230, %v219, 0
    %v262 = vsel %vm230, %v220, 0
    %v265 = vsel %vm230, %v221, 0
    %v268 = vsel %vm230, %v222, 0
    %v271 = vsel %vm230, %v223, 0
    %v274 = vsel %vm230, %v224, 0
    %v277 = vsel %vm230, %v225, 0
    %279 = vmatpush.msra.mxu0 0.0
    %280 = vmatpush.msra.mxu0 0.0
    %281 = vmatpush.msra.mxu0 0.0
    %282 = vmatpush.msra.mxu0 0.0
    %283 = vmatpush.msra.mxu0 0.0
    %284 = vmatpush.msra.mxu0 0.0
    %285 = vmatpush.msra.mxu0 0.0
    %286 = vmatpush.msra.mxu0 0.0
    %287 = vmatpush.msra.mxu0 0.0
    %288 = vmatpush.msra.mxu0 0.0
    %289 = vmatpush.msra.mxu0 0.0
    %290 = vmatpush.msra.mxu0 0.0
    %291 = vmatpush.msra.mxu0 %v229
    %292 = vmatpush.msra.mxu0 %v228
    %293 = vmatpush.msra.mxu0 %v227
    %294 = vmatpush.msra.mxu0 %v226
    %295 = vmatmul.f32.gmra.mxu0 %v232
    %v296 = vpop.f32.mrf.mxu0
    %v297 = vadd.f32 0.0, %v296
    %298 = vmatmul.f32.gmra.mxu0 %v235
    %v299 = vpop.f32.mrf.mxu0
    %v300 = vadd.f32 0.0, %v299
    %301 = vmatmul.f32.gmra.mxu0 %v238
    %v302 = vpop.f32.mrf.mxu0
    %v303 = vadd.f32 0.0, %v302
    %304 = vmatmul.f32.gmra.mxu0 %v241
    %v305 = vpop.f32.mrf.mxu0
    %v306 = vadd.f32 0.0, %v305
    %307 = vmatmul.f32.gmra.mxu0 %v244
    %v308 = vpop.f32.mrf.mxu0
    %v309 = vadd.f32 0.0, %v308
    %310 = vmatmul.f32.gmra.mxu0 %v247
    %v311 = vpop.f32.mrf.mxu0
    %v312 = vadd.f32 0.0, %v311
    %313 = vmatmul.f32.gmra.mxu0 %v250
    %v314 = vpop.f32.mrf.mxu0
    %v315 = vadd.f32 0.0, %v314
    %316 = vmatmul.f32.gmra.mxu0 %v253
    %v317 = vpop.f32.mrf.mxu0
    %v318 = vadd.f32 0.0, %v317
    %319 = vmatmul.f32.gmra.mxu0 %v256
    %v320 = vpop.f32.mrf.mxu0
    %v321 = vadd.f32 0.0, %v320
    %322 = vmatmul.f32.gmra.mxu0 %v259
    %v323 = vpop.f32.mrf.mxu0
    %v324 = vadd.f32 0.0, %v323
    %325 = vmatmul.f32.gmra.mxu0 %v262
    %v326 = vpop.f32.mrf.mxu0
    %v327 = vadd.f32 0.0, %v326
    %328 = vmatmul.f32.gmra.mxu0 %v265
    %v329 = vpop.f32.mrf.mxu0
    %v330 = vadd.f32 0.0, %v329
    %331 = vmatmul.f32.gmra.mxu0 %v268
    %v332 = vpop.f32.mrf.mxu0
    %v333 = vadd.f32 0.0, %v332
    %334 = vmatmul.f32.gmra.mxu0 %v271
    %v335 = vpop.f32.mrf.mxu0
    %v336 = vadd.f32 0.0, %v335
    %337 = vmatmul.f32.gmra.mxu0 %v274
    %v338 = vpop.f32.mrf.mxu0
    %v339 = vadd.f32 0.0, %v338
    %340 = vmatmul.f32.gmra.mxu0 %v277
    %v341 = vpop.f32.mrf.mxu0
    %v342 = vadd.f32 0.0, %v341
    %343 = vdwg.mxu0
    %344 = vst [vmem:[#allocation2] sm:$0xff] %v297
    %345 = vst [vmem:[#allocation2 + $0x8] sm:$0xff] %v300
    %346 = vst [vmem:[#allocation2 + $0x10] sm:$0xff] %v303
    %347 = vst [vmem:[#allocation2 + $0x18] sm:$0xff] %v306
    %348 = vst [vmem:[#allocation2 + $0x20] sm:$0xff] %v309
    %349 = vst [vmem:[#allocation2 + $0x28] sm:$0xff] %v312
    %350 = vst [vmem:[#allocation2 + $0x30] sm:$0xff] %v315
    %351 = vst [vmem:[#allocation2 + $0x38] sm:$0xff] %v318
    %352 = vst [vmem:[#allocation2 + $0x40] sm:$0xff] %v321
    %353 = vst [vmem:[#allocation2 + $0x48] sm:$0xff] %v324
    %354 = vst [vmem:[#allocation2 + $0x50] sm:$0xff] %v327
    %355 = vst [vmem:[#allocation2 + $0x58] sm:$0xff] %v330
    %356 = vst [vmem:[#allocation2 + $0x60] sm:$0xff] %v333
    %357 = vst [vmem:[#allocation2 + $0x68] sm:$0xff] %v336
    %358 = vst [vmem:[#allocation2 + $0x70] sm:$0xff] %v339
    %359 = vst [vmem:[#allocation2 + $0x78] sm:$0xff] %v342
    %v360 = vld [vmem:[%s1] sm:$0xff]
    %v361 = vld [vmem:[%s1 + $0x8] sm:$0xff]
    %v362 = vld [vmem:[#allocation8] sm:$0xff]
    %v363 = vld [vmem:[#allocation8 + $0x8] sm:$0xff]
    %v364 = vld [vmem:[#allocation8 + $0x10] sm:$0xff]
    %v365 = vld [vmem:[#allocation8 + $0x18] sm:$0xff]
    %v366 = vld [vmem:[%s6] sm:$0x1]
    %v367 = vld [vmem:[#allocation2] sm:$0x1]
    %v368 = vld [vmem:[#allocation2 + $0x8] sm:$0x1]
    %v369 = vld [vmem:[#allocation2 + $0x10] sm:$0x1]
    %v370 = vld [vmem:[#allocation2 + $0x18] sm:$0x1]
    %v371 = vld [vmem:[#allocation2 + $0x20] sm:$0x1]
    %v372 = vld [vmem:[#allocation2 + $0x28] sm:$0x1]
    %v373 = vld [vmem:[#allocation2 + $0x30] sm:$0x1]
    %v374 = vld [vmem:[#allocation2 + $0x38] sm:$0x1]
    %v375 = vld [vmem:[#allocation2 + $0x40] sm:$0x1]
    %v376 = vld [vmem:[#allocation2 + $0x48] sm:$0x1]
    %v377 = vld [vmem:[#allocation2 + $0x50] sm:$0x1]
    %v378 = vld [vmem:[#allocation2 + $0x58] sm:$0x1]
    %v379 = vld [vmem:[#allocation2 + $0x60] sm:$0x1]
    %v380 = vld [vmem:[#allocation2 + $0x68] sm:$0x1]
    %v381 = vld [vmem:[#allocation2 + $0x70] sm:$0x1]
    %v382 = vld [vmem:[#allocation2 + $0x78] sm:$0x1]
    %384 = vset.pattern.permute.xlu0 0
    %385 = vperm.xlu0 %384, %v360
    %v386 = vpop.permute.xlu0 %385
    %388 = vset.pattern.permute.xlu0 0
    %389 = vperm.xlu0 %388, %v361
    %v390 = vpop.permute.xlu0 %389
    %v391 = vrot.slane %v386, 1
    %v392 = vrot.slane %v386, 2
    %v393 = vrot.slane %v386, 3
    %v394 = vrot.slane %v386, 4
    %v395 = vrot.slane %v386, 5
    %v396 = vrot.slane %v386, 6
    %v397 = vrot.slane %v386, 7
    %v398 = vrot.slane %v390, 1
    %v399 = vrot.slane %v390, 2
    %v400 = vrot.slane %v390, 3
    %v401 = vrot.slane %v390, 4
    %v402 = vrot.slane %v390, 5
    %v403 = vrot.slane %v390, 6
    %v404 = vrot.slane %v390, 7
    %v421 = vmul.f32 %v367, %v386
    %v422 = vmul.f32 %v368, %v391
    %v423 = vmul.f32 %v369, %v392
    %v424 = vmul.f32 %v370, %v393
    %v425 = vmul.f32 %v371, %v394
    %v426 = vmul.f32 %v372, %v395
    %v427 = vmul.f32 %v373, %v396
    %v428 = vmul.f32 %v374, %v397
    %v429 = vmul.f32 %v375, %v390
    %v430 = vmul.f32 %v376, %v398
    %v431 = vmul.f32 %v377, %v399
    %v432 = vmul.f32 %v378, %v400
    %v433 = vmul.f32 %v379, %v401
    %v434 = vmul.f32 %v380, %v402
    %v435 = vmul.f32 %v381, %v403
    %v436 = vmul.f32 %v382, %v404
    %v438 = vsel %vm230, 0.0, 0
    %440 = vmatpush.msra.mxu0 0.0
    %441 = vmatpush.msra.mxu0 0.0
    %442 = vmatpush.msra.mxu0 0.0
    %443 = vmatpush.msra.mxu0 0.0
    %444 = vmatpush.msra.mxu0 0.0
    %445 = vmatpush.msra.mxu0 0.0
    %446 = vmatpush.msra.mxu0 0.0
    %447 = vmatpush.msra.mxu0 0.0
    %448 = vmatpush.msra.mxu0 0.0
    %449 = vmatpush.msra.mxu0 0.0
    %450 = vmatpush.msra.mxu0 0.0
    %451 = vmatpush.msra.mxu0 0.0
    %452 = vmatpush.msra.mxu0 %v365
    %453 = vmatpush.msra.mxu0 %v364
    %454 = vmatpush.msra.mxu0 %v363
    %455 = vmatpush.msra.mxu0 %v362
    %456 = vmatmul.f32.gmra.mxu0 %v438
    %v457 = vpop.f32.mrf.mxu0
    %v458 = vadd.f32 0.0, %v457
    %459 = vmatmul.f32.gmra.mxu0 %v438
    %v460 = vpop.f32.mrf.mxu0
    %v461 = vadd.f32 0.0, %v460
    %462 = vdwg.mxu0
    %v465 = vrot.slane %v458, 1
    %v466 = vrot.slane %v458, 2
    %v467 = vrot.slane %v458, 3
    %v468 = vrot.slane %v458, 4
    %v469 = vrot.slane %v458, 5
    %v470 = vrot.slane %v458, 6
    %v471 = vrot.slane %v458, 7
    %v472 = vrot.slane %v461, 1
    %v473 = vrot.slane %v461, 2
    %v474 = vrot.slane %v461, 3
    %v475 = vrot.slane %v461, 4
    %v476 = vrot.slane %v461, 5
    %v477 = vrot.slane %v461, 6
    %v478 = vrot.slane %v461, 7
    %v495 = vadd.f32 %v421, %v458
    %v496 = vadd.f32 %v422, %v465
    %v497 = vadd.f32 %v423, %v466
    %v498 = vadd.f32 %v424, %v467
    %v499 = vadd.f32 %v425, %v468
    %v500 = vadd.f32 %v426, %v469
    %v501 = vadd.f32 %v427, %v470
    %v502 = vadd.f32 %v428, %v471
    %v503 = vadd.f32 %v429, %v461
    %v504 = vadd.f32 %v430, %v472
    %v505 = vadd.f32 %v431, %v473
    %v506 = vadd.f32 %v432, %v474
    %v507 = vadd.f32 %v433, %v475
    %v508 = vadd.f32 %v434, %v476
    %v509 = vadd.f32 %v435, %v477
    %v510 = vadd.f32 %v436, %v478
    %v512 = vperm.slane %v366, 0
    %v514 = vadd.f32 %v495, %v512
    %v515 = vadd.f32 %v496, %v512
    %v516 = vadd.f32 %v497, %v512
    %v517 = vadd.f32 %v498, %v512
    %v518 = vadd.f32 %v499, %v512
    %v519 = vadd.f32 %v500, %v512
    %v520 = vadd.f32 %v501, %v512
    %v521 = vadd.f32 %v502, %v512
    %v522 = vadd.f32 %v503, %v512
    %v523 = vadd.f32 %v504, %v512
    %v524 = vadd.f32 %v505, %v512
    %v525 = vadd.f32 %v506, %v512
    %v526 = vadd.f32 %v507, %v512
    %v527 = vadd.f32 %v508, %v512
    %v528 = vadd.f32 %v509, %v512
    %v529 = vadd.f32 %v510, %v512
    %v530 = vxor.u32 %v514, 2147483648
    %v531 = vxor.u32 %v515, 2147483648
    %v532 = vxor.u32 %v516, 2147483648
    %v533 = vxor.u32 %v517, 2147483648
    %v534 = vxor.u32 %v518, 2147483648
    %v535 = vxor.u32 %v519, 2147483648
    %v536 = vxor.u32 %v520, 2147483648
    %v537 = vxor.u32 %v521, 2147483648
    %v538 = vxor.u32 %v522, 2147483648
    %v539 = vxor.u32 %v523, 2147483648
    %v540 = vxor.u32 %v524, 2147483648
    %v541 = vxor.u32 %v525, 2147483648
    %v542 = vxor.u32 %v526, 2147483648
    %v543 = vxor.u32 %v527, 2147483648
    %v544 = vxor.u32 %v528, 2147483648
    %v545 = vxor.u32 %v529, 2147483648
    %v546 = vmul.f32 %v530, 1.442695
    %v547 = vpow.pop %v546
    %v548 = vmul.f32 %v531, 1.442695
    %v549 = vpow.pop %v548
    %v550 = vmul.f32 %v532, 1.442695
    %v551 = vpow.pop %v550
    %v552 = vmul.f32 %v533, 1.442695
    %v553 = vpow.pop %v552
    %v554 = vmul.f32 %v534, 1.442695
    %v555 = vpow.pop %v554
    %v556 = vmul.f32 %v535, 1.442695
    %v557 = vpow.pop %v556
    %v558 = vmul.f32 %v536, 1.442695
    %v559 = vpow.pop %v558
    %v560 = vmul.f32 %v537, 1.442695
    %v561 = vpow.pop %v560
    %v562 = vmul.f32 %v538, 1.442695
    %v563 = vpow.pop %v562
    %v564 = vmul.f32 %v539, 1.442695
    %v565 = vpow.pop %v564
    %v566 = vmul.f32 %v540, 1.442695
    %v567 = vpow.pop %v566
    %v568 = vmul.f32 %v541, 1.442695
    %v569 = vpow.pop %v568
    %v570 = vmul.f32 %v542, 1.442695
    %v571 = vpow.pop %v570
    %v572 = vmul.f32 %v543, 1.442695
    %v573 = vpow.pop %v572
    %v574 = vmul.f32 %v544, 1.442695
    %v575 = vpow.pop %v574
    %v576 = vmul.f32 %v545, 1.442695
    %v577 = vpow.pop %v576
    %v578 = vadd.f32 %v547, 1.0
    %v579 = vadd.f32 %v549, 1.0
    %v580 = vadd.f32 %v551, 1.0
    %v581 = vadd.f32 %v553, 1.0
    %v582 = vadd.f32 %v555, 1.0
    %v583 = vadd.f32 %v557, 1.0
    %v584 = vadd.f32 %v559, 1.0
    %v585 = vadd.f32 %v561, 1.0
    %v586 = vadd.f32 %v563, 1.0
    %v587 = vadd.f32 %v565, 1.0
    %v588 = vadd.f32 %v567, 1.0
    %v589 = vadd.f32 %v569, 1.0
    %v590 = vadd.f32 %v571, 1.0
    %v591 = vadd.f32 %v573, 1.0
    %v592 = vadd.f32 %v575, 1.0
    %v593 = vadd.f32 %v577, 1.0
    %v594 = vrcp.pop %v578
    %v595 = vmul.f32 %v578, %v594
    %v596 = vsub.f32 1.0, %v595
    %v597 = vmul.f32 %v594, %v596
    %v598 = vadd.f32 %v594, %v597
    %vm599 = vweird.f32 %v578
    %vm600 = vweird.f32 %v594
    %vm601 = vmor %vm599, %vm600
    %v602 = vsel %vm601, %v594, %v598
    %v603 = vand.u32 2147483647, %v578
    %vm604 = vcmp.eq.f32.partialorder %v603, 8.507059e+37
    %v605 = vand.u32 %v578, 2147483648
    %v606 = vor.u32 1.1754944e-38, %v605
    %v607 = vsel %vm604, %v606, %v602
    %v608 = vmul.f32 1.0, %v607
    %v609 = vrcp.pop %v579
    %v610 = vmul.f32 %v579, %v609
    %v611 = vsub.f32 1.0, %v610
    %v612 = vmul.f32 %v609, %v611
    %v613 = vadd.f32 %v609, %v612
    %vm614 = vweird.f32 %v579
    %vm615 = vweird.f32 %v609
    %vm616 = vmor %vm614, %vm615
    %v617 = vsel %vm616, %v609, %v613
    %v618 = vand.u32 2147483647, %v579
    %vm619 = vcmp.eq.f32.partialorder %v618, 8.507059e+37
    %v620 = vand.u32 %v579, 2147483648
    %v621 = vor.u32 1.1754944e-38, %v620
    %v622 = vsel %vm619, %v621, %v617
    %v623 = vmul.f32 1.0, %v622
    %v624 = vrcp.pop %v580
    %v625 = vmul.f32 %v580, %v624
    %v626 = vsub.f32 1.0, %v625
    %v627 = vmul.f32 %v624, %v626
    %v628 = vadd.f32 %v624, %v627
    %vm629 = vweird.f32 %v580
    %vm630 = vweird.f32 %v624
    %vm631 = vmor %vm629, %vm630
    %v632 = vsel %vm631, %v624, %v628
    %v633 = vand.u32 2147483647, %v580
    %vm634 = vcmp.eq.f32.partialorder %v633, 8.507059e+37
    %v635 = vand.u32 %v580, 2147483648
    %v636 = vor.u32 1.1754944e-38, %v635
    %v637 = vsel %vm634, %v636, %v632
    %v638 = vmul.f32 1.0, %v637
    %v639 = vrcp.pop %v581
    %v640 = vmul.f32 %v581, %v639
    %v641 = vsub.f32 1.0, %v640
    %v642 = vmul.f32 %v639, %v641
    %v643 = vadd.f32 %v639, %v642
    %vm644 = vweird.f32 %v581
    %vm645 = vweird.f32 %v639
    %vm646 = vmor %vm644, %vm645
    %v647 = vsel %vm646, %v639, %v643
    %v648 = vand.u32 2147483647, %v581
    %vm649 = vcmp.eq.f32.partialorder %v648, 8.507059e+37
    %v650 = vand.u32 %v581, 2147483648
    %v651 = vor.u32 1.1754944e-38, %v650
    %v652 = vsel %vm649, %v651, %v647
    %v653 = vmul.f32 1.0, %v652
    %v654 = vrcp.pop %v582
    %v655 = vmul.f32 %v582, %v654
    %v656 = vsub.f32 1.0, %v655
    %v657 = vmul.f32 %v654, %v656
    %v658 = vadd.f32 %v654, %v657
    %vm659 = vweird.f32 %v582
    %vm660 = vweird.f32 %v654
    %vm661 = vmor %vm659, %vm660
    %v662 = vsel %vm661, %v654, %v658
    %v663 = vand.u32 2147483647, %v582
    %vm664 = vcmp.eq.f32.partialorder %v663, 8.507059e+37
    %v665 = vand.u32 %v582, 2147483648
    %v666 = vor.u32 1.1754944e-38, %v665
    %v667 = vsel %vm664, %v666, %v662
    %v668 = vmul.f32 1.0, %v667
    %v669 = vrcp.pop %v583
    %v670 = vmul.f32 %v583, %v669
    %v671 = vsub.f32 1.0, %v670
    %v672 = vmul.f32 %v669, %v671
    %v673 = vadd.f32 %v669, %v672
    %vm674 = vweird.f32 %v583
    %vm675 = vweird.f32 %v669
    %vm676 = vmor %vm674, %vm675
    %v677 = vsel %vm676, %v669, %v673
    %v678 = vand.u32 2147483647, %v583
    %vm679 = vcmp.eq.f32.partialorder %v678, 8.507059e+37
    %v680 = vand.u32 %v583, 2147483648
    %v681 = vor.u32 1.1754944e-38, %v680
    %v682 = vsel %vm679, %v681, %v677
    %v683 = vmul.f32 1.0, %v682
    %v684 = vrcp.pop %v584
    %v685 = vmul.f32 %v584, %v684
    %v686 = vsub.f32 1.0, %v685
    %v687 = vmul.f32 %v684, %v686
    %v688 = vadd.f32 %v684, %v687
    %vm689 = vweird.f32 %v584
    %vm690 = vweird.f32 %v684
    %vm691 = vmor %vm689, %vm690
    %v692 = vsel %vm691, %v684, %v688
    %v693 = vand.u32 2147483647, %v584
    %vm694 = vcmp.eq.f32.partialorder %v693, 8.507059e+37
    %v695 = vand.u32 %v584, 2147483648
    %v696 = vor.u32 1.1754944e-38, %v695
    %v697 = vsel %vm694, %v696, %v692
    %v698 = vmul.f32 1.0, %v697
    %v699 = vrcp.pop %v585
    %v700 = vmul.f32 %v585, %v699
    %v701 = vsub.f32 1.0, %v700
    %v702 = vmul.f32 %v699, %v701
    %v703 = vadd.f32 %v699, %v702
    %vm704 = vweird.f32 %v585
    %vm705 = vweird.f32 %v699
    %vm706 = vmor %vm704, %vm705
    %v707 = vsel %vm706, %v699, %v703
    %v708 = vand.u32 2147483647, %v585
    %vm709 = vcmp.eq.f32.partialorder %v708, 8.507059e+37
    %v710 = vand.u32 %v585, 2147483648
    %v711 = vor.u32 1.1754944e-38, %v710
    %v712 = vsel %vm709, %v711, %v707
    %v713 = vmul.f32 1.0, %v712
    %v714 = vrcp.pop %v586
    %v715 = vmul.f32 %v586, %v714
    %v716 = vsub.f32 1.0, %v715
    %v717 = vmul.f32 %v714, %v716
    %v718 = vadd.f32 %v714, %v717
    %vm719 = vweird.f32 %v586
    %vm720 = vweird.f32 %v714
    %vm721 = vmor %vm719, %vm720
    %v722 = vsel %vm721, %v714, %v718
    %v723 = vand.u32 2147483647, %v586
    %vm724 = vcmp.eq.f32.partialorder %v723, 8.507059e+37
    %v725 = vand.u32 %v586, 2147483648
    %v726 = vor.u32 1.1754944e-38, %v725
    %v727 = vsel %vm724, %v726, %v722
    %v728 = vmul.f32 1.0, %v727
    %v729 = vrcp.pop %v587
    %v730 = vmul.f32 %v587, %v729
    %v731 = vsub.f32 1.0, %v730
    %v732 = vmul.f32 %v729, %v731
    %v733 = vadd.f32 %v729, %v732
    %vm734 = vweird.f32 %v587
    %vm735 = vweird.f32 %v729
    %vm736 = vmor %vm734, %vm735
    %v737 = vsel %vm736, %v729, %v733
    %v738 = vand.u32 2147483647, %v587
    %vm739 = vcmp.eq.f32.partialorder %v738, 8.507059e+37
    %v740 = vand.u32 %v587, 2147483648
    %v741 = vor.u32 1.1754944e-38, %v740
    %v742 = vsel %vm739, %v741, %v737
    %v743 = vmul.f32 1.0, %v742
    %v744 = vrcp.pop %v588
    %v745 = vmul.f32 %v588, %v744
    %v746 = vsub.f32 1.0, %v745
    %v747 = vmul.f32 %v744, %v746
    %v748 = vadd.f32 %v744, %v747
    %vm749 = vweird.f32 %v588
    %vm750 = vweird.f32 %v744
    %vm751 = vmor %vm749, %vm750
    %v752 = vsel %vm751, %v744, %v748
    %v753 = vand.u32 2147483647, %v588
    %vm754 = vcmp.eq.f32.partialorder %v753, 8.507059e+37
    %v755 = vand.u32 %v588, 2147483648
    %v756 = vor.u32 1.1754944e-38, %v755
    %v757 = vsel %vm754, %v756, %v752
    %v758 = vmul.f32 1.0, %v757
    %v759 = vrcp.pop %v589
    %v760 = vmul.f32 %v589, %v759
    %v761 = vsub.f32 1.0, %v760
    %v762 = vmul.f32 %v759, %v761
    %v763 = vadd.f32 %v759, %v762
    %vm764 = vweird.f32 %v589
    %vm765 = vweird.f32 %v759
    %vm766 = vmor %vm764, %vm765
    %v767 = vsel %vm766, %v759, %v763
    %v768 = vand.u32 2147483647, %v589
    %vm769 = vcmp.eq.f32.partialorder %v768, 8.507059e+37
    %v770 = vand.u32 %v589, 2147483648
    %v771 = vor.u32 1.1754944e-38, %v770
    %v772 = vsel %vm769, %v771, %v767
    %v773 = vmul.f32 1.0, %v772
    %v774 = vrcp.pop %v590
    %v775 = vmul.f32 %v590, %v774
    %v776 = vsub.f32 1.0, %v775
    %v777 = vmul.f32 %v774, %v776
    %v778 = vadd.f32 %v774, %v777
    %vm779 = vweird.f32 %v590
    %vm780 = vweird.f32 %v774
    %vm781 = vmor %vm779, %vm780
    %v782 = vsel %vm781, %v774, %v778
    %v783 = vand.u32 2147483647, %v590
    %vm784 = vcmp.eq.f32.partialorder %v783, 8.507059e+37
    %v785 = vand.u32 %v590, 2147483648
    %v786 = vor.u32 1.1754944e-38, %v785
    %v787 = vsel %vm784, %v786, %v782
    %v788 = vmul.f32 1.0, %v787
    %v789 = vrcp.pop %v591
    %v790 = vmul.f32 %v591, %v789
    %v791 = vsub.f32 1.0, %v790
    %v792 = vmul.f32 %v789, %v791
    %v793 = vadd.f32 %v789, %v792
    %vm794 = vweird.f32 %v591
    %vm795 = vweird.f32 %v789
    %vm796 = vmor %vm794, %vm795
    %v797 = vsel %vm796, %v789, %v793
    %v798 = vand.u32 2147483647, %v591
    %vm799 = vcmp.eq.f32.partialorder %v798, 8.507059e+37
    %v800 = vand.u32 %v591, 2147483648
    %v801 = vor.u32 1.1754944e-38, %v800
    %v802 = vsel %vm799, %v801, %v797
    %v803 = vmul.f32 1.0, %v802
    %v804 = vrcp.pop %v592
    %v805 = vmul.f32 %v592, %v804
    %v806 = vsub.f32 1.0, %v805
    %v807 = vmul.f32 %v804, %v806
    %v808 = vadd.f32 %v804, %v807
    %vm809 = vweird.f32 %v592
    %vm810 = vweird.f32 %v804
    %vm811 = vmor %vm809, %vm810
    %v812 = vsel %vm811, %v804, %v808
    %v813 = vand.u32 2147483647, %v592
    %vm814 = vcmp.eq.f32.partialorder %v813, 8.507059e+37
    %v815 = vand.u32 %v592, 2147483648
    %v816 = vor.u32 1.1754944e-38, %v815
    %v817 = vsel %vm814, %v816, %v812
    %v818 = vmul.f32 1.0, %v817
    %v819 = vrcp.pop %v593
    %v820 = vmul.f32 %v593, %v819
    %v821 = vsub.f32 1.0, %v820
    %v822 = vmul.f32 %v819, %v821
    %v823 = vadd.f32 %v819, %v822
    %vm824 = vweird.f32 %v593
    %vm825 = vweird.f32 %v819
    %vm826 = vmor %vm824, %vm825
    %v827 = vsel %vm826, %v819, %v823
    %v828 = vand.u32 2147483647, %v593
    %vm829 = vcmp.eq.f32.partialorder %v828, 8.507059e+37
    %v830 = vand.u32 %v593, 2147483648
    %v831 = vor.u32 1.1754944e-38, %v830
    %v832 = vsel %vm829, %v831, %v827
    %v833 = vmul.f32 1.0, %v832
    %v834 = vtanh.pop %v514
    %v835 = vtanh.pop %v515
    %v836 = vtanh.pop %v516
    %v837 = vtanh.pop %v517
    %v838 = vtanh.pop %v518
    %v839 = vtanh.pop %v519
    %v840 = vtanh.pop %v520
    %v841 = vtanh.pop %v521
    %v842 = vtanh.pop %v522
    %v843 = vtanh.pop %v523
    %v844 = vtanh.pop %v524
    %v845 = vtanh.pop %v525
    %v846 = vtanh.pop %v526
    %v847 = vtanh.pop %v527
    %v848 = vtanh.pop %v528
    %v849 = vtanh.pop %v529
    %v850 = vmul.f32 %v608, 0.0
    %v851 = vmul.f32 %v623, 0.0
    %v852 = vmul.f32 %v638, 0.0
    %v853 = vmul.f32 %v653, 0.0
    %v854 = vmul.f32 %v668, 0.0
    %v855 = vmul.f32 %v683, 0.0
    %v856 = vmul.f32 %v698, 0.0
    %v857 = vmul.f32 %v713, 0.0
    %v858 = vmul.f32 %v728, 0.0
    %v859 = vmul.f32 %v743, 0.0
    %v860 = vmul.f32 %v758, 0.0
    %v861 = vmul.f32 %v773, 0.0
    %v862 = vmul.f32 %v788, 0.0
    %v863 = vmul.f32 %v803, 0.0
    %v864 = vmul.f32 %v818, 0.0
    %v865 = vmul.f32 %v833, 0.0
    %882 = vrot.lane.b32.xlu0 %v834, 64
    %v883 = vpop.permute.xlu0 %882
    %884 = vrot.lane.b32.xlu0 %v835, 64
    %v885 = vpop.permute.xlu0 %884
    %886 = vrot.lane.b32.xlu0 %v836, 64
    %v887 = vpop.permute.xlu0 %886
    %888 = vrot.lane.b32.xlu0 %v837, 64
    %v889 = vpop.permute.xlu0 %888
    %890 = vrot.lane.b32.xlu0 %v838, 64
    %v891 = vpop.permute.xlu0 %890
    %892 = vrot.lane.b32.xlu0 %v839, 64
    %v893 = vpop.permute.xlu0 %892
    %894 = vrot.lane.b32.xlu0 %v840, 64
    %v895 = vpop.permute.xlu0 %894
    %896 = vrot.lane.b32.xlu0 %v841, 64
    %v897 = vpop.permute.xlu0 %896
    %898 = vrot.lane.b32.xlu0 %v842, 64
    %v899 = vpop.permute.xlu0 %898
    %900 = vrot.lane.b32.xlu0 %v843, 64
    %v901 = vpop.permute.xlu0 %900
    %902 = vrot.lane.b32.xlu0 %v844, 64
    %v903 = vpop.permute.xlu0 %902
    %904 = vrot.lane.b32.xlu0 %v845, 64
    %v905 = vpop.permute.xlu0 %904
    %906 = vrot.lane.b32.xlu0 %v846, 64
    %v907 = vpop.permute.xlu0 %906
    %908 = vrot.lane.b32.xlu0 %v847, 64
    %v909 = vpop.permute.xlu0 %908
    %910 = vrot.lane.b32.xlu0 %v848, 64
    %v911 = vpop.permute.xlu0 %910
    %912 = vrot.lane.b32.xlu0 %v849, 64
    %v913 = vpop.permute.xlu0 %912
    %v930 = vmul.f32 %v608, %v883
    %v931 = vmul.f32 %v623, %v885
    %v932 = vmul.f32 %v638, %v887
    %v933 = vmul.f32 %v653, %v889
    %v934 = vmul.f32 %v668, %v891
    %v935 = vmul.f32 %v683, %v893
    %v936 = vmul.f32 %v698, %v895
    %v937 = vmul.f32 %v713, %v897
    %v938 = vmul.f32 %v728, %v899
    %v939 = vmul.f32 %v743, %v901
    %v940 = vmul.f32 %v758, %v903
    %v941 = vmul.f32 %v773, %v905
    %v942 = vmul.f32 %v788, %v907
    %v943 = vmul.f32 %v803, %v909
    %v944 = vmul.f32 %v818, %v911
    %v945 = vmul.f32 %v833, %v913
    %962 = vrot.lane.b32.xlu0 %v930, 32
    %v963 = vpop.permute.xlu0 %962
    %964 = vrot.lane.b32.xlu0 %v931, 32
    %v965 = vpop.permute.xlu0 %964
    %966 = vrot.lane.b32.xlu0 %v932, 32
    %v967 = vpop.permute.xlu0 %966
    %968 = vrot.lane.b32.xlu0 %v933, 32
    %v969 = vpop.permute.xlu0 %968
    %970 = vrot.lane.b32.xlu0 %v934, 32
    %v971 = vpop.permute.xlu0 %970
    %972 = vrot.lane.b32.xlu0 %v935, 32
    %v973 = vpop.permute.xlu0 %972
    %974 = vrot.lane.b32.xlu0 %v936, 32
    %v975 = vpop.permute.xlu0 %974
    %976 = vrot.lane.b32.xlu0 %v937, 32
    %v977 = vpop.permute.xlu0 %976
    %978 = vrot.lane.b32.xlu0 %v938, 32
    %v979 = vpop.permute.xlu0 %978
    %980 = vrot.lane.b32.xlu0 %v939, 32
    %v981 = vpop.permute.xlu0 %980
    %982 = vrot.lane.b32.xlu0 %v940, 32
    %v983 = vpop.permute.xlu0 %982
    %984 = vrot.lane.b32.xlu0 %v941, 32
    %v985 = vpop.permute.xlu0 %984
    %986 = vrot.lane.b32.xlu0 %v942, 32
    %v987 = vpop.permute.xlu0 %986
    %988 = vrot.lane.b32.xlu0 %v943, 32
    %v989 = vpop.permute.xlu0 %988
    %990 = vrot.lane.b32.xlu0 %v944, 32
    %v991 = vpop.permute.xlu0 %990
    %992 = vrot.lane.b32.xlu0 %v945, 32
    %v993 = vpop.permute.xlu0 %992
    %v1010 = vadd.f32 %v850, %v963
    %v1011 = vadd.f32 %v851, %v965
    %v1012 = vadd.f32 %v852, %v967
    %v1013 = vadd.f32 %v853, %v969
    %v1014 = vadd.f32 %v854, %v971
    %v1015 = vadd.f32 %v855, %v973
    %v1016 = vadd.f32 %v856, %v975
    %v1017 = vadd.f32 %v857, %v977
    %v1018 = vadd.f32 %v858, %v979
    %v1019 = vadd.f32 %v859, %v981
    %v1020 = vadd.f32 %v860, %v983
    %v1021 = vadd.f32 %v861, %v985
    %v1022 = vadd.f32 %v862, %v987
    %v1023 = vadd.f32 %v863, %v989
    %v1024 = vadd.f32 %v864, %v991
    %v1025 = vadd.f32 %v865, %v993
    %v1026 = vtanh.pop %v1010
    %v1027 = vtanh.pop %v1011
    %v1028 = vtanh.pop %v1012
    %v1029 = vtanh.pop %v1013
    %v1030 = vtanh.pop %v1014
    %v1031 = vtanh.pop %v1015
    %v1032 = vtanh.pop %v1016
    %v1033 = vtanh.pop %v1017
    %v1034 = vtanh.pop %v1018
    %v1035 = vtanh.pop %v1019
    %v1036 = vtanh.pop %v1020
    %v1037 = vtanh.pop %v1021
    %v1038 = vtanh.pop %v1022
    %v1039 = vtanh.pop %v1023
    %v1040 = vtanh.pop %v1024
    %v1041 = vtanh.pop %v1025
    %1058 = vrot.lane.b32.xlu0 %v1026, 64
    %v1059 = vpop.permute.xlu0 %1058
    %1060 = vrot.lane.b32.xlu0 %v1027, 64
    %v1061 = vpop.permute.xlu0 %1060
    %1062 = vrot.lane.b32.xlu0 %v1028, 64
    %v1063 = vpop.permute.xlu0 %1062
    %1064 = vrot.lane.b32.xlu0 %v1029, 64
    %v1065 = vpop.permute.xlu0 %1064
    %1066 = vrot.lane.b32.xlu0 %v1030, 64
    %v1067 = vpop.permute.xlu0 %1066
    %1068 = vrot.lane.b32.xlu0 %v1031, 64
    %v1069 = vpop.permute.xlu0 %1068
    %1070 = vrot.lane.b32.xlu0 %v1032, 64
    %v1071 = vpop.permute.xlu0 %1070
    %1072 = vrot.lane.b32.xlu0 %v1033, 64
    %v1073 = vpop.permute.xlu0 %1072
    %1074 = vrot.lane.b32.xlu0 %v1034, 64
    %v1075 = vpop.permute.xlu0 %1074
    %1076 = vrot.lane.b32.xlu0 %v1035, 64
    %v1077 = vpop.permute.xlu0 %1076
    %1078 = vrot.lane.b32.xlu0 %v1036, 64
    %v1079 = vpop.permute.xlu0 %1078
    %1080 = vrot.lane.b32.xlu0 %v1037, 64
    %v1081 = vpop.permute.xlu0 %1080
    %1082 = vrot.lane.b32.xlu0 %v1038, 64
    %v1083 = vpop.permute.xlu0 %1082
    %1084 = vrot.lane.b32.xlu0 %v1039, 64
    %v1085 = vpop.permute.xlu0 %1084
    %1086 = vrot.lane.b32.xlu0 %v1040, 64
    %v1087 = vpop.permute.xlu0 %1086
    %1088 = vrot.lane.b32.xlu0 %v1041, 64
    %v1089 = vpop.permute.xlu0 %1088
    %v1106 = vmul.f32 %v608, %v1059
    %v1107 = vmul.f32 %v623, %v1061
    %v1108 = vmul.f32 %v638, %v1063
    %v1109 = vmul.f32 %v653, %v1065
    %v1110 = vmul.f32 %v668, %v1067
    %v1111 = vmul.f32 %v683, %v1069
    %v1112 = vmul.f32 %v698, %v1071
    %v1113 = vmul.f32 %v713, %v1073
    %v1114 = vmul.f32 %v728, %v1075
    %v1115 = vmul.f32 %v743, %v1077
    %v1116 = vmul.f32 %v758, %v1079
    %v1117 = vmul.f32 %v773, %v1081
    %v1118 = vmul.f32 %v788, %v1083
    %v1119 = vmul.f32 %v803, %v1085
    %v1120 = vmul.f32 %v818, %v1087
    %v1121 = vmul.f32 %v833, %v1089
    %v1122 = vld [vmem:[#allocation2 + $0x1] sm:$0x1]
    %v1123 = vld [vmem:[#allocation2 + $0x9] sm:$0x1]
    %v1124 = vld [vmem:[#allocation2 + $0x11] sm:$0x1]
    %v1125 = vld [vmem:[#allocation2 + $0x19] sm:$0x1]
    %v1126 = vld [vmem:[#allocation2 + $0x21] sm:$0x1]
    %v1127 = vld [vmem:[#allocation2 + $0x29] sm:$0x1]
    %v1128 = vld [vmem:[#allocation2 + $0x31] sm:$0x1]
    %v1129 = vld [vmem:[#allocation2 + $0x39] sm:$0x1]
    %v1130 = vld [vmem:[#allocation2 + $0x41] sm:$0x1]
    %v1131 = vld [vmem:[#allocation2 + $0x49] sm:$0x1]
    %v1132 = vld [vmem:[#allocation2 + $0x51] sm:$0x1]
    %v1133 = vld [vmem:[#allocation2 + $0x59] sm:$0x1]
    %v1134 = vld [vmem:[#allocation2 + $0x61] sm:$0x1]
    %v1135 = vld [vmem:[#allocation2 + $0x69] sm:$0x1]
    %v1136 = vld [vmem:[#allocation2 + $0x71] sm:$0x1]
    %v1137 = vld [vmem:[#allocation2 + $0x79] sm:$0x1]
    %1138 = vset.pattern.permute.xlu0 1
    %1139 = vperm.xlu0 %1138, %v360
    %v1140 = vpop.permute.xlu0 %1139
    %1141 = vset.pattern.permute.xlu0 1
    %1142 = vperm.xlu0 %1141, %v361
    %v1143 = vpop.permute.xlu0 %1142
    %v1144 = vrot.slane %v1140, 1
    %v1145 = vrot.slane %v1140, 2
    %v1146 = vrot.slane %v1140, 3
    %v1147 = vrot.slane %v1140, 4
    %v1148 = vrot.slane %v1140, 5
    %v1149 = vrot.slane %v1140, 6
    %v1150 = vrot.slane %v1140, 7
    %v1151 = vrot.slane %v1143, 1
    %v1152 = vrot.slane %v1143, 2
    %v1153 = vrot.slane %v1143, 3
    %v1154 = vrot.slane %v1143, 4
    %v1155 = vrot.slane %v1143, 5
    %v1156 = vrot.slane %v1143, 6
    %v1157 = vrot.slane %v1143, 7
    %v1174 = vmul.f32 %v1122, %v1140
    %v1175 = vmul.f32 %v1123, %v1144
    %v1176 = vmul.f32 %v1124, %v1145
    %v1177 = vmul.f32 %v1125, %v1146
    %v1178 = vmul.f32 %v1126, %v1147
    %v1179 = vmul.f32 %v1127, %v1148
    %v1180 = vmul.f32 %v1128, %v1149
    %v1181 = vmul.f32 %v1129, %v1150
    %v1182 = vmul.f32 %v1130, %v1143
    %v1183 = vmul.f32 %v1131, %v1151
    %v1184 = vmul.f32 %v1132, %v1152
    %v1185 = vmul.f32 %v1133, %v1153
    %v1186 = vmul.f32 %v1134, %v1154
    %v1187 = vmul.f32 %v1135, %v1155
    %v1188 = vmul.f32 %v1136, %v1156
    %v1189 = vmul.f32 %v1137, %v1157
    %v1206 = vrot.slane %v1107, 7
    %vm1207 = vcmask 1041409
    %v1208 = vsel %vm1207, %v1206, %v1106
    %v1209 = vrot.slane %v1108, 6
    %vm1210 = vcmask 1042434
    %v1211 = vsel %vm1210, %v1209, %v1208
    %v1212 = vrot.slane %v1109, 5
    %vm1213 = vcmask 1043459
    %v1214 = vsel %vm1213, %v1212, %v1211
    %v1215 = vrot.slane %v1110, 4
    %vm1216 = vcmask 1044484
    %v1217 = vsel %vm1216, %v1215, %v1214
    %v1218 = vrot.slane %v1111, 3
    %vm1219 = vcmask 1045509
    %v1220 = vsel %vm1219, %v1218, %v1217
    %v1221 = vrot.slane %v1112, 2
    %vm1222 = vcmask 1046534
    %v1223 = vsel %vm1222, %v1221, %v1220
    %v1224 = vrot.slane %v1113, 1
    %vm1225 = vcmask 1047559
    %v1226 = vsel %vm1225, %v1224, %v1223
    %v1227 = vrot.slane %v1115, 7
    %v1228 = vsel %vm1207, %v1227, %v1114
    %v1229 = vrot.slane %v1116, 6
    %v1230 = vsel %vm1210, %v1229, %v1228
    %v1231 = vrot.slane %v1117, 5
    %v1232 = vsel %vm1213, %v1231, %v1230
    %v1233 = vrot.slane %v1118, 4
    %v1234 = vsel %vm1216, %v1233, %v1232
    %v1235 = vrot.slane %v1119, 3
    %v1236 = vsel %vm1219, %v1235, %v1234
    %v1237 = vrot.slane %v1120, 2
    %v1238 = vsel %vm1222, %v1237, %v1236
    %v1239 = vrot.slane %v1121, 1
    %v1240 = vsel %vm1225, %v1239, %v1238
    %1241 = vrot.lane.b32.xlu0 %v1226, 32
    %v1242 = vpop.permute.xlu0 %1241
    %1243 = vrot.lane.b32.xlu0 %v1240, 32
    %v1244 = vpop.permute.xlu0 %1243
    %v1245 = vsel %vm230, %v1242, 0
    %v1247 = vsel %vm230, %v1244, 0
    %1249 = vmatpush.msra.mxu0 0.0
    %1250 = vmatpush.msra.mxu0 0.0
    %1251 = vmatpush.msra.mxu0 0.0
    %1252 = vmatpush.msra.mxu0 0.0
    %1253 = vmatpush.msra.mxu0 0.0
    %1254 = vmatpush.msra.mxu0 0.0
    %1255 = vmatpush.msra.mxu0 0.0
    %1256 = vmatpush.msra.mxu0 0.0
    %1257 = vmatpush.msra.mxu0 0.0
    %1258 = vmatpush.msra.mxu0 0.0
    %1259 = vmatpush.msra.mxu0 0.0
    %1260 = vmatpush.msra.mxu0 0.0
    %1261 = vmatpush.msra.mxu0 %v365
    %1262 = vmatpush.msra.mxu0 %v364
    %1263 = vmatpush.msra.mxu0 %v363
    %1264 = vmatpush.msra.mxu0 %v362
    %1265 = vmatmul.f32.gmra.mxu0 %v1245
    %v1266 = vpop.f32.mrf.mxu0
    %v1267 = vadd.f32 0.0, %v1266
    %1268 = vmatmul.f32.gmra.mxu0 %v1247
    %v1269 = vpop.f32.mrf.mxu0
    %v1270 = vadd.f32 0.0, %v1269
    %1271 = vdwg.mxu0
    %v1274 = vrot.slane %v1267, 1
    %v1275 = vrot.slane %v1267, 2
    %v1276 = vrot.slane %v1267, 3
    %v1277 = vrot.slane %v1267, 4
    %v1278 = vrot.slane %v1267, 5
    %v1279 = vrot.slane %v1267, 6
    %v1280 = vrot.slane %v1267, 7
    %v1281 = vrot.slane %v1270, 1
    %v1282 = vrot.slane %v1270, 2
    %v1283 = vrot.slane %v1270, 3
    %v1284 = vrot.slane %v1270, 4
    %v1285 = vrot.slane %v1270, 5
    %v1286 = vrot.slane %v1270, 6
    %v1287 = vrot.slane %v1270, 7
    %v1304 = vadd.f32 %v1174, %v1267
    %v1305 = vadd.f32 %v1175, %v1274
    %v1306 = vadd.f32 %v1176, %v1275
    %v1307 = vadd.f32 %v1177, %v1276
    %v1308 = vadd.f32 %v1178, %v1277
    %v1309 = vadd.f32 %v1179, %v1278
    %v1310 = vadd.f32 %v1180, %v1279
    %v1311 = vadd.f32 %v1181, %v1280
    %v1312 = vadd.f32 %v1182, %v1270
    %v1313 = vadd.f32 %v1183, %v1281
    %v1314 = vadd.f32 %v1184, %v1282
    %v1315 = vadd.f32 %v1185, %v1283
    %v1316 = vadd.f32 %v1186, %v1284
    %v1317 = vadd.f32 %v1187, %v1285
    %v1318 = vadd.f32 %v1188, %v1286
    %v1319 = vadd.f32 %v1189, %v1287
    %v1320 = vadd.f32 %v1304, %v512
    %v1321 = vadd.f32 %v1305, %v512
    %v1322 = vadd.f32 %v1306, %v512
    %v1323 = vadd.f32 %v1307, %v512
    %v1324 = vadd.f32 %v1308, %v512
    %v1325 = vadd.f32 %v1309, %v512
    %v1326 = vadd.f32 %v1310, %v512
    %v1327 = vadd.f32 %v1311, %v512
    %v1328 = vadd.f32 %v1312, %v512
    %v1329 = vadd.f32 %v1313, %v512
    %v1330 = vadd.f32 %v1314, %v512
    %v1331 = vadd.f32 %v1315, %v512
    %v1332 = vadd.f32 %v1316, %v512
    %v1333 = vadd.f32 %v1317, %v512
    %v1334 = vadd.f32 %v1318, %v512
    %v1335 = vadd.f32 %v1319, %v512
    %v1336 = vxor.u32 %v1320, 2147483648
    %v1337 = vxor.u32 %v1321, 2147483648
    %v1338 = vxor.u32 %v1322, 2147483648
    %v1339 = vxor.u32 %v1323, 2147483648
    %v1340 = vxor.u32 %v1324, 2147483648
    %v1341 = vxor.u32 %v1325, 2147483648
    %v1342 = vxor.u32 %v1326, 2147483648
    %v1343 = vxor.u32 %v1327, 2147483648
    %v1344 = vxor.u32 %v1328, 2147483648
    %v1345 = vxor.u32 %v1329, 2147483648
    %v1346 = vxor.u32 %v1330, 2147483648
    %v1347 = vxor.u32 %v1331, 2147483648
    %v1348 = vxor.u32 %v1332, 2147483648
    %v1349 = vxor.u32 %v1333, 2147483648
    %v1350 = vxor.u32 %v1334, 2147483648
    %v1351 = vxor.u32 %v1335, 2147483648
    %v1352 = vmul.f32 %v1336, 1.442695
    %v1353 = vpow.pop %v1352
    %v1354 = vmul.f32 %v1337, 1.442695
    %v1355 = vpow.pop %v1354
    %v1356 = vmul.f32 %v1338, 1.442695
    %v1357 = vpow.pop %v1356
    %v1358 = vmul.f32 %v1339, 1.442695
    %v1359 = vpow.pop %v1358
    %v1360 = vmul.f32 %v1340, 1.442695
    %v1361 = vpow.pop %v1360
    %v1362 = vmul.f32 %v1341, 1.442695
    %v1363 = vpow.pop %v1362
    %v1364 = vmul.f32 %v1342, 1.442695
    %v1365 = vpow.pop %v1364
    %v1366 = vmul.f32 %v1343, 1.442695
    %v1367 = vpow.pop %v1366
    %v1368 = vmul.f32 %v1344, 1.442695
    %v1369 = vpow.pop %v1368
    %v1370 = vmul.f32 %v1345, 1.442695
    %v1371 = vpow.pop %v1370
    %v1372 = vmul.f32 %v1346, 1.442695
    %v1373 = vpow.pop %v1372
    %v1374 = vmul.f32 %v1347, 1.442695
    %v1375 = vpow.pop %v1374
    %v1376 = vmul.f32 %v1348, 1.442695
    %v1377 = vpow.pop %v1376
    %v1378 = vmul.f32 %v1349, 1.442695
    %v1379 = vpow.pop %v1378
    %v1380 = vmul.f32 %v1350, 1.442695
    %v1381 = vpow.pop %v1380
    %v1382 = vmul.f32 %v1351, 1.442695
    %v1383 = vpow.pop %v1382
    %v1384 = vadd.f32 %v1353, 1.0
    %v1385 = vadd.f32 %v1355, 1.0
    %v1386 = vadd.f32 %v1357, 1.0
    %v1387 = vadd.f32 %v1359, 1.0
    %v1388 = vadd.f32 %v1361, 1.0
    %v1389 = vadd.f32 %v1363, 1.0
    %v1390 = vadd.f32 %v1365, 1.0
    %v1391 = vadd.f32 %v1367, 1.0
    %v1392 = vadd.f32 %v1369, 1.0
    %v1393 = vadd.f32 %v1371, 1.0
    %v1394 = vadd.f32 %v1373, 1.0
    %v1395 = vadd.f32 %v1375, 1.0
    %v1396 = vadd.f32 %v1377, 1.0
    %v1397 = vadd.f32 %v1379, 1.0
    %v1398 = vadd.f32 %v1381, 1.0
    %v1399 = vadd.f32 %v1383, 1.0
    %v1400 = vrcp.pop %v1384
    %v1401 = vmul.f32 %v1384, %v1400
    %v1402 = vsub.f32 1.0, %v1401
    %v1403 = vmul.f32 %v1400, %v1402
    %v1404 = vadd.f32 %v1400, %v1403
    %vm1405 = vweird.f32 %v1384
    %vm1406 = vweird.f32 %v1400
    %vm1407 = vmor %vm1405, %vm1406
    %v1408 = vsel %vm1407, %v1400, %v1404
    %v1409 = vand.u32 2147483647, %v1384
    %vm1410 = vcmp.eq.f32.partialorder %v1409, 8.507059e+37
    %v1411 = vand.u32 %v1384, 2147483648
    %v1412 = vor.u32 1.1754944e-38, %v1411
    %v1413 = vsel %vm1410, %v1412, %v1408
    %v1414 = vmul.f32 1.0, %v1413
    %v1415 = vrcp.pop %v1385
    %v1416 = vmul.f32 %v1385, %v1415
    %v1417 = vsub.f32 1.0, %v1416
    %v1418 = vmul.f32 %v1415, %v1417
    %v1419 = vadd.f32 %v1415, %v1418
    %vm1420 = vweird.f32 %v1385
    %vm1421 = vweird.f32 %v1415
    %vm1422 = vmor %vm1420, %vm1421
    %v1423 = vsel %vm1422, %v1415, %v1419
    %v1424 = vand.u32 2147483647, %v1385
    %vm1425 = vcmp.eq.f32.partialorder %v1424, 8.507059e+37
    %v1426 = vand.u32 %v1385, 2147483648
    %v1427 = vor.u32 1.1754944e-38, %v1426
    %v1428 = vsel %vm1425, %v1427, %v1423
    %v1429 = vmul.f32 1.0, %v1428
    %v1430 = vrcp.pop %v1386
    %v1431 = vmul.f32 %v1386, %v1430
    %v1432 = vsub.f32 1.0, %v1431
    %v1433 = vmul.f32 %v1430, %v1432
    %v1434 = vadd.f32 %v1430, %v1433
    %vm1435 = vweird.f32 %v1386
    %vm1436 = vweird.f32 %v1430
    %vm1437 = vmor %vm1435, %vm1436
    %v1438 = vsel %vm1437, %v1430, %v1434
    %v1439 = vand.u32 2147483647, %v1386
    %vm1440 = vcmp.eq.f32.partialorder %v1439, 8.507059e+37
    %v1441 = vand.u32 %v1386, 2147483648
    %v1442 = vor.u32 1.1754944e-38, %v1441
    %v1443 = vsel %vm1440, %v1442, %v1438
    %v1444 = vmul.f32 1.0, %v1443
    %v1445 = vrcp.pop %v1387
    %v1446 = vmul.f32 %v1387, %v1445
    %v1447 = vsub.f32 1.0, %v1446
    %v1448 = vmul.f32 %v1445, %v1447
    %v1449 = vadd.f32 %v1445, %v1448
    %vm1450 = vweird.f32 %v1387
    %vm1451 = vweird.f32 %v1445
    %vm1452 = vmor %vm1450, %vm1451
    %v1453 = vsel %vm1452, %v1445, %v1449
    %v1454 = vand.u32 2147483647, %v1387
    %vm1455 = vcmp.eq.f32.partialorder %v1454, 8.507059e+37
    %v1456 = vand.u32 %v1387, 2147483648
    %v1457 = vor.u32 1.1754944e-38, %v1456
    %v1458 = vsel %vm1455, %v1457, %v1453
    %v1459 = vmul.f32 1.0, %v1458
    %v1460 = vrcp.pop %v1388
    %v1461 = vmul.f32 %v1388, %v1460
    %v1462 = vsub.f32 1.0, %v1461
    %v1463 = vmul.f32 %v1460, %v1462
    %v1464 = vadd.f32 %v1460, %v1463
    %vm1465 = vweird.f32 %v1388
    %vm1466 = vweird.f32 %v1460
    %vm1467 = vmor %vm1465, %vm1466
    %v1468 = vsel %vm1467, %v1460, %v1464
    %v1469 = vand.u32 2147483647, %v1388
    %vm1470 = vcmp.eq.f32.partialorder %v1469, 8.507059e+37
    %v1471 = vand.u32 %v1388, 2147483648
    %v1472 = vor.u32 1.1754944e-38, %v1471
    %v1473 = vsel %vm1470, %v1472, %v1468
    %v1474 = vmul.f32 1.0, %v1473
    %v1475 = vrcp.pop %v1389
    %v1476 = vmul.f32 %v1389, %v1475
    %v1477 = vsub.f32 1.0, %v1476
    %v1478 = vmul.f32 %v1475, %v1477
    %v1479 = vadd.f32 %v1475, %v1478
    %vm1480 = vweird.f32 %v1389
    %vm1481 = vweird.f32 %v1475
    %vm1482 = vmor %vm1480, %vm1481
    %v1483 = vsel %vm1482, %v1475, %v1479
    %v1484 = vand.u32 2147483647, %v1389
    %vm1485 = vcmp.eq.f32.partialorder %v1484, 8.507059e+37
    %v1486 = vand.u32 %v1389, 2147483648
    %v1487 = vor.u32 1.1754944e-38, %v1486
    %v1488 = vsel %vm1485, %v1487, %v1483
    %v1489 = vmul.f32 1.0, %v1488
    %v1490 = vrcp.pop %v1390
    %v1491 = vmul.f32 %v1390, %v1490
    %v1492 = vsub.f32 1.0, %v1491
    %v1493 = vmul.f32 %v1490, %v1492
    %v1494 = vadd.f32 %v1490, %v1493
    %vm1495 = vweird.f32 %v1390
    %vm1496 = vweird.f32 %v1490
    %vm1497 = vmor %vm1495, %vm1496
    %v1498 = vsel %vm1497, %v1490, %v1494
    %v1499 = vand.u32 2147483647, %v1390
    %vm1500 = vcmp.eq.f32.partialorder %v1499, 8.507059e+37
    %v1501 = vand.u32 %v1390, 2147483648
    %v1502 = vor.u32 1.1754944e-38, %v1501
    %v1503 = vsel %vm1500, %v1502, %v1498
    %v1504 = vmul.f32 1.0, %v1503
    %v1505 = vrcp.pop %v1391
    %v1506 = vmul.f32 %v1391, %v1505
    %v1507 = vsub.f32 1.0, %v1506
    %v1508 = vmul.f32 %v1505, %v1507
    %v1509 = vadd.f32 %v1505, %v1508
    %vm1510 = vweird.f32 %v1391
    %vm1511 = vweird.f32 %v1505
    %vm1512 = vmor %vm1510, %vm1511
    %v1513 = vsel %vm1512, %v1505, %v1509
    %v1514 = vand.u32 2147483647, %v1391
    %vm1515 = vcmp.eq.f32.partialorder %v1514, 8.507059e+37
    %v1516 = vand.u32 %v1391, 2147483648
    %v1517 = vor.u32 1.1754944e-38, %v1516
    %v1518 = vsel %vm1515, %v1517, %v1513
    %v1519 = vmul.f32 1.0, %v1518
    %v1520 = vrcp.pop %v1392
    %v1521 = vmul.f32 %v1392, %v1520
    %v1522 = vsub.f32 1.0, %v1521
    %v1523 = vmul.f32 %v1520, %v1522
    %v1524 = vadd.f32 %v1520, %v1523
    %vm1525 = vweird.f32 %v1392
    %vm1526 = vweird.f32 %v1520
    %vm1527 = vmor %vm1525, %vm1526
    %v1528 = vsel %vm1527, %v1520, %v1524
    %v1529 = vand.u32 2147483647, %v1392
    %vm1530 = vcmp.eq.f32.partialorder %v1529, 8.507059e+37
    %v1531 = vand.u32 %v1392, 2147483648
    %v1532 = vor.u32 1.1754944e-38, %v1531
    %v1533 = vsel %vm1530, %v1532, %v1528
    %v1534 = vmul.f32 1.0, %v1533
    %v1535 = vrcp.pop %v1393
    %v1536 = vmul.f32 %v1393, %v1535
    %v1537 = vsub.f32 1.0, %v1536
    %v1538 = vmul.f32 %v1535, %v1537
    %v1539 = vadd.f32 %v1535, %v1538
    %vm1540 = vweird.f32 %v1393
    %vm1541 = vweird.f32 %v1535
    %vm1542 = vmor %vm1540, %vm1541
    %v1543 = vsel %vm1542, %v1535, %v1539
    %v1544 = vand.u32 2147483647, %v1393
    %vm1545 = vcmp.eq.f32.partialorder %v1544, 8.507059e+37
    %v1546 = vand.u32 %v1393, 2147483648
    %v1547 = vor.u32 1.1754944e-38, %v1546
    %v1548 = vsel %vm1545, %v1547, %v1543
    %v1549 = vmul.f32 1.0, %v1548
    %v1550 = vrcp.pop %v1394
    %v1551 = vmul.f32 %v1394, %v1550
    %v1552 = vsub.f32 1.0, %v1551
    %v1553 = vmul.f32 %v1550, %v1552
    %v1554 = vadd.f32 %v1550, %v1553
    %vm1555 = vweird.f32 %v1394
    %vm1556 = vweird.f32 %v1550
    %vm1557 = vmor %vm1555, %vm1556
    %v1558 = vsel %vm1557, %v1550, %v1554
    %v1559 = vand.u32 2147483647, %v1394
    %vm1560 = vcmp.eq.f32.partialorder %v1559, 8.507059e+37
    %v1561 = vand.u32 %v1394, 2147483648
    %v1562 = vor.u32 1.1754944e-38, %v1561
    %v1563 = vsel %vm1560, %v1562, %v1558
    %v1564 = vmul.f32 1.0, %v1563
    %v1565 = vrcp.pop %v1395
    %v1566 = vmul.f32 %v1395, %v1565
    %v1567 = vsub.f32 1.0, %v1566
    %v1568 = vmul.f32 %v1565, %v1567
    %v1569 = vadd.f32 %v1565, %v1568
    %vm1570 = vweird.f32 %v1395
    %vm1571 = vweird.f32 %v1565
    %vm1572 = vmor %vm1570, %vm1571
    %v1573 = vsel %vm1572, %v1565, %v1569
    %v1574 = vand.u32 2147483647, %v1395
    %vm1575 = vcmp.eq.f32.partialorder %v1574, 8.507059e+37
    %v1576 = vand.u32 %v1395, 2147483648
    %v1577 = vor.u32 1.1754944e-38, %v1576
    %v1578 = vsel %vm1575, %v1577, %v1573
    %v1579 = vmul.f32 1.0, %v1578
    %v1580 = vrcp.pop %v1396
    %v1581 = vmul.f32 %v1396, %v1580
    %v1582 = vsub.f32 1.0, %v1581
    %v1583 = vmul.f32 %v1580, %v1582
    %v1584 = vadd.f32 %v1580, %v1583
    %vm1585 = vweird.f32 %v1396
    %vm1586 = vweird.f32 %v1580
    %vm1587 = vmor %vm1585, %vm1586
    %v1588 = vsel %vm1587, %v1580, %v1584
    %v1589 = vand.u32 2147483647, %v1396
    %vm1590 = vcmp.eq.f32.partialorder %v1589, 8.507059e+37
    %v1591 = vand.u32 %v1396, 2147483648
    %v1592 = vor.u32 1.1754944e-38, %v1591
    %v1593 = vsel %vm1590, %v1592, %v1588
    %v1594 = vmul.f32 1.0, %v1593
    %v1595 = vrcp.pop %v1397
    %v1596 = vmul.f32 %v1397, %v1595
    %v1597 = vsub.f32 1.0, %v1596
    %v1598 = vmul.f32 %v1595, %v1597
    %v1599 = vadd.f32 %v1595, %v1598
    %vm1600 = vweird.f32 %v1397
    %vm1601 = vweird.f32 %v1595
    %vm1602 = vmor %vm1600, %vm1601
    %v1603 = vsel %vm1602, %v1595, %v1599
    %v1604 = vand.u32 2147483647, %v1397
    %vm1605 = vcmp.eq.f32.partialorder %v1604, 8.507059e+37
    %v1606 = vand.u32 %v1397, 2147483648
    %v1607 = vor.u32 1.1754944e-38, %v1606
    %v1608 = vsel %vm1605, %v1607, %v1603
    %v1609 = vmul.f32 1.0, %v1608
    %v1610 = vrcp.pop %v1398
    %v1611 = vmul.f32 %v1398, %v1610
    %v1612 = vsub.f32 1.0, %v1611
    %v1613 = vmul.f32 %v1610, %v1612
    %v1614 = vadd.f32 %v1610, %v1613
    %vm1615 = vweird.f32 %v1398
    %vm1616 = vweird.f32 %v1610
    %vm1617 = vmor %vm1615, %vm1616
    %v1618 = vsel %vm1617, %v1610, %v1614
    %v1619 = vand.u32 2147483647, %v1398
    %vm1620 = vcmp.eq.f32.partialorder %v1619, 8.507059e+37
    %v1621 = vand.u32 %v1398, 2147483648
    %v1622 = vor.u32 1.1754944e-38, %v1621
    %v1623 = vsel %vm1620, %v1622, %v1618
    %v1624 = vmul.f32 1.0, %v1623
    %v1625 = vrcp.pop %v1399
    %v1626 = vmul.f32 %v1399, %v1625
    %v1627 = vsub.f32 1.0, %v1626
    %v1628 = vmul.f32 %v1625, %v1627
    %v1629 = vadd.f32 %v1625, %v1628
    %vm1630 = vweird.f32 %v1399
    %vm1631 = vweird.f32 %v1625
    %vm1632 = vmor %vm1630, %vm1631
    %v1633 = vsel %vm1632, %v1625, %v1629
    %v1634 = vand.u32 2147483647, %v1399
    %vm1635 = vcmp.eq.f32.partialorder %v1634, 8.507059e+37
    %v1636 = vand.u32 %v1399, 2147483648
    %v1637 = vor.u32 1.1754944e-38, %v1636
    %v1638 = vsel %vm1635, %v1637, %v1633
    %v1639 = vmul.f32 1.0, %v1638
    %v1640 = vtanh.pop %v1320
    %v1641 = vtanh.pop %v1321
    %v1642 = vtanh.pop %v1322
    %v1643 = vtanh.pop %v1323
    %v1644 = vtanh.pop %v1324
    %v1645 = vtanh.pop %v1325
    %v1646 = vtanh.pop %v1326
    %v1647 = vtanh.pop %v1327
    %v1648 = vtanh.pop %v1328
    %v1649 = vtanh.pop %v1329
    %v1650 = vtanh.pop %v1330
    %v1651 = vtanh.pop %v1331
    %v1652 = vtanh.pop %v1332
    %v1653 = vtanh.pop %v1333
    %v1654 = vtanh.pop %v1334
    %v1655 = vtanh.pop %v1335
    %v1656 = vmul.f32 %v1414, %v1010
    %v1657 = vmul.f32 %v1429, %v1011
    %v1658 = vmul.f32 %v1444, %v1012
    %v1659 = vmul.f32 %v1459, %v1013
    %v1660 = vmul.f32 %v1474, %v1014
    %v1661 = vmul.f32 %v1489, %v1015
    %v1662 = vmul.f32 %v1504, %v1016
    %v1663 = vmul.f32 %v1519, %v1017
    %v1664 = vmul.f32 %v1534, %v1018
    %v1665 = vmul.f32 %v1549, %v1019
    %v1666 = vmul.f32 %v1564, %v1020
    %v1667 = vmul.f32 %v1579, %v1021
    %v1668 = vmul.f32 %v1594, %v1022
    %v1669 = vmul.f32 %v1609, %v1023
    %v1670 = vmul.f32 %v1624, %v1024
    %v1671 = vmul.f32 %v1639, %v1025
    %1688 = vrot.lane.b32.xlu0 %v1640, 64
    %v1689 = vpop.permute.xlu0 %1688
    %1690 = vrot.lane.b32.xlu0 %v1641, 64
    %v1691 = vpop.permute.xlu0 %1690
    %1692 = vrot.lane.b32.xlu0 %v1642, 64
    %v1693 = vpop.permute.xlu0 %1692
    %1694 = vrot.lane.b32.xlu0 %v1643, 64
    %v1695 = vpop.permute.xlu0 %1694
    %1696 = vrot.lane.b32.xlu0 %v1644, 64
    %v1697 = vpop.permute.xlu0 %1696
    %1698 = vrot.lane.b32.xlu0 %v1645, 64
    %v1699 = vpop.permute.xlu0 %1698
    %1700 = vrot.lane.b32.xlu0 %v1646, 64
    %v1701 = vpop.permute.xlu0 %1700
    %1702 = vrot.lane.b32.xlu0 %v1647, 64
    %v1703 = vpop.permute.xlu0 %1702
    %1704 = vrot.lane.b32.xlu0 %v1648, 64
    %v1705 = vpop.permute.xlu0 %1704
    %1706 = vrot.lane.b32.xlu0 %v1649, 64
    %v1707 = vpop.permute.xlu0 %1706
    %1708 = vrot.lane.b32.xlu0 %v1650, 64
    %v1709 = vpop.permute.xlu0 %1708
    %1710 = vrot.lane.b32.xlu0 %v1651, 64
    %v1711 = vpop.permute.xlu0 %1710
    %1712 = vrot.lane.b32.xlu0 %v1652, 64
    %v1713 = vpop.permute.xlu0 %1712
    %1714 = vrot.lane.b32.xlu0 %v1653, 64
    %v1715 = vpop.permute.xlu0 %1714
    %1716 = vrot.lane.b32.xlu0 %v1654, 64
    %v1717 = vpop.permute.xlu0 %1716
    %1718 = vrot.lane.b32.xlu0 %v1655, 64
    %v1719 = vpop.permute.xlu0 %1718
    %v1736 = vmul.f32 %v1414, %v1689
    %v1737 = vmul.f32 %v1429, %v1691
    %v1738 = vmul.f32 %v1444, %v1693
    %v1739 = vmul.f32 %v1459, %v1695
    %v1740 = vmul.f32 %v1474, %v1697
    %v1741 = vmul.f32 %v1489, %v1699
    %v1742 = vmul.f32 %v1504, %v1701
    %v1743 = vmul.f32 %v1519, %v1703
    %v1744 = vmul.f32 %v1534, %v1705
    %v1745 = vmul.f32 %v1549, %v1707
    %v1746 = vmul.f32 %v1564, %v1709
    %v1747 = vmul.f32 %v1579, %v1711
    %v1748 = vmul.f32 %v1594, %v1713
    %v1749 = vmul.f32 %v1609, %v1715
    %v1750 = vmul.f32 %v1624, %v1717
    %v1751 = vmul.f32 %v1639, %v1719
    %1768 = vrot.lane.b32.xlu0 %v1736, 32
    %v1769 = vpop.permute.xlu0 %1768
    %1770 = vrot.lane.b32.xlu0 %v1737, 32
    %v1771 = vpop.permute.xlu0 %1770
    %1772 = vrot.lane.b32.xlu0 %v1738, 32
    %v1773 = vpop.permute.xlu0 %1772
    %1774 = vrot.lane.b32.xlu0 %v1739, 32
    %v1775 = vpop.permute.xlu0 %1774
    %1776 = vrot.lane.b32.xlu0 %v1740, 32
    %v1777 = vpop.permute.xlu0 %1776
    %1778 = vrot.lane.b32.xlu0 %v1741, 32
    %v1779 = vpop.permute.xlu0 %1778
    %1780 = vrot.lane.b32.xlu0 %v1742, 32
    %v1781 = vpop.permute.xlu0 %1780
    %1782 = vrot.lane.b32.xlu0 %v1743, 32
    %v1783 = vpop.permute.xlu0 %1782
    %1784 = vrot.lane.b32.xlu0 %v1744, 32
    %v1785 = vpop.permute.xlu0 %1784
    %1786 = vrot.lane.b32.xlu0 %v1745, 32
    %v1787 = vpop.permute.xlu0 %1786
    %1788 = vrot.lane.b32.xlu0 %v1746, 32
    %v1789 = vpop.permute.xlu0 %1788
    %1790 = vrot.lane.b32.xlu0 %v1747, 32
    %v1791 = vpop.permute.xlu0 %1790
    %1792 = vrot.lane.b32.xlu0 %v1748, 32
    %v1793 = vpop.permute.xlu0 %1792
    %1794 = vrot.lane.b32.xlu0 %v1749, 32
    %v1795 = vpop.permute.xlu0 %1794
    %1796 = vrot.lane.b32.xlu0 %v1750, 32
    %v1797 = vpop.permute.xlu0 %1796
    %1798 = vrot.lane.b32.xlu0 %v1751, 32
    %v1799 = vpop.permute.xlu0 %1798
    %v1816 = vadd.f32 %v1656, %v1769
    %v1817 = vadd.f32 %v1657, %v1771
    %v1818 = vadd.f32 %v1658, %v1773
    %v1819 = vadd.f32 %v1659, %v1775
    %v1820 = vadd.f32 %v1660, %v1777
    %v1821 = vadd.f32 %v1661, %v1779
    %v1822 = vadd.f32 %v1662, %v1781
    %v1823 = vadd.f32 %v1663, %v1783
    %v1824 = vadd.f32 %v1664, %v1785
    %v1825 = vadd.f32 %v1665, %v1787
    %v1826 = vadd.f32 %v1666, %v1789
    %v1827 = vadd.f32 %v1667, %v1791
    %v1828 = vadd.f32 %v1668, %v1793
    %v1829 = vadd.f32 %v1669, %v1795
    %v1830 = vadd.f32 %v1670, %v1797
    %v1831 = vadd.f32 %v1671, %v1799
    %v1832 = vtanh.pop %v1816
    %v1833 = vtanh.pop %v1817
    %v1834 = vtanh.pop %v1818
    %v1835 = vtanh.pop %v1819
    %v1836 = vtanh.pop %v1820
    %v1837 = vtanh.pop %v1821
    %v1838 = vtanh.pop %v1822
    %v1839 = vtanh.pop %v1823
    %v1840 = vtanh.pop %v1824
    %v1841 = vtanh.pop %v1825
    %v1842 = vtanh.pop %v1826
    %v1843 = vtanh.pop %v1827
    %v1844 = vtanh.pop %v1828
    %v1845 = vtanh.pop %v1829
    %v1846 = vtanh.pop %v1830
    %v1847 = vtanh.pop %v1831
    %1864 = vrot.lane.b32.xlu0 %v1832, 64
    %v1865 = vpop.permute.xlu0 %1864
    %1866 = vrot.lane.b32.xlu0 %v1833, 64
    %v1867 = vpop.permute.xlu0 %1866
    %1868 = vrot.lane.b32.xlu0 %v1834, 64
    %v1869 = vpop.permute.xlu0 %1868
    %1870 = vrot.lane.b32.xlu0 %v1835, 64
    %v1871 = vpop.permute.xlu0 %1870
    %1872 = vrot.lane.b32.xlu0 %v1836, 64
    %v1873 = vpop.permute.xlu0 %1872
    %1874 = vrot.lane.b32.xlu0 %v1837, 64
    %v1875 = vpop.permute.xlu0 %1874
    %1876 = vrot.lane.b32.xlu0 %v1838, 64
    %v1877 = vpop.permute.xlu0 %1876
    %1878 = vrot.lane.b32.xlu0 %v1839, 64
    %v1879 = vpop.permute.xlu0 %1878
    %1880 = vrot.lane.b32.xlu0 %v1840, 64
    %v1881 = vpop.permute.xlu0 %1880
    %1882 = vrot.lane.b32.xlu0 %v1841, 64
    %v1883 = vpop.permute.xlu0 %1882
    %1884 = vrot.lane.b32.xlu0 %v1842, 64
    %v1885 = vpop.permute.xlu0 %1884
    %1886 = vrot.lane.b32.xlu0 %v1843, 64
    %v1887 = vpop.permute.xlu0 %1886
    %1888 = vrot.lane.b32.xlu0 %v1844, 64
    %v1889 = vpop.permute.xlu0 %1888
    %1890 = vrot.lane.b32.xlu0 %v1845, 64
    %v1891 = vpop.permute.xlu0 %1890
    %1892 = vrot.lane.b32.xlu0 %v1846, 64
    %v1893 = vpop.permute.xlu0 %1892
    %1894 = vrot.lane.b32.xlu0 %v1847, 64
    %v1895 = vpop.permute.xlu0 %1894
    %v1912 = vmul.f32 %v1414, %v1865
    %v1913 = vmul.f32 %v1429, %v1867
    %v1914 = vmul.f32 %v1444, %v1869
    %v1915 = vmul.f32 %v1459, %v1871
    %v1916 = vmul.f32 %v1474, %v1873
    %v1917 = vmul.f32 %v1489, %v1875
    %v1918 = vmul.f32 %v1504, %v1877
    %v1919 = vmul.f32 %v1519, %v1879
    %v1920 = vmul.f32 %v1534, %v1881
    %v1921 = vmul.f32 %v1549, %v1883
    %v1922 = vmul.f32 %v1564, %v1885
    %v1923 = vmul.f32 %v1579, %v1887
    %v1924 = vmul.f32 %v1594, %v1889
    %v1925 = vmul.f32 %v1609, %v1891
    %v1926 = vmul.f32 %v1624, %v1893
    %v1927 = vmul.f32 %v1639, %v1895
    %v1928 = vld [vmem:[#allocation2 + $0x2] sm:$0x1]
    %v1929 = vld [vmem:[#allocation2 + $0xa] sm:$0x1]
    %v1930 = vld [vmem:[#allocation2 + $0x12] sm:$0x1]
    %v1931 = vld [vmem:[#allocation2 + $0x1a] sm:$0x1]
    %v1932 = vld [vmem:[#allocation2 + $0x22] sm:$0x1]
    %v1933 = vld [vmem:[#allocation2 + $0x2a] sm:$0x1]
    %v1934 = vld [vmem:[#allocation2 + $0x32] sm:$0x1]
    %v1935 = vld [vmem:[#allocation2 + $0x3a] sm:$0x1]
    %v1936 = vld [vmem:[#allocation2 + $0x42] sm:$0x1]
    %v1937 = vld [vmem:[#allocation2 + $0x4a] sm:$0x1]
    %v1938 = vld [vmem:[#allocation2 + $0x52] sm:$0x1]
    %v1939 = vld [vmem:[#allocation2 + $0x5a] sm:$0x1]
    %v1940 = vld [vmem:[#allocation2 + $0x62] sm:$0x1]
    %v1941 = vld [vmem:[#allocation2 + $0x6a] sm:$0x1]
    %v1942 = vld [vmem:[#allocation2 + $0x72] sm:$0x1]
    %v1943 = vld [vmem:[#allocation2 + $0x7a] sm:$0x1]
    %1944 = vset.pattern.permute.xlu0 2
    %1945 = vperm.xlu0 %1944, %v360
    %v1946 = vpop.permute.xlu0 %1945
    %1947 = vset.pattern.permute.xlu0 2
    %1948 = vperm.xlu0 %1947, %v361
    %v1949 = vpop.permute.xlu0 %1948
    %v1950 = vrot.slane %v1946, 1
    %v1951 = vrot.slane %v1946, 2
    %v1952 = vrot.slane %v1946, 3
    %v1953 = vrot.slane %v1946, 4
    %v1954 = vrot.slane %v1946, 5
    %v1955 = vrot.slane %v1946, 6
    %v1956 = vrot.slane %v1946, 7
    %v1957 = vrot.slane %v1949, 1
    %v1958 = vrot.slane %v1949, 2
    %v1959 = vrot.slane %v1949, 3
    %v1960 = vrot.slane %v1949, 4
    %v1961 = vrot.slane %v1949, 5
    %v1962 = vrot.slane %v1949, 6
    %v1963 = vrot.slane %v1949, 7
    %v1980 = vmul.f32 %v1928, %v1946
    %v1981 = vmul.f32 %v1929, %v1950
    %v1982 = vmul.f32 %v1930, %v1951
    %v1983 = vmul.f32 %v1931, %v1952
    %v1984 = vmul.f32 %v1932, %v1953
    %v1985 = vmul.f32 %v1933, %v1954
    %v1986 = vmul.f32 %v1934, %v1955
    %v1987 = vmul.f32 %v1935, %v1956
    %v1988 = vmul.f32 %v1936, %v1949
    %v1989 = vmul.f32 %v1937, %v1957
    %v1990 = vmul.f32 %v1938, %v1958
    %v1991 = vmul.f32 %v1939, %v1959
    %v1992 = vmul.f32 %v1940, %v1960
    %v1993 = vmul.f32 %v1941, %v1961
    %v1994 = vmul.f32 %v1942, %v1962
    %v1995 = vmul.f32 %v1943, %v1963
    %v2012 = vrot.slane %v1913, 7
    %v2013 = vsel %vm1207, %v2012, %v1912
    %v2014 = vrot.slane %v1914, 6
    %v2015 = vsel %vm1210, %v2014, %v2013
    %v2016 = vrot.slane %v1915, 5
    %v2017 = vsel %vm1213, %v2016, %v2015
    %v2018 = vrot.slane %v1916, 4
    %v2019 = vsel %vm1216, %v2018, %v2017
    %v2020 = vrot.slane %v1917, 3
    %v2021 = vsel %vm1219, %v2020, %v2019
    %v2022 = vrot.slane %v1918, 2
    %v2023 = vsel %vm1222, %v2022, %v2021
    %v2024 = vrot.slane %v1919, 1
    %v2025 = vsel %vm1225, %v2024, %v2023
    %v2026 = vrot.slane %v1921, 7
    %v2027 = vsel %vm1207, %v2026, %v1920
    %v2028 = vrot.slane %v1922, 6
    %v2029 = vsel %vm1210, %v2028, %v2027
    %v2030 = vrot.slane %v1923, 5
    %v2031 = vsel %vm1213, %v2030, %v2029
    %v2032 = vrot.slane %v1924, 4
    %v2033 = vsel %vm1216, %v2032, %v2031
    %v2034 = vrot.slane %v1925, 3
    %v2035 = vsel %vm1219, %v2034, %v2033
    %v2036 = vrot.slane %v1926, 2
    %v2037 = vsel %vm1222, %v2036, %v2035
    %v2038 = vrot.slane %v1927, 1
    %v2039 = vsel %vm1225, %v2038, %v2037
    %2040 = vrot.lane.b32.xlu0 %v2025, 32
    %v2041 = vpop.permute.xlu0 %2040
    %2042 = vrot.lane.b32.xlu0 %v2039, 32
    %v2043 = vpop.permute.xlu0 %2042
    %v2044 = vsel %vm230, %v2041, 0
    %v2046 = vsel %vm230, %v2043, 0
    %2048 = vmatpush.msra.mxu0 0.0
    %2049 = vmatpush.msra.mxu0 0.0
    %2050 = vmatpush.msra.mxu0 0.0
    %2051 = vmatpush.msra.mxu0 0.0
    %2052 = vmatpush.msra.mxu0 0.0
    %2053 = vmatpush.msra.mxu0 0.0
    %2054 = vmatpush.msra.mxu0 0.0
    %2055 = vmatpush.msra.mxu0 0.0
    %2056 = vmatpush.msra.mxu0 0.0
    %2057 = vmatpush.msra.mxu0 0.0
    %2058 = vmatpush.msra.mxu0 0.0
    %2059 = vmatpush.msra.mxu0 0.0
    %2060 = vmatpush.msra.mxu0 %v365
    %2061 = vmatpush.msra.mxu0 %v364
    %2062 = vmatpush.msra.mxu0 %v363
    %2063 = vmatpush.msra.mxu0 %v362
    %2064 = vmatmul.f32.gmra.mxu0 %v2044
    %v2065 = vpop.f32.mrf.mxu0
    %v2066 = vadd.f32 0.0, %v2065
    %2067 = vmatmul.f32.gmra.mxu0 %v2046
    %v2068 = vpop.f32.mrf.mxu0
    %v2069 = vadd.f32 0.0, %v2068
    %2070 = vdwg.mxu0
    %v2073 = vrot.slane %v2066, 1
    %v2074 = vrot.slane %v2066, 2
    %v2075 = vrot.slane %v2066, 3
    %v2076 = vrot.slane %v2066, 4
    %v2077 = vrot.slane %v2066, 5
    %v2078 = vrot.slane %v2066, 6
    %v2079 = vrot.slane %v2066, 7
    %v2080 = vrot.slane %v2069, 1
    %v2081 = vrot.slane %v2069, 2
    %v2082 = vrot.slane %v2069, 3
    %v2083 = vrot.slane %v2069, 4
    %v2084 = vrot.slane %v2069, 5
    %v2085 = vrot.slane %v2069, 6
    %v2086 = vrot.slane %v2069, 7
    %v2103 = vadd.f32 %v1980, %v2066
    %v2104 = vadd.f32 %v1981, %v2073
    %v2105 = vadd.f32 %v1982, %v2074
    %v2106 = vadd.f32 %v1983, %v2075
    %v2107 = vadd.f32 %v1984, %v2076
    %v2108 = vadd.f32 %v1985, %v2077
    %v2109 = vadd.f32 %v1986, %v2078
    %v2110 = vadd.f32 %v1987, %v2079
    %v2111 = vadd.f32 %v1988, %v2069
    %v2112 = vadd.f32 %v1989, %v2080
    %v2113 = vadd.f32 %v1990, %v2081
    %v2114 = vadd.f32 %v1991, %v2082
    %v2115 = vadd.f32 %v1992, %v2083
    %v2116 = vadd.f32 %v1993, %v2084
    %v2117 = vadd.f32 %v1994, %v2085
    %v2118 = vadd.f32 %v1995, %v2086
    %v2119 = vadd.f32 %v2103, %v512
    %v2120 = vadd.f32 %v2104, %v512
    %v2121 = vadd.f32 %v2105, %v512
    %v2122 = vadd.f32 %v2106, %v512
    %v2123 = vadd.f32 %v2107, %v512
    %v2124 = vadd.f32 %v2108, %v512
    %v2125 = vadd.f32 %v2109, %v512
    %v2126 = vadd.f32 %v2110, %v512
    %v2127 = vadd.f32 %v2111, %v512
    %v2128 = vadd.f32 %v2112, %v512
    %v2129 = vadd.f32 %v2113, %v512
    %v2130 = vadd.f32 %v2114, %v512
    %v2131 = vadd.f32 %v2115, %v512
    %v2132 = vadd.f32 %v2116, %v512
    %v2133 = vadd.f32 %v2117, %v512
    %v2134 = vadd.f32 %v2118, %v512
    %v2135 = vxor.u32 %v2119, 2147483648
    %v2136 = vxor.u32 %v2120, 2147483648
    %v2137 = vxor.u32 %v2121, 2147483648
    %v2138 = vxor.u32 %v2122, 2147483648
    %v2139 = vxor.u32 %v2123, 2147483648
    %v2140 = vxor.u32 %v2124, 2147483648
    %v2141 = vxor.u32 %v2125, 2147483648
    %v2142 = vxor.u32 %v2126, 2147483648
    %v2143 = vxor.u32 %v2127, 2147483648
    %v2144 = vxor.u32 %v2128, 2147483648
    %v2145 = vxor.u32 %v2129, 2147483648
    %v2146 = vxor.u32 %v2130, 2147483648
    %v2147 = vxor.u32 %v2131, 2147483648
    %v2148 = vxor.u32 %v2132, 2147483648
    %v2149 = vxor.u32 %v2133, 2147483648
    %v2150 = vxor.u32 %v2134, 2147483648
    %v2151 = vmul.f32 %v2135, 1.442695
    %v2152 = vpow.pop %v2151
    %v2153 = vmul.f32 %v2136, 1.442695
    %v2154 = vpow.pop %v2153
    %v2155 = vmul.f32 %v2137, 1.442695
    %v2156 = vpow.pop %v2155
    %v2157 = vmul.f32 %v2138, 1.442695
    %v2158 = vpow.pop %v2157
    %v2159 = vmul.f32 %v2139, 1.442695
    %v2160 = vpow.pop %v2159
    %v2161 = vmul.f32 %v2140, 1.442695
    %v2162 = vpow.pop %v2161
    %v2163 = vmul.f32 %v2141, 1.442695
    %v2164 = vpow.pop %v2163
    %v2165 = vmul.f32 %v2142, 1.442695
    %v2166 = vpow.pop %v2165
    %v2167 = vmul.f32 %v2143, 1.442695
    %v2168 = vpow.pop %v2167
    %v2169 = vmul.f32 %v2144, 1.442695
    %v2170 = vpow.pop %v2169
    %v2171 = vmul.f32 %v2145, 1.442695
    %v2172 = vpow.pop %v2171
    %v2173 = vmul.f32 %v2146, 1.442695
    %v2174 = vpow.pop %v2173
    %v2175 = vmul.f32 %v2147, 1.442695
    %v2176 = vpow.pop %v2175
    %v2177 = vmul.f32 %v2148, 1.442695
    %v2178 = vpow.pop %v2177
    %v2179 = vmul.f32 %v2149, 1.442695
    %v2180 = vpow.pop %v2179
    %v2181 = vmul.f32 %v2150, 1.442695
    %v2182 = vpow.pop %v2181
    %v2183 = vadd.f32 %v2152, 1.0
    %v2184 = vadd.f32 %v2154, 1.0
    %v2185 = vadd.f32 %v2156, 1.0
    %v2186 = vadd.f32 %v2158, 1.0
    %v2187 = vadd.f32 %v2160, 1.0
    %v2188 = vadd.f32 %v2162, 1.0
    %v2189 = vadd.f32 %v2164, 1.0
    %v2190 = vadd.f32 %v2166, 1.0
    %v2191 = vadd.f32 %v2168, 1.0
    %v2192 = vadd.f32 %v2170, 1.0
    %v2193 = vadd.f32 %v2172, 1.0
    %v2194 = vadd.f32 %v2174, 1.0
    %v2195 = vadd.f32 %v2176, 1.0
    %v2196 = vadd.f32 %v2178, 1.0
    %v2197 = vadd.f32 %v2180, 1.0
    %v2198 = vadd.f32 %v2182, 1.0
    %v2199 = vrcp.pop %v2183
    %v2200 = vmul.f32 %v2183, %v2199
    %v2201 = vsub.f32 1.0, %v2200
    %v2202 = vmul.f32 %v2199, %v2201
    %v2203 = vadd.f32 %v2199, %v2202
    %vm2204 = vweird.f32 %v2183
    %vm2205 = vweird.f32 %v2199
    %vm2206 = vmor %vm2204, %vm2205
    %v2207 = vsel %vm2206, %v2199, %v2203
    %v2208 = vand.u32 2147483647, %v2183
    %vm2209 = vcmp.eq.f32.partialorder %v2208, 8.507059e+37
    %v2210 = vand.u32 %v2183, 2147483648
    %v2211 = vor.u32 1.1754944e-38, %v2210
    %v2212 = vsel %vm2209, %v2211, %v2207
    %v2213 = vmul.f32 1.0, %v2212
    %v2214 = vrcp.pop %v2184
    %v2215 = vmul.f32 %v2184, %v2214
    %v2216 = vsub.f32 1.0, %v2215
    %v2217 = vmul.f32 %v2214, %v2216
    %v2218 = vadd.f32 %v2214, %v2217
    %vm2219 = vweird.f32 %v2184
    %vm2220 = vweird.f32 %v2214
    %vm2221 = vmor %vm2219, %vm2220
    %v2222 = vsel %vm2221, %v2214, %v2218
    %v2223 = vand.u32 2147483647, %v2184
    %vm2224 = vcmp.eq.f32.partialorder %v2223, 8.507059e+37
    %v2225 = vand.u32 %v2184, 2147483648
    %v2226 = vor.u32 1.1754944e-38, %v2225
    %v2227 = vsel %vm2224, %v2226, %v2222
    %v2228 = vmul.f32 1.0, %v2227
    %v2229 = vrcp.pop %v2185
    %v2230 = vmul.f32 %v2185, %v2229
    %v2231 = vsub.f32 1.0, %v2230
    %v2232 = vmul.f32 %v2229, %v2231
    %v2233 = vadd.f32 %v2229, %v2232
    %vm2234 = vweird.f32 %v2185
    %vm2235 = vweird.f32 %v2229
    %vm2236 = vmor %vm2234, %vm2235
    %v2237 = vsel %vm2236, %v2229, %v2233
    %v2238 = vand.u32 2147483647, %v2185
    %vm2239 = vcmp.eq.f32.partialorder %v2238, 8.507059e+37
    %v2240 = vand.u32 %v2185, 2147483648
    %v2241 = vor.u32 1.1754944e-38, %v2240
    %v2242 = vsel %vm2239, %v2241, %v2237
    %v2243 = vmul.f32 1.0, %v2242
    %v2244 = vrcp.pop %v2186
    %v2245 = vmul.f32 %v2186, %v2244
    %v2246 = vsub.f32 1.0, %v2245
    %v2247 = vmul.f32 %v2244, %v2246
    %v2248 = vadd.f32 %v2244, %v2247
    %vm2249 = vweird.f32 %v2186
    %vm2250 = vweird.f32 %v2244
    %vm2251 = vmor %vm2249, %vm2250
    %v2252 = vsel %vm2251, %v2244, %v2248
    %v2253 = vand.u32 2147483647, %v2186
    %vm2254 = vcmp.eq.f32.partialorder %v2253, 8.507059e+37
    %v2255 = vand.u32 %v2186, 2147483648
    %v2256 = vor.u32 1.1754944e-38, %v2255
    %v2257 = vsel %vm2254, %v2256, %v2252
    %v2258 = vmul.f32 1.0, %v2257
    %v2259 = vrcp.pop %v2187
    %v2260 = vmul.f32 %v2187, %v2259
    %v2261 = vsub.f32 1.0, %v2260
    %v2262 = vmul.f32 %v2259, %v2261
    %v2263 = vadd.f32 %v2259, %v2262
    %vm2264 = vweird.f32 %v2187
    %vm2265 = vweird.f32 %v2259
    %vm2266 = vmor %vm2264, %vm2265
    %v2267 = vsel %vm2266, %v2259, %v2263
    %v2268 = vand.u32 2147483647, %v2187
    %vm2269 = vcmp.eq.f32.partialorder %v2268, 8.507059e+37
    %v2270 = vand.u32 %v2187, 2147483648
    %v2271 = vor.u32 1.1754944e-38, %v2270
    %v2272 = vsel %vm2269, %v2271, %v2267
    %v2273 = vmul.f32 1.0, %v2272
    %v2274 = vrcp.pop %v2188
    %v2275 = vmul.f32 %v2188, %v2274
    %v2276 = vsub.f32 1.0, %v2275
    %v2277 = vmul.f32 %v2274, %v2276
    %v2278 = vadd.f32 %v2274, %v2277
    %vm2279 = vweird.f32 %v2188
    %vm2280 = vweird.f32 %v2274
    %vm2281 = vmor %vm2279, %vm2280
    %v2282 = vsel %vm2281, %v2274, %v2278
    %v2283 = vand.u32 2147483647, %v2188
    %vm2284 = vcmp.eq.f32.partialorder %v2283, 8.507059e+37
    %v2285 = vand.u32 %v2188, 2147483648
    %v2286 = vor.u32 1.1754944e-38, %v2285
    %v2287 = vsel %vm2284, %v2286, %v2282
    %v2288 = vmul.f32 1.0, %v2287
    %v2289 = vrcp.pop %v2189
    %v2290 = vmul.f32 %v2189, %v2289
    %v2291 = vsub.f32 1.0, %v2290
    %v2292 = vmul.f32 %v2289, %v2291
    %v2293 = vadd.f32 %v2289, %v2292
    %vm2294 = vweird.f32 %v2189
    %vm2295 = vweird.f32 %v2289
    %vm2296 = vmor %vm2294, %vm2295
    %v2297 = vsel %vm2296, %v2289, %v2293
    %v2298 = vand.u32 2147483647, %v2189
    %vm2299 = vcmp.eq.f32.partialorder %v2298, 8.507059e+37
    %v2300 = vand.u32 %v2189, 2147483648
    %v2301 = vor.u32 1.1754944e-38, %v2300
    %v2302 = vsel %vm2299, %v2301, %v2297
    %v2303 = vmul.f32 1.0, %v2302
    %v2304 = vrcp.pop %v2190
    %v2305 = vmul.f32 %v2190, %v2304
    %v2306 = vsub.f32 1.0, %v2305
    %v2307 = vmul.f32 %v2304, %v2306
    %v2308 = vadd.f32 %v2304, %v2307
    %vm2309 = vweird.f32 %v2190
    %vm2310 = vweird.f32 %v2304
    %vm2311 = vmor %vm2309, %vm2310
    %v2312 = vsel %vm2311, %v2304, %v2308
    %v2313 = vand.u32 2147483647, %v2190
    %vm2314 = vcmp.eq.f32.partialorder %v2313, 8.507059e+37
    %v2315 = vand.u32 %v2190, 2147483648
    %v2316 = vor.u32 1.1754944e-38, %v2315
    %v2317 = vsel %vm2314, %v2316, %v2312
    %v2318 = vmul.f32 1.0, %v2317
    %v2319 = vrcp.pop %v2191
    %v2320 = vmul.f32 %v2191, %v2319
    %v2321 = vsub.f32 1.0, %v2320
    %v2322 = vmul.f32 %v2319, %v2321
    %v2323 = vadd.f32 %v2319, %v2322
    %vm2324 = vweird.f32 %v2191
    %vm2325 = vweird.f32 %v2319
    %vm2326 = vmor %vm2324, %vm2325
    %v2327 = vsel %vm2326, %v2319, %v2323
    %v2328 = vand.u32 2147483647, %v2191
    %vm2329 = vcmp.eq.f32.partialorder %v2328, 8.507059e+37
    %v2330 = vand.u32 %v2191, 2147483648
    %v2331 = vor.u32 1.1754944e-38, %v2330
    %v2332 = vsel %vm2329, %v2331, %v2327
    %v2333 = vmul.f32 1.0, %v2332
    %v2334 = vrcp.pop %v2192
    %v2335 = vmul.f32 %v2192, %v2334
    %v2336 = vsub.f32 1.0, %v2335
    %v2337 = vmul.f32 %v2334, %v2336
    %v2338 = vadd.f32 %v2334, %v2337
    %vm2339 = vweird.f32 %v2192
    %vm2340 = vweird.f32 %v2334
    %vm2341 = vmor %vm2339, %vm2340
    %v2342 = vsel %vm2341, %v2334, %v2338
    %v2343 = vand.u32 2147483647, %v2192
    %vm2344 = vcmp.eq.f32.partialorder %v2343, 8.507059e+37
    %v2345 = vand.u32 %v2192, 2147483648
    %v2346 = vor.u32 1.1754944e-38, %v2345
    %v2347 = vsel %vm2344, %v2346, %v2342
    %v2348 = vmul.f32 1.0, %v2347
    %v2349 = vrcp.pop %v2193
    %v2350 = vmul.f32 %v2193, %v2349
    %v2351 = vsub.f32 1.0, %v2350
    %v2352 = vmul.f32 %v2349, %v2351
    %v2353 = vadd.f32 %v2349, %v2352
    %vm2354 = vweird.f32 %v2193
    %vm2355 = vweird.f32 %v2349
    %vm2356 = vmor %vm2354, %vm2355
    %v2357 = vsel %vm2356, %v2349, %v2353
    %v2358 = vand.u32 2147483647, %v2193
    %vm2359 = vcmp.eq.f32.partialorder %v2358, 8.507059e+37
    %v2360 = vand.u32 %v2193, 2147483648
    %v2361 = vor.u32 1.1754944e-38, %v2360
    %v2362 = vsel %vm2359, %v2361, %v2357
    %v2363 = vmul.f32 1.0, %v2362
    %v2364 = vrcp.pop %v2194
    %v2365 = vmul.f32 %v2194, %v2364
    %v2366 = vsub.f32 1.0, %v2365
    %v2367 = vmul.f32 %v2364, %v2366
    %v2368 = vadd.f32 %v2364, %v2367
    %vm2369 = vweird.f32 %v2194
    %vm2370 = vweird.f32 %v2364
    %vm2371 = vmor %vm2369, %vm2370
    %v2372 = vsel %vm2371, %v2364, %v2368
    %v2373 = vand.u32 2147483647, %v2194
    %vm2374 = vcmp.eq.f32.partialorder %v2373, 8.507059e+37
    %v2375 = vand.u32 %v2194, 2147483648
    %v2376 = vor.u32 1.1754944e-38, %v2375
    %v2377 = vsel %vm2374, %v2376, %v2372
    %v2378 = vmul.f32 1.0, %v2377
    %v2379 = vrcp.pop %v2195
    %v2380 = vmul.f32 %v2195, %v2379
    %v2381 = vsub.f32 1.0, %v2380
    %v2382 = vmul.f32 %v2379, %v2381
    %v2383 = vadd.f32 %v2379, %v2382
    %vm2384 = vweird.f32 %v2195
    %vm2385 = vweird.f32 %v2379
    %vm2386 = vmor %vm2384, %vm2385
    %v2387 = vsel %vm2386, %v2379, %v2383
    %v2388 = vand.u32 2147483647, %v2195
    %vm2389 = vcmp.eq.f32.partialorder %v2388, 8.507059e+37
    %v2390 = vand.u32 %v2195, 2147483648
    %v2391 = vor.u32 1.1754944e-38, %v2390
    %v2392 = vsel %vm2389, %v2391, %v2387
    %v2393 = vmul.f32 1.0, %v2392
    %v2394 = vrcp.pop %v2196
    %v2395 = vmul.f32 %v2196, %v2394
    %v2396 = vsub.f32 1.0, %v2395
    %v2397 = vmul.f32 %v2394, %v2396
    %v2398 = vadd.f32 %v2394, %v2397
    %vm2399 = vweird.f32 %v2196
    %vm2400 = vweird.f32 %v2394
    %vm2401 = vmor %vm2399, %vm2400
    %v2402 = vsel %vm2401, %v2394, %v2398
    %v2403 = vand.u32 2147483647, %v2196
    %vm2404 = vcmp.eq.f32.partialorder %v2403, 8.507059e+37
    %v2405 = vand.u32 %v2196, 2147483648
    %v2406 = vor.u32 1.1754944e-38, %v2405
    %v2407 = vsel %vm2404, %v2406, %v2402
    %v2408 = vmul.f32 1.0, %v2407
    %v2409 = vrcp.pop %v2197
    %v2410 = vmul.f32 %v2197, %v2409
    %v2411 = vsub.f32 1.0, %v2410
    %v2412 = vmul.f32 %v2409, %v2411
    %v2413 = vadd.f32 %v2409, %v2412
    %vm2414 = vweird.f32 %v2197
    %vm2415 = vweird.f32 %v2409
    %vm2416 = vmor %vm2414, %vm2415
    %v2417 = vsel %vm2416, %v2409, %v2413
    %v2418 = vand.u32 2147483647, %v2197
    %vm2419 = vcmp.eq.f32.partialorder %v2418, 8.507059e+37
    %v2420 = vand.u32 %v2197, 2147483648
    %v2421 = vor.u32 1.1754944e-38, %v2420
    %v2422 = vsel %vm2419, %v2421, %v2417
    %v2423 = vmul.f32 1.0, %v2422
    %v2424 = vrcp.pop %v2198
    %v2425 = vmul.f32 %v2198, %v2424
    %v2426 = vsub.f32 1.0, %v2425
    %v2427 = vmul.f32 %v2424, %v2426
    %v2428 = vadd.f32 %v2424, %v2427
    %vm2429 = vweird.f32 %v2198
    %vm2430 = vweird.f32 %v2424
    %vm2431 = vmor %vm2429, %vm2430
    %v2432 = vsel %vm2431, %v2424, %v2428
    %v2433 = vand.u32 2147483647, %v2198
    %vm2434 = vcmp.eq.f32.partialorder %v2433, 8.507059e+37
    %v2435 = vand.u32 %v2198, 2147483648
    %v2436 = vor.u32 1.1754944e-38, %v2435
    %v2437 = vsel %vm2434, %v2436, %v2432
    %v2438 = vmul.f32 1.0, %v2437
    %v2439 = vtanh.pop %v2119
    %v2440 = vtanh.pop %v2120
    %v2441 = vtanh.pop %v2121
    %v2442 = vtanh.pop %v2122
    %v2443 = vtanh.pop %v2123
    %v2444 = vtanh.pop %v2124
    %v2445 = vtanh.pop %v2125
    %v2446 = vtanh.pop %v2126
    %v2447 = vtanh.pop %v2127
    %v2448 = vtanh.pop %v2128
    %v2449 = vtanh.pop %v2129
    %v2450 = vtanh.pop %v2130
    %v2451 = vtanh.pop %v2131
    %v2452 = vtanh.pop %v2132
    %v2453 = vtanh.pop %v2133
    %v2454 = vtanh.pop %v2134
    %v2455 = vmul.f32 %v2213, %v1816
    %v2456 = vmul.f32 %v2228, %v1817
    %v2457 = vmul.f32 %v2243, %v1818
    %v2458 = vmul.f32 %v2258, %v1819
    %v2459 = vmul.f32 %v2273, %v1820
    %v2460 = vmul.f32 %v2288, %v1821
    %v2461 = vmul.f32 %v2303, %v1822
    %v2462 = vmul.f32 %v2318, %v1823
    %v2463 = vmul.f32 %v2333, %v1824
    %v2464 = vmul.f32 %v2348, %v1825
    %v2465 = vmul.f32 %v2363, %v1826
    %v2466 = vmul.f32 %v2378, %v1827
    %v2467 = vmul.f32 %v2393, %v1828
    %v2468 = vmul.f32 %v2408, %v1829
    %v2469 = vmul.f32 %v2423, %v1830
    %v2470 = vmul.f32 %v2438, %v1831
    %2487 = vrot.lane.b32.xlu0 %v2439, 64
    %v2488 = vpop.permute.xlu0 %2487
    %2489 = vrot.lane.b32.xlu0 %v2440, 64
    %v2490 = vpop.permute.xlu0 %2489
    %2491 = vrot.lane.b32.xlu0 %v2441, 64
    %v2492 = vpop.permute.xlu0 %2491
    %2493 = vrot.lane.b32.xlu0 %v2442, 64
    %v2494 = vpop.permute.xlu0 %2493
    %2495 = vrot.lane.b32.xlu0 %v2443, 64
    %v2496 = vpop.permute.xlu0 %2495
    %2497 = vrot.lane.b32.xlu0 %v2444, 64
    %v2498 = vpop.permute.xlu0 %2497
    %2499 = vrot.lane.b32.xlu0 %v2445, 64
    %v2500 = vpop.permute.xlu0 %2499
    %2501 = vrot.lane.b32.xlu0 %v2446, 64
    %v2502 = vpop.permute.xlu0 %2501
    %2503 = vrot.lane.b32.xlu0 %v2447, 64
    %v2504 = vpop.permute.xlu0 %2503
    %2505 = vrot.lane.b32.xlu0 %v2448, 64
    %v2506 = vpop.permute.xlu0 %2505
    %2507 = vrot.lane.b32.xlu0 %v2449, 64
    %v2508 = vpop.permute.xlu0 %2507
    %2509 = vrot.lane.b32.xlu0 %v2450, 64
    %v2510 = vpop.permute.xlu0 %2509
    %2511 = vrot.lane.b32.xlu0 %v2451, 64
    %v2512 = vpop.permute.xlu0 %2511
    %2513 = vrot.lane.b32.xlu0 %v2452, 64
    %v2514 = vpop.permute.xlu0 %2513
    %2515 = vrot.lane.b32.xlu0 %v2453, 64
    %v2516 = vpop.permute.xlu0 %2515
    %2517 = vrot.lane.b32.xlu0 %v2454, 64
    %v2518 = vpop.permute.xlu0 %2517
    %v2535 = vmul.f32 %v2213, %v2488
    %v2536 = vmul.f32 %v2228, %v2490
    %v2537 = vmul.f32 %v2243, %v2492
    %v2538 = vmul.f32 %v2258, %v2494
    %v2539 = vmul.f32 %v2273, %v2496
    %v2540 = vmul.f32 %v2288, %v2498
    %v2541 = vmul.f32 %v2303, %v2500
    %v2542 = vmul.f32 %v2318, %v2502
    %v2543 = vmul.f32 %v2333, %v2504
    %v2544 = vmul.f32 %v2348, %v2506
    %v2545 = vmul.f32 %v2363, %v2508
    %v2546 = vmul.f32 %v2378, %v2510
    %v2547 = vmul.f32 %v2393, %v2512
    %v2548 = vmul.f32 %v2408, %v2514
    %v2549 = vmul.f32 %v2423, %v2516
    %v2550 = vmul.f32 %v2438, %v2518
    %2567 = vrot.lane.b32.xlu0 %v2535, 32
    %v2568 = vpop.permute.xlu0 %2567
    %2569 = vrot.lane.b32.xlu0 %v2536, 32
    %v2570 = vpop.permute.xlu0 %2569
    %2571 = vrot.lane.b32.xlu0 %v2537, 32
    %v2572 = vpop.permute.xlu0 %2571
    %2573 = vrot.lane.b32.xlu0 %v2538, 32
    %v2574 = vpop.permute.xlu0 %2573
    %2575 = vrot.lane.b32.xlu0 %v2539, 32
    %v2576 = vpop.permute.xlu0 %2575
    %2577 = vrot.lane.b32.xlu0 %v2540, 32
    %v2578 = vpop.permute.xlu0 %2577
    %2579 = vrot.lane.b32.xlu0 %v2541, 32
    %v2580 = vpop.permute.xlu0 %2579
    %2581 = vrot.lane.b32.xlu0 %v2542, 32
    %v2582 = vpop.permute.xlu0 %2581
    %2583 = vrot.lane.b32.xlu0 %v2543, 32
    %v2584 = vpop.permute.xlu0 %2583
    %2585 = vrot.lane.b32.xlu0 %v2544, 32
    %v2586 = vpop.permute.xlu0 %2585
    %2587 = vrot.lane.b32.xlu0 %v2545, 32
    %v2588 = vpop.permute.xlu0 %2587
    %2589 = vrot.lane.b32.xlu0 %v2546, 32
    %v2590 = vpop.permute.xlu0 %2589
    %2591 = vrot.lane.b32.xlu0 %v2547, 32
    %v2592 = vpop.permute.xlu0 %2591
    %2593 = vrot.lane.b32.xlu0 %v2548, 32
    %v2594 = vpop.permute.xlu0 %2593
    %2595 = vrot.lane.b32.xlu0 %v2549, 32
    %v2596 = vpop.permute.xlu0 %2595
    %2597 = vrot.lane.b32.xlu0 %v2550, 32
    %v2598 = vpop.permute.xlu0 %2597
    %v2615 = vadd.f32 %v2455, %v2568
    %v2616 = vadd.f32 %v2456, %v2570
    %v2617 = vadd.f32 %v2457, %v2572
    %v2618 = vadd.f32 %v2458, %v2574
    %v2619 = vadd.f32 %v2459, %v2576
    %v2620 = vadd.f32 %v2460, %v2578
    %v2621 = vadd.f32 %v2461, %v2580
    %v2622 = vadd.f32 %v2462, %v2582
    %v2623 = vadd.f32 %v2463, %v2584
    %v2624 = vadd.f32 %v2464, %v2586
    %v2625 = vadd.f32 %v2465, %v2588
    %v2626 = vadd.f32 %v2466, %v2590
    %v2627 = vadd.f32 %v2467, %v2592
    %v2628 = vadd.f32 %v2468, %v2594
    %v2629 = vadd.f32 %v2469, %v2596
    %v2630 = vadd.f32 %v2470, %v2598
    %v2631 = vtanh.pop %v2615
    %v2632 = vtanh.pop %v2616
    %v2633 = vtanh.pop %v2617
    %v2634 = vtanh.pop %v2618
    %v2635 = vtanh.pop %v2619
    %v2636 = vtanh.pop %v2620
    %v2637 = vtanh.pop %v2621
    %v2638 = vtanh.pop %v2622
    %v2639 = vtanh.pop %v2623
    %v2640 = vtanh.pop %v2624
    %v2641 = vtanh.pop %v2625
    %v2642 = vtanh.pop %v2626
    %v2643 = vtanh.pop %v2627
    %v2644 = vtanh.pop %v2628
    %v2645 = vtanh.pop %v2629
    %v2646 = vtanh.pop %v2630
    %2663 = vrot.lane.b32.xlu0 %v2631, 64
    %v2664 = vpop.permute.xlu0 %2663
    %2665 = vrot.lane.b32.xlu0 %v2632, 64
    %v2666 = vpop.permute.xlu0 %2665
    %2667 = vrot.lane.b32.xlu0 %v2633, 64
    %v2668 = vpop.permute.xlu0 %2667
    %2669 = vrot.lane.b32.xlu0 %v2634, 64
    %v2670 = vpop.permute.xlu0 %2669
    %2671 = vrot.lane.b32.xlu0 %v2635, 64
    %v2672 = vpop.permute.xlu0 %2671
    %2673 = vrot.lane.b32.xlu0 %v2636, 64
    %v2674 = vpop.permute.xlu0 %2673
    %2675 = vrot.lane.b32.xlu0 %v2637, 64
    %v2676 = vpop.permute.xlu0 %2675
    %2677 = vrot.lane.b32.xlu0 %v2638, 64
    %v2678 = vpop.permute.xlu0 %2677
    %2679 = vrot.lane.b32.xlu0 %v2639, 64
    %v2680 = vpop.permute.xlu0 %2679
    %2681 = vrot.lane.b32.xlu0 %v2640, 64
    %v2682 = vpop.permute.xlu0 %2681
    %2683 = vrot.lane.b32.xlu0 %v2641, 64
    %v2684 = vpop.permute.xlu0 %2683
    %2685 = vrot.lane.b32.xlu0 %v2642, 64
    %v2686 = vpop.permute.xlu0 %2685
    %2687 = vrot.lane.b32.xlu0 %v2643, 64
    %v2688 = vpop.permute.xlu0 %2687
    %2689 = vrot.lane.b32.xlu0 %v2644, 64
    %v2690 = vpop.permute.xlu0 %2689
    %2691 = vrot.lane.b32.xlu0 %v2645, 64
    %v2692 = vpop.permute.xlu0 %2691
    %2693 = vrot.lane.b32.xlu0 %v2646, 64
    %v2694 = vpop.permute.xlu0 %2693
    %v2711 = vmul.f32 %v2213, %v2664
    %v2712 = vmul.f32 %v2228, %v2666
    %v2713 = vmul.f32 %v2243, %v2668
    %v2714 = vmul.f32 %v2258, %v2670
    %v2715 = vmul.f32 %v2273, %v2672
    %v2716 = vmul.f32 %v2288, %v2674
    %v2717 = vmul.f32 %v2303, %v2676
    %v2718 = vmul.f32 %v2318, %v2678
    %v2719 = vmul.f32 %v2333, %v2680
    %v2720 = vmul.f32 %v2348, %v2682
    %v2721 = vmul.f32 %v2363, %v2684
    %v2722 = vmul.f32 %v2378, %v2686
    %v2723 = vmul.f32 %v2393, %v2688
    %v2724 = vmul.f32 %v2408, %v2690
    %v2725 = vmul.f32 %v2423, %v2692
    %v2726 = vmul.f32 %v2438, %v2694
    %v2727 = vld [vmem:[#allocation2 + $0x3] sm:$0x1]
    %v2728 = vld [vmem:[#allocation2 + $0xb] sm:$0x1]
    %v2729 = vld [vmem:[#allocation2 + $0x13] sm:$0x1]
    %v2730 = vld [vmem:[#allocation2 + $0x1b] sm:$0x1]
    %v2731 = vld [vmem:[#allocation2 + $0x23] sm:$0x1]
    %v2732 = vld [vmem:[#allocation2 + $0x2b] sm:$0x1]
    %v2733 = vld [vmem:[#allocation2 + $0x33] sm:$0x1]
    %v2734 = vld [vmem:[#allocation2 + $0x3b] sm:$0x1]
    %v2735 = vld [vmem:[#allocation2 + $0x43] sm:$0x1]
    %v2736 = vld [vmem:[#allocation2 + $0x4b] sm:$0x1]
    %v2737 = vld [vmem:[#allocation2 + $0x53] sm:$0x1]
    %v2738 = vld [vmem:[#allocation2 + $0x5b] sm:$0x1]
    %v2739 = vld [vmem:[#allocation2 + $0x63] sm:$0x1]
    %v2740 = vld [vmem:[#allocation2 + $0x6b] sm:$0x1]
    %v2741 = vld [vmem:[#allocation2 + $0x73] sm:$0x1]
    %v2742 = vld [vmem:[#allocation2 + $0x7b] sm:$0x1]
    %2743 = vset.pattern.permute.xlu0 3
    %2744 = vperm.xlu0 %2743, %v360
    %v2745 = vpop.permute.xlu0 %2744
    %2746 = vset.pattern.permute.xlu0 3
    %2747 = vperm.xlu0 %2746, %v361
    %v2748 = vpop.permute.xlu0 %2747
    %v2749 = vrot.slane %v2745, 1
    %v2750 = vrot.slane %v2745, 2
    %v2751 = vrot.slane %v2745, 3
    %v2752 = vrot.slane %v2745, 4
    %v2753 = vrot.slane %v2745, 5
    %v2754 = vrot.slane %v2745, 6
    %v2755 = vrot.slane %v2745, 7
    %v2756 = vrot.slane %v2748, 1
    %v2757 = vrot.slane %v2748, 2
    %v2758 = vrot.slane %v2748, 3
    %v2759 = vrot.slane %v2748, 4
    %v2760 = vrot.slane %v2748, 5
    %v2761 = vrot.slane %v2748, 6
    %v2762 = vrot.slane %v2748, 7
    %v2779 = vmul.f32 %v2727, %v2745
    %v2780 = vmul.f32 %v2728, %v2749
    %v2781 = vmul.f32 %v2729, %v2750
    %v2782 = vmul.f32 %v2730, %v2751
    %v2783 = vmul.f32 %v2731, %v2752
    %v2784 = vmul.f32 %v2732, %v2753
    %v2785 = vmul.f32 %v2733, %v2754
    %v2786 = vmul.f32 %v2734, %v2755
    %v2787 = vmul.f32 %v2735, %v2748
    %v2788 = vmul.f32 %v2736, %v2756
    %v2789 = vmul.f32 %v2737, %v2757
    %v2790 = vmul.f32 %v2738, %v2758
    %v2791 = vmul.f32 %v2739, %v2759
    %v2792 = vmul.f32 %v2740, %v2760
    %v2793 = vmul.f32 %v2741, %v2761
    %v2794 = vmul.f32 %v2742, %v2762
    %v2811 = vrot.slane %v2712, 7
    %v2812 = vsel %vm1207, %v2811, %v2711
    %v2813 = vrot.slane %v2713, 6
    %v2814 = vsel %vm1210, %v2813, %v2812
    %v2815 = vrot.slane %v2714, 5
    %v2816 = vsel %vm1213, %v2815, %v2814
    %v2817 = vrot.slane %v2715, 4
    %v2818 = vsel %vm1216, %v2817, %v2816
    %v2819 = vrot.slane %v2716, 3
    %v2820 = vsel %vm1219, %v2819, %v2818
    %v2821 = vrot.slane %v2717, 2
    %v2822 = vsel %vm1222, %v2821, %v2820
    %v2823 = vrot.slane %v2718, 1
    %v2824 = vsel %vm1225, %v2823, %v2822
    %v2825 = vrot.slane %v2720, 7
    %v2826 = vsel %vm1207, %v2825, %v2719
    %v2827 = vrot.slane %v2721, 6
    %v2828 = vsel %vm1210, %v2827, %v2826
    %v2829 = vrot.slane %v2722, 5
    %v2830 = vsel %vm1213, %v2829, %v2828
    %v2831 = vrot.slane %v2723, 4
    %v2832 = vsel %vm1216, %v2831, %v2830
    %v2833 = vrot.slane %v2724, 3
    %v2834 = vsel %vm1219, %v2833, %v2832
    %v2835 = vrot.slane %v2725, 2
    %v2836 = vsel %vm1222, %v2835, %v2834
    %v2837 = vrot.slane %v2726, 1
    %v2838 = vsel %vm1225, %v2837, %v2836
    %2839 = vrot.lane.b32.xlu0 %v2824, 32
    %v2840 = vpop.permute.xlu0 %2839
    %2841 = vrot.lane.b32.xlu0 %v2838, 32
    %v2842 = vpop.permute.xlu0 %2841
    %v2843 = vsel %vm230, %v2840, 0
    %v2845 = vsel %vm230, %v2842, 0
    %2847 = vmatpush.msra.mxu0 0.0
    %2848 = vmatpush.msra.mxu0 0.0
    %2849 = vmatpush.msra.mxu0 0.0
    %2850 = vmatpush.msra.mxu0 0.0
    %2851 = vmatpush.msra.mxu0 0.0
    %2852 = vmatpush.msra.mxu0 0.0
    %2853 = vmatpush.msra.mxu0 0.0
    %2854 = vmatpush.msra.mxu0 0.0
    %2855 = vmatpush.msra.mxu0 0.0
    %2856 = vmatpush.msra.mxu0 0.0
    %2857 = vmatpush.msra.mxu0 0.0
    %2858 = vmatpush.msra.mxu0 0.0
    %2859 = vmatpush.msra.mxu0 %v365
    %2860 = vmatpush.msra.mxu0 %v364
    %2861 = vmatpush.msra.mxu0 %v363
    %2862 = vmatpush.msra.mxu0 %v362
    %2863 = vmatmul.f32.gmra.mxu0 %v2843
    %v2864 = vpop.f32.mrf.mxu0
    %v2865 = vadd.f32 0.0, %v2864
    %2866 = vmatmul.f32.gmra.mxu0 %v2845
    %v2867 = vpop.f32.mrf.mxu0
    %v2868 = vadd.f32 0.0, %v2867
    %2869 = vdwg.mxu0
    %v2872 = vrot.slane %v2865, 1
    %v2873 = vrot.slane %v2865, 2
    %v2874 = vrot.slane %v2865, 3
    %v2875 = vrot.slane %v2865, 4
    %v2876 = vrot.slane %v2865, 5
    %v2877 = vrot.slane %v2865, 6
    %v2878 = vrot.slane %v2865, 7
    %v2879 = vrot.slane %v2868, 1
    %v2880 = vrot.slane %v2868, 2
    %v2881 = vrot.slane %v2868, 3
    %v2882 = vrot.slane %v2868, 4
    %v2883 = vrot.slane %v2868, 5
    %v2884 = vrot.slane %v2868, 6
    %v2885 = vrot.slane %v2868, 7
    %v2902 = vadd.f32 %v2779, %v2865
    %v2903 = vadd.f32 %v2780, %v2872
    %v2904 = vadd.f32 %v2781, %v2873
    %v2905 = vadd.f32 %v2782, %v2874
    %v2906 = vadd.f32 %v2783, %v2875
    %v2907 = vadd.f32 %v2784, %v2876
    %v2908 = vadd.f32 %v2785, %v2877
    %v2909 = vadd.f32 %v2786, %v2878
    %v2910 = vadd.f32 %v2787, %v2868
    %v2911 = vadd.f32 %v2788, %v2879
    %v2912 = vadd.f32 %v2789, %v2880
    %v2913 = vadd.f32 %v2790, %v2881
    %v2914 = vadd.f32 %v2791, %v2882
    %v2915 = vadd.f32 %v2792, %v2883
    %v2916 = vadd.f32 %v2793, %v2884
    %v2917 = vadd.f32 %v2794, %v2885
    %v2918 = vadd.f32 %v2902, %v512
    %v2919 = vadd.f32 %v2903, %v512
    %v2920 = vadd.f32 %v2904, %v512
    %v2921 = vadd.f32 %v2905, %v512
    %v2922 = vadd.f32 %v2906, %v512
    %v2923 = vadd.f32 %v2907, %v512
    %v2924 = vadd.f32 %v2908, %v512
    %v2925 = vadd.f32 %v2909, %v512
    %v2926 = vadd.f32 %v2910, %v512
    %v2927 = vadd.f32 %v2911, %v512
    %v2928 = vadd.f32 %v2912, %v512
    %v2929 = vadd.f32 %v2913, %v512
    %v2930 = vadd.f32 %v2914, %v512
    %v2931 = vadd.f32 %v2915, %v512
    %v2932 = vadd.f32 %v2916, %v512
    %v2933 = vadd.f32 %v2917, %v512
    %v2934 = vxor.u32 %v2918, 2147483648
    %v2935 = vxor.u32 %v2919, 2147483648
    %v2936 = vxor.u32 %v2920, 2147483648
    %v2937 = vxor.u32 %v2921, 2147483648
    %v2938 = vxor.u32 %v2922, 2147483648
    %v2939 = vxor.u32 %v2923, 2147483648
    %v2940 = vxor.u32 %v2924, 2147483648
    %v2941 = vxor.u32 %v2925, 2147483648
    %v2942 = vxor.u32 %v2926, 2147483648
    %v2943 = vxor.u32 %v2927, 2147483648
    %v2944 = vxor.u32 %v2928, 2147483648
    %v2945 = vxor.u32 %v2929, 2147483648
    %v2946 = vxor.u32 %v2930, 2147483648
    %v2947 = vxor.u32 %v2931, 2147483648
    %v2948 = vxor.u32 %v2932, 2147483648
    %v2949 = vxor.u32 %v2933, 2147483648
    %v2950 = vmul.f32 %v2934, 1.442695
    %v2951 = vpow.pop %v2950
    %v2952 = vmul.f32 %v2935, 1.442695
    %v2953 = vpow.pop %v2952
    %v2954 = vmul.f32 %v2936, 1.442695
    %v2955 = vpow.pop %v2954
    %v2956 = vmul.f32 %v2937, 1.442695
    %v2957 = vpow.pop %v2956
    %v2958 = vmul.f32 %v2938, 1.442695
    %v2959 = vpow.pop %v2958
    %v2960 = vmul.f32 %v2939, 1.442695
    %v2961 = vpow.pop %v2960
    %v2962 = vmul.f32 %v2940, 1.442695
    %v2963 = vpow.pop %v2962
    %v2964 = vmul.f32 %v2941, 1.442695
    %v2965 = vpow.pop %v2964
    %v2966 = vmul.f32 %v2942, 1.442695
    %v2967 = vpow.pop %v2966
    %v2968 = vmul.f32 %v2943, 1.442695
    %v2969 = vpow.pop %v2968
    %v2970 = vmul.f32 %v2944, 1.442695
    %v2971 = vpow.pop %v2970
    %v2972 = vmul.f32 %v2945, 1.442695
    %v2973 = vpow.pop %v2972
    %v2974 = vmul.f32 %v2946, 1.442695
    %v2975 = vpow.pop %v2974
    %v2976 = vmul.f32 %v2947, 1.442695
    %v2977 = vpow.pop %v2976
    %v2978 = vmul.f32 %v2948, 1.442695
    %v2979 = vpow.pop %v2978
    %v2980 = vmul.f32 %v2949, 1.442695
    %v2981 = vpow.pop %v2980
    %v2982 = vadd.f32 %v2951, 1.0
    %v2983 = vadd.f32 %v2953, 1.0
    %v2984 = vadd.f32 %v2955, 1.0
    %v2985 = vadd.f32 %v2957, 1.0
    %v2986 = vadd.f32 %v2959, 1.0
    %v2987 = vadd.f32 %v2961, 1.0
    %v2988 = vadd.f32 %v2963, 1.0
    %v2989 = vadd.f32 %v2965, 1.0
    %v2990 = vadd.f32 %v2967, 1.0
    %v2991 = vadd.f32 %v2969, 1.0
    %v2992 = vadd.f32 %v2971, 1.0
    %v2993 = vadd.f32 %v2973, 1.0
    %v2994 = vadd.f32 %v2975, 1.0
    %v2995 = vadd.f32 %v2977, 1.0
    %v2996 = vadd.f32 %v2979, 1.0
    %v2997 = vadd.f32 %v2981, 1.0
    %v2998 = vrcp.pop %v2982
    %v2999 = vmul.f32 %v2982, %v2998
    %v3000 = vsub.f32 1.0, %v2999
    %v3001 = vmul.f32 %v2998, %v3000
    %v3002 = vadd.f32 %v2998, %v3001
    %vm3003 = vweird.f32 %v2982
    %vm3004 = vweird.f32 %v2998
    %vm3005 = vmor %vm3003, %vm3004
    %v3006 = vsel %vm3005, %v2998, %v3002
    %v3007 = vand.u32 2147483647, %v2982
    %vm3008 = vcmp.eq.f32.partialorder %v3007, 8.507059e+37
    %v3009 = vand.u32 %v2982, 2147483648
    %v3010 = vor.u32 1.1754944e-38, %v3009
    %v3011 = vsel %vm3008, %v3010, %v3006
    %v3012 = vmul.f32 1.0, %v3011
    %v3013 = vrcp.pop %v2983
    %v3014 = vmul.f32 %v2983, %v3013
    %v3015 = vsub.f32 1.0, %v3014
    %v3016 = vmul.f32 %v3013, %v3015
    %v3017 = vadd.f32 %v3013, %v3016
    %vm3018 = vweird.f32 %v2983
    %vm3019 = vweird.f32 %v3013
    %vm3020 = vmor %vm3018, %vm3019
    %v3021 = vsel %vm3020, %v3013, %v3017
    %v3022 = vand.u32 2147483647, %v2983
    %vm3023 = vcmp.eq.f32.partialorder %v3022, 8.507059e+37
    %v3024 = vand.u32 %v2983, 2147483648
    %v3025 = vor.u32 1.1754944e-38, %v3024
    %v3026 = vsel %vm3023, %v3025, %v3021
    %v3027 = vmul.f32 1.0, %v3026
    %v3028 = vrcp.pop %v2984
    %v3029 = vmul.f32 %v2984, %v3028
    %v3030 = vsub.f32 1.0, %v3029
    %v3031 = vmul.f32 %v3028, %v3030
    %v3032 = vadd.f32 %v3028, %v3031
    %vm3033 = vweird.f32 %v2984
    %vm3034 = vweird.f32 %v3028
    %vm3035 = vmor %vm3033, %vm3034
    %v3036 = vsel %vm3035, %v3028, %v3032
    %v3037 = vand.u32 2147483647, %v2984
    %vm3038 = vcmp.eq.f32.partialorder %v3037, 8.507059e+37
    %v3039 = vand.u32 %v2984, 2147483648
    %v3040 = vor.u32 1.1754944e-38, %v3039
    %v3041 = vsel %vm3038, %v3040, %v3036
    %v3042 = vmul.f32 1.0, %v3041
    %v3043 = vrcp.pop %v2985
    %v3044 = vmul.f32 %v2985, %v3043
    %v3045 = vsub.f32 1.0, %v3044
    %v3046 = vmul.f32 %v3043, %v3045
    %v3047 = vadd.f32 %v3043, %v3046
    %vm3048 = vweird.f32 %v2985
    %vm3049 = vweird.f32 %v3043
    %vm3050 = vmor %vm3048, %vm3049
    %v3051 = vsel %vm3050, %v3043, %v3047
    %v3052 = vand.u32 2147483647, %v2985
    %vm3053 = vcmp.eq.f32.partialorder %v3052, 8.507059e+37
    %v3054 = vand.u32 %v2985, 2147483648
    %v3055 = vor.u32 1.1754944e-38, %v3054
    %v3056 = vsel %vm3053, %v3055, %v3051
    %v3057 = vmul.f32 1.0, %v3056
    %v3058 = vrcp.pop %v2986
    %v3059 = vmul.f32 %v2986, %v3058
    %v3060 = vsub.f32 1.0, %v3059
    %v3061 = vmul.f32 %v3058, %v3060
    %v3062 = vadd.f32 %v3058, %v3061
    %vm3063 = vweird.f32 %v2986
    %vm3064 = vweird.f32 %v3058
    %vm3065 = vmor %vm3063, %vm3064
    %v3066 = vsel %vm3065, %v3058, %v3062
    %v3067 = vand.u32 2147483647, %v2986
    %vm3068 = vcmp.eq.f32.partialorder %v3067, 8.507059e+37
    %v3069 = vand.u32 %v2986, 2147483648
    %v3070 = vor.u32 1.1754944e-38, %v3069
    %v3071 = vsel %vm3068, %v3070, %v3066
    %v3072 = vmul.f32 1.0, %v3071
    %v3073 = vrcp.pop %v2987
    %v3074 = vmul.f32 %v2987, %v3073
    %v3075 = vsub.f32 1.0, %v3074
    %v3076 = vmul.f32 %v3073, %v3075
    %v3077 = vadd.f32 %v3073, %v3076
    %vm3078 = vweird.f32 %v2987
    %vm3079 = vweird.f32 %v3073
    %vm3080 = vmor %vm3078, %vm3079
    %v3081 = vsel %vm3080, %v3073, %v3077
    %v3082 = vand.u32 2147483647, %v2987
    %vm3083 = vcmp.eq.f32.partialorder %v3082, 8.507059e+37
    %v3084 = vand.u32 %v2987, 2147483648
    %v3085 = vor.u32 1.1754944e-38, %v3084
    %v3086 = vsel %vm3083, %v3085, %v3081
    %v3087 = vmul.f32 1.0, %v3086
    %v3088 = vrcp.pop %v2988
    %v3089 = vmul.f32 %v2988, %v3088
    %v3090 = vsub.f32 1.0, %v3089
    %v3091 = vmul.f32 %v3088, %v3090
    %v3092 = vadd.f32 %v3088, %v3091
    %vm3093 = vweird.f32 %v2988
    %vm3094 = vweird.f32 %v3088
    %vm3095 = vmor %vm3093, %vm3094
    %v3096 = vsel %vm3095, %v3088, %v3092
    %v3097 = vand.u32 2147483647, %v2988
    %vm3098 = vcmp.eq.f32.partialorder %v3097, 8.507059e+37
    %v3099 = vand.u32 %v2988, 2147483648
    %v3100 = vor.u32 1.1754944e-38, %v3099
    %v3101 = vsel %vm3098, %v3100, %v3096
    %v3102 = vmul.f32 1.0, %v3101
    %v3103 = vrcp.pop %v2989
    %v3104 = vmul.f32 %v2989, %v3103
    %v3105 = vsub.f32 1.0, %v3104
    %v3106 = vmul.f32 %v3103, %v3105
    %v3107 = vadd.f32 %v3103, %v3106
    %vm3108 = vweird.f32 %v2989
    %vm3109 = vweird.f32 %v3103
    %vm3110 = vmor %vm3108, %vm3109
    %v3111 = vsel %vm3110, %v3103, %v3107
    %v3112 = vand.u32 2147483647, %v2989
    %vm3113 = vcmp.eq.f32.partialorder %v3112, 8.507059e+37
    %v3114 = vand.u32 %v2989, 2147483648
    %v3115 = vor.u32 1.1754944e-38, %v3114
    %v3116 = vsel %vm3113, %v3115, %v3111
    %v3117 = vmul.f32 1.0, %v3116
    %v3118 = vrcp.pop %v2990
    %v3119 = vmul.f32 %v2990, %v3118
    %v3120 = vsub.f32 1.0, %v3119
    %v3121 = vmul.f32 %v3118, %v3120
    %v3122 = vadd.f32 %v3118, %v3121
    %vm3123 = vweird.f32 %v2990
    %vm3124 = vweird.f32 %v3118
    %vm3125 = vmor %vm3123, %vm3124
    %v3126 = vsel %vm3125, %v3118, %v3122
    %v3127 = vand.u32 2147483647, %v2990
    %vm3128 = vcmp.eq.f32.partialorder %v3127, 8.507059e+37
    %v3129 = vand.u32 %v2990, 2147483648
    %v3130 = vor.u32 1.1754944e-38, %v3129
    %v3131 = vsel %vm3128, %v3130, %v3126
    %v3132 = vmul.f32 1.0, %v3131
    %v3133 = vrcp.pop %v2991
    %v3134 = vmul.f32 %v2991, %v3133
    %v3135 = vsub.f32 1.0, %v3134
    %v3136 = vmul.f32 %v3133, %v3135
    %v3137 = vadd.f32 %v3133, %v3136
    %vm3138 = vweird.f32 %v2991
    %vm3139 = vweird.f32 %v3133
    %vm3140 = vmor %vm3138, %vm3139
    %v3141 = vsel %vm3140, %v3133, %v3137
    %v3142 = vand.u32 2147483647, %v2991
    %vm3143 = vcmp.eq.f32.partialorder %v3142, 8.507059e+37
    %v3144 = vand.u32 %v2991, 2147483648
    %v3145 = vor.u32 1.1754944e-38, %v3144
    %v3146 = vsel %vm3143, %v3145, %v3141
    %v3147 = vmul.f32 1.0, %v3146
    %v3148 = vrcp.pop %v2992
    %v3149 = vmul.f32 %v2992, %v3148
    %v3150 = vsub.f32 1.0, %v3149
    %v3151 = vmul.f32 %v3148, %v3150
    %v3152 = vadd.f32 %v3148, %v3151
    %vm3153 = vweird.f32 %v2992
    %vm3154 = vweird.f32 %v3148
    %vm3155 = vmor %vm3153, %vm3154
    %v3156 = vsel %vm3155, %v3148, %v3152
    %v3157 = vand.u32 2147483647, %v2992
    %vm3158 = vcmp.eq.f32.partialorder %v3157, 8.507059e+37
    %v3159 = vand.u32 %v2992, 2147483648
    %v3160 = vor.u32 1.1754944e-38, %v3159
    %v3161 = vsel %vm3158, %v3160, %v3156
    %v3162 = vmul.f32 1.0, %v3161
    %v3163 = vrcp.pop %v2993
    %v3164 = vmul.f32 %v2993, %v3163
    %v3165 = vsub.f32 1.0, %v3164
    %v3166 = vmul.f32 %v3163, %v3165
    %v3167 = vadd.f32 %v3163, %v3166
    %vm3168 = vweird.f32 %v2993
    %vm3169 = vweird.f32 %v3163
    %vm3170 = vmor %vm3168, %vm3169
    %v3171 = vsel %vm3170, %v3163, %v3167
    %v3172 = vand.u32 2147483647, %v2993
    %vm3173 = vcmp.eq.f32.partialorder %v3172, 8.507059e+37
    %v3174 = vand.u32 %v2993, 2147483648
    %v3175 = vor.u32 1.1754944e-38, %v3174
    %v3176 = vsel %vm3173, %v3175, %v3171
    %v3177 = vmul.f32 1.0, %v3176
    %v3178 = vrcp.pop %v2994
    %v3179 = vmul.f32 %v2994, %v3178
    %v3180 = vsub.f32 1.0, %v3179
    %v3181 = vmul.f32 %v3178, %v3180
    %v3182 = vadd.f32 %v3178, %v3181
    %vm3183 = vweird.f32 %v2994
    %vm3184 = vweird.f32 %v3178
    %vm3185 = vmor %vm3183, %vm3184
    %v3186 = vsel %vm3185, %v3178, %v3182
    %v3187 = vand.u32 2147483647, %v2994
    %vm3188 = vcmp.eq.f32.partialorder %v3187, 8.507059e+37
    %v3189 = vand.u32 %v2994, 2147483648
    %v3190 = vor.u32 1.1754944e-38, %v3189
    %v3191 = vsel %vm3188, %v3190, %v3186
    %v3192 = vmul.f32 1.0, %v3191
    %v3193 = vrcp.pop %v2995
    %v3194 = vmul.f32 %v2995, %v3193
    %v3195 = vsub.f32 1.0, %v3194
    %v3196 = vmul.f32 %v3193, %v3195
    %v3197 = vadd.f32 %v3193, %v3196
    %vm3198 = vweird.f32 %v2995
    %vm3199 = vweird.f32 %v3193
    %vm3200 = vmor %vm3198, %vm3199
    %v3201 = vsel %vm3200, %v3193, %v3197
    %v3202 = vand.u32 2147483647, %v2995
    %vm3203 = vcmp.eq.f32.partialorder %v3202, 8.507059e+37
    %v3204 = vand.u32 %v2995, 2147483648
    %v3205 = vor.u32 1.1754944e-38, %v3204
    %v3206 = vsel %vm3203, %v3205, %v3201
    %v3207 = vmul.f32 1.0, %v3206
    %v3208 = vrcp.pop %v2996
    %v3209 = vmul.f32 %v2996, %v3208
    %v3210 = vsub.f32 1.0, %v3209
    %v3211 = vmul.f32 %v3208, %v3210
    %v3212 = vadd.f32 %v3208, %v3211
    %vm3213 = vweird.f32 %v2996
    %vm3214 = vweird.f32 %v3208
    %vm3215 = vmor %vm3213, %vm3214
    %v3216 = vsel %vm3215, %v3208, %v3212
    %v3217 = vand.u32 2147483647, %v2996
    %vm3218 = vcmp.eq.f32.partialorder %v3217, 8.507059e+37
    %v3219 = vand.u32 %v2996, 2147483648
    %v3220 = vor.u32 1.1754944e-38, %v3219
    %v3221 = vsel %vm3218, %v3220, %v3216
    %v3222 = vmul.f32 1.0, %v3221
    %v3223 = vrcp.pop %v2997
    %v3224 = vmul.f32 %v2997, %v3223
    %v3225 = vsub.f32 1.0, %v3224
    %v3226 = vmul.f32 %v3223, %v3225
    %v3227 = vadd.f32 %v3223, %v3226
    %vm3228 = vweird.f32 %v2997
    %vm3229 = vweird.f32 %v3223
    %vm3230 = vmor %vm3228, %vm3229
    %v3231 = vsel %vm3230, %v3223, %v3227
    %v3232 = vand.u32 2147483647, %v2997
    %vm3233 = vcmp.eq.f32.partialorder %v3232, 8.507059e+37
    %v3234 = vand.u32 %v2997, 2147483648
    %v3235 = vor.u32 1.1754944e-38, %v3234
    %v3236 = vsel %vm3233, %v3235, %v3231
    %v3237 = vmul.f32 1.0, %v3236
    %v3238 = vtanh.pop %v2918
    %v3239 = vtanh.pop %v2919
    %v3240 = vtanh.pop %v2920
    %v3241 = vtanh.pop %v2921
    %v3242 = vtanh.pop %v2922
    %v3243 = vtanh.pop %v2923
    %v3244 = vtanh.pop %v2924
    %v3245 = vtanh.pop %v2925
    %v3246 = vtanh.pop %v2926
    %v3247 = vtanh.pop %v2927
    %v3248 = vtanh.pop %v2928
    %v3249 = vtanh.pop %v2929
    %v3250 = vtanh.pop %v2930
    %v3251 = vtanh.pop %v2931
    %v3252 = vtanh.pop %v2932
    %v3253 = vtanh.pop %v2933
    %v3254 = vmul.f32 %v3012, %v2615
    %v3255 = vmul.f32 %v3027, %v2616
    %v3256 = vmul.f32 %v3042, %v2617
    %v3257 = vmul.f32 %v3057, %v2618
    %v3258 = vmul.f32 %v3072, %v2619
    %v3259 = vmul.f32 %v3087, %v2620
    %v3260 = vmul.f32 %v3102, %v2621
    %v3261 = vmul.f32 %v3117, %v2622
    %v3262 = vmul.f32 %v3132, %v2623
    %v3263 = vmul.f32 %v3147, %v2624
    %v3264 = vmul.f32 %v3162, %v2625
    %v3265 = vmul.f32 %v3177, %v2626
    %v3266 = vmul.f32 %v3192, %v2627
    %v3267 = vmul.f32 %v3207, %v2628
    %v3268 = vmul.f32 %v3222, %v2629
    %v3269 = vmul.f32 %v3237, %v2630
    %3286 = vrot.lane.b32.xlu0 %v3238, 64
    %v3287 = vpop.permute.xlu0 %3286
    %3288 = vrot.lane.b32.xlu0 %v3239, 64
    %v3289 = vpop.permute.xlu0 %3288
    %3290 = vrot.lane.b32.xlu0 %v3240, 64
    %v3291 = vpop.permute.xlu0 %3290
    %3292 = vrot.lane.b32.xlu0 %v3241, 64
    %v3293 = vpop.permute.xlu0 %3292
    %3294 = vrot.lane.b32.xlu0 %v3242, 64
    %v3295 = vpop.permute.xlu0 %3294
    %3296 = vrot.lane.b32.xlu0 %v3243, 64
    %v3297 = vpop.permute.xlu0 %3296
    %3298 = vrot.lane.b32.xlu0 %v3244, 64
    %v3299 = vpop.permute.xlu0 %3298
    %3300 = vrot.lane.b32.xlu0 %v3245, 64
    %v3301 = vpop.permute.xlu0 %3300
    %3302 = vrot.lane.b32.xlu0 %v3246, 64
    %v3303 = vpop.permute.xlu0 %3302
    %3304 = vrot.lane.b32.xlu0 %v3247, 64
    %v3305 = vpop.permute.xlu0 %3304
    %3306 = vrot.lane.b32.xlu0 %v3248, 64
    %v3307 = vpop.permute.xlu0 %3306
    %3308 = vrot.lane.b32.xlu0 %v3249, 64
    %v3309 = vpop.permute.xlu0 %3308
    %3310 = vrot.lane.b32.xlu0 %v3250, 64
    %v3311 = vpop.permute.xlu0 %3310
    %3312 = vrot.lane.b32.xlu0 %v3251, 64
    %v3313 = vpop.permute.xlu0 %3312
    %3314 = vrot.lane.b32.xlu0 %v3252, 64
    %v3315 = vpop.permute.xlu0 %3314
    %3316 = vrot.lane.b32.xlu0 %v3253, 64
    %v3317 = vpop.permute.xlu0 %3316
    %v3334 = vmul.f32 %v3012, %v3287
    %v3335 = vmul.f32 %v3027, %v3289
    %v3336 = vmul.f32 %v3042, %v3291
    %v3337 = vmul.f32 %v3057, %v3293
    %v3338 = vmul.f32 %v3072, %v3295
    %v3339 = vmul.f32 %v3087, %v3297
    %v3340 = vmul.f32 %v3102, %v3299
    %v3341 = vmul.f32 %v3117, %v3301
    %v3342 = vmul.f32 %v3132, %v3303
    %v3343 = vmul.f32 %v3147, %v3305
    %v3344 = vmul.f32 %v3162, %v3307
    %v3345 = vmul.f32 %v3177, %v3309
    %v3346 = vmul.f32 %v3192, %v3311
    %v3347 = vmul.f32 %v3207, %v3313
    %v3348 = vmul.f32 %v3222, %v3315
    %v3349 = vmul.f32 %v3237, %v3317
    %3366 = vrot.lane.b32.xlu0 %v3334, 32
    %v3367 = vpop.permute.xlu0 %3366
    %3368 = vrot.lane.b32.xlu0 %v3335, 32
    %v3369 = vpop.permute.xlu0 %3368
    %3370 = vrot.lane.b32.xlu0 %v3336, 32
    %v3371 = vpop.permute.xlu0 %3370
    %3372 = vrot.lane.b32.xlu0 %v3337, 32
    %v3373 = vpop.permute.xlu0 %3372
    %3374 = vrot.lane.b32.xlu0 %v3338, 32
    %v3375 = vpop.permute.xlu0 %3374
    %3376 = vrot.lane.b32.xlu0 %v3339, 32
    %v3377 = vpop.permute.xlu0 %3376
    %3378 = vrot.lane.b32.xlu0 %v3340, 32
    %v3379 = vpop.permute.xlu0 %3378
    %3380 = vrot.lane.b32.xlu0 %v3341, 32
    %v3381 = vpop.permute.xlu0 %3380
    %3382 = vrot.lane.b32.xlu0 %v3342, 32
    %v3383 = vpop.permute.xlu0 %3382
    %3384 = vrot.lane.b32.xlu0 %v3343, 32
    %v3385 = vpop.permute.xlu0 %3384
    %3386 = vrot.lane.b32.xlu0 %v3344, 32
    %v3387 = vpop.permute.xlu0 %3386
    %3388 = vrot.lane.b32.xlu0 %v3345, 32
    %v3389 = vpop.permute.xlu0 %3388
    %3390 = vrot.lane.b32.xlu0 %v3346, 32
    %v3391 = vpop.permute.xlu0 %3390
    %3392 = vrot.lane.b32.xlu0 %v3347, 32
    %v3393 = vpop.permute.xlu0 %3392
    %3394 = vrot.lane.b32.xlu0 %v3348, 32
    %v3395 = vpop.permute.xlu0 %3394
    %3396 = vrot.lane.b32.xlu0 %v3349, 32
    %v3397 = vpop.permute.xlu0 %3396
    %v3414 = vadd.f32 %v3254, %v3367
    %v3415 = vadd.f32 %v3255, %v3369
    %v3416 = vadd.f32 %v3256, %v3371
    %v3417 = vadd.f32 %v3257, %v3373
    %v3418 = vadd.f32 %v3258, %v3375
    %v3419 = vadd.f32 %v3259, %v3377
    %v3420 = vadd.f32 %v3260, %v3379
    %v3421 = vadd.f32 %v3261, %v3381
    %v3422 = vadd.f32 %v3262, %v3383
    %v3423 = vadd.f32 %v3263, %v3385
    %v3424 = vadd.f32 %v3264, %v3387
    %v3425 = vadd.f32 %v3265, %v3389
    %v3426 = vadd.f32 %v3266, %v3391
    %v3427 = vadd.f32 %v3267, %v3393
    %v3428 = vadd.f32 %v3268, %v3395
    %v3429 = vadd.f32 %v3269, %v3397
    %v3430 = vtanh.pop %v3414
    %v3431 = vtanh.pop %v3415
    %v3432 = vtanh.pop %v3416
    %v3433 = vtanh.pop %v3417
    %v3434 = vtanh.pop %v3418
    %v3435 = vtanh.pop %v3419
    %v3436 = vtanh.pop %v3420
    %v3437 = vtanh.pop %v3421
    %v3438 = vtanh.pop %v3422
    %v3439 = vtanh.pop %v3423
    %v3440 = vtanh.pop %v3424
    %v3441 = vtanh.pop %v3425
    %v3442 = vtanh.pop %v3426
    %v3443 = vtanh.pop %v3427
    %v3444 = vtanh.pop %v3428
    %v3445 = vtanh.pop %v3429
    %3462 = vrot.lane.b32.xlu0 %v3430, 64
    %v3463 = vpop.permute.xlu0 %3462
    %3464 = vrot.lane.b32.xlu0 %v3431, 64
    %v3465 = vpop.permute.xlu0 %3464
    %3466 = vrot.lane.b32.xlu0 %v3432, 64
    %v3467 = vpop.permute.xlu0 %3466
    %3468 = vrot.lane.b32.xlu0 %v3433, 64
    %v3469 = vpop.permute.xlu0 %3468
    %3470 = vrot.lane.b32.xlu0 %v3434, 64
    %v3471 = vpop.permute.xlu0 %3470
    %3472 = vrot.lane.b32.xlu0 %v3435, 64
    %v3473 = vpop.permute.xlu0 %3472
    %3474 = vrot.lane.b32.xlu0 %v3436, 64
    %v3475 = vpop.permute.xlu0 %3474
    %3476 = vrot.lane.b32.xlu0 %v3437, 64
    %v3477 = vpop.permute.xlu0 %3476
    %3478 = vrot.lane.b32.xlu0 %v3438, 64
    %v3479 = vpop.permute.xlu0 %3478
    %3480 = vrot.lane.b32.xlu0 %v3439, 64
    %v3481 = vpop.permute.xlu0 %3480
    %3482 = vrot.lane.b32.xlu0 %v3440, 64
    %v3483 = vpop.permute.xlu0 %3482
    %3484 = vrot.lane.b32.xlu0 %v3441, 64
    %v3485 = vpop.permute.xlu0 %3484
    %3486 = vrot.lane.b32.xlu0 %v3442, 64
    %v3487 = vpop.permute.xlu0 %3486
    %3488 = vrot.lane.b32.xlu0 %v3443, 64
    %v3489 = vpop.permute.xlu0 %3488
    %3490 = vrot.lane.b32.xlu0 %v3444, 64
    %v3491 = vpop.permute.xlu0 %3490
    %3492 = vrot.lane.b32.xlu0 %v3445, 64
    %v3493 = vpop.permute.xlu0 %3492
    %v3510 = vmul.f32 %v3012, %v3463
    %v3511 = vmul.f32 %v3027, %v3465
    %v3512 = vmul.f32 %v3042, %v3467
    %v3513 = vmul.f32 %v3057, %v3469
    %v3514 = vmul.f32 %v3072, %v3471
    %v3515 = vmul.f32 %v3087, %v3473
    %v3516 = vmul.f32 %v3102, %v3475
    %v3517 = vmul.f32 %v3117, %v3477
    %v3518 = vmul.f32 %v3132, %v3479
    %v3519 = vmul.f32 %v3147, %v3481
    %v3520 = vmul.f32 %v3162, %v3483
    %v3521 = vmul.f32 %v3177, %v3485
    %v3522 = vmul.f32 %v3192, %v3487
    %v3523 = vmul.f32 %v3207, %v3489
    %v3524 = vmul.f32 %v3222, %v3491
    %v3525 = vmul.f32 %v3237, %v3493
    %v3526 = vld [vmem:[#allocation2 + $0x4] sm:$0x1]
    %v3527 = vld [vmem:[#allocation2 + $0xc] sm:$0x1]
    %v3528 = vld [vmem:[#allocation2 + $0x14] sm:$0x1]
    %v3529 = vld [vmem:[#allocation2 + $0x1c] sm:$0x1]
    %v3530 = vld [vmem:[#allocation2 + $0x24] sm:$0x1]
    %v3531 = vld [vmem:[#allocation2 + $0x2c] sm:$0x1]
    %v3532 = vld [vmem:[#allocation2 + $0x34] sm:$0x1]
    %v3533 = vld [vmem:[#allocation2 + $0x3c] sm:$0x1]
    %v3534 = vld [vmem:[#allocation2 + $0x44] sm:$0x1]
    %v3535 = vld [vmem:[#allocation2 + $0x4c] sm:$0x1]
    %v3536 = vld [vmem:[#allocation2 + $0x54] sm:$0x1]
    %v3537 = vld [vmem:[#allocation2 + $0x5c] sm:$0x1]
    %v3538 = vld [vmem:[#allocation2 + $0x64] sm:$0x1]
    %v3539 = vld [vmem:[#allocation2 + $0x6c] sm:$0x1]
    %v3540 = vld [vmem:[#allocation2 + $0x74] sm:$0x1]
    %v3541 = vld [vmem:[#allocation2 + $0x7c] sm:$0x1]
    %3542 = vset.pattern.permute.xlu0 4
    %3543 = vperm.xlu0 %3542, %v360
    %v3544 = vpop.permute.xlu0 %3543
    %3545 = vset.pattern.permute.xlu0 4
    %3546 = vperm.xlu0 %3545, %v361
    %v3547 = vpop.permute.xlu0 %3546
    %v3548 = vrot.slane %v3544, 1
    %v3549 = vrot.slane %v3544, 2
    %v3550 = vrot.slane %v3544, 3
    %v3551 = vrot.slane %v3544, 4
    %v3552 = vrot.slane %v3544, 5
    %v3553 = vrot.slane %v3544, 6
    %v3554 = vrot.slane %v3544, 7
    %v3555 = vrot.slane %v3547, 1
    %v3556 = vrot.slane %v3547, 2
    %v3557 = vrot.slane %v3547, 3
    %v3558 = vrot.slane %v3547, 4
    %v3559 = vrot.slane %v3547, 5
    %v3560 = vrot.slane %v3547, 6
    %v3561 = vrot.slane %v3547, 7
    %v3578 = vmul.f32 %v3526, %v3544
    %v3579 = vmul.f32 %v3527, %v3548
    %v3580 = vmul.f32 %v3528, %v3549
    %v3581 = vmul.f32 %v3529, %v3550
    %v3582 = vmul.f32 %v3530, %v3551
    %v3583 = vmul.f32 %v3531, %v3552
    %v3584 = vmul.f32 %v3532, %v3553
    %v3585 = vmul.f32 %v3533, %v3554
    %v3586 = vmul.f32 %v3534, %v3547
    %v3587 = vmul.f32 %v3535, %v3555
    %v3588 = vmul.f32 %v3536, %v3556
    %v3589 = vmul.f32 %v3537, %v3557
    %v3590 = vmul.f32 %v3538, %v3558
    %v3591 = vmul.f32 %v3539, %v3559
    %v3592 = vmul.f32 %v3540, %v3560
    %v3593 = vmul.f32 %v3541, %v3561
    %v3610 = vrot.slane %v3511, 7
    %v3611 = vsel %vm1207, %v3610, %v3510
    %v3612 = vrot.slane %v3512, 6
    %v3613 = vsel %vm1210, %v3612, %v3611
    %v3614 = vrot.slane %v3513, 5
    %v3615 = vsel %vm1213, %v3614, %v3613
    %v3616 = vrot.slane %v3514, 4
    %v3617 = vsel %vm1216, %v3616, %v3615
    %v3618 = vrot.slane %v3515, 3
    %v3619 = vsel %vm1219, %v3618, %v3617
    %v3620 = vrot.slane %v3516, 2
    %v3621 = vsel %vm1222, %v3620, %v3619
    %v3622 = vrot.slane %v3517, 1
    %v3623 = vsel %vm1225, %v3622, %v3621
    %v3624 = vrot.slane %v3519, 7
    %v3625 = vsel %vm1207, %v3624, %v3518
    %v3626 = vrot.slane %v3520, 6
    %v3627 = vsel %vm1210, %v3626, %v3625
    %v3628 = vrot.slane %v3521, 5
    %v3629 = vsel %vm1213, %v3628, %v3627
    %v3630 = vrot.slane %v3522, 4
    %v3631 = vsel %vm1216, %v3630, %v3629
    %v3632 = vrot.slane %v3523, 3
    %v3633 = vsel %vm1219, %v3632, %v3631
    %v3634 = vrot.slane %v3524, 2
    %v3635 = vsel %vm1222, %v3634, %v3633
    %v3636 = vrot.slane %v3525, 1
    %v3637 = vsel %vm1225, %v3636, %v3635
    %3638 = vrot.lane.b32.xlu0 %v3623, 32
    %v3639 = vpop.permute.xlu0 %3638
    %3640 = vrot.lane.b32.xlu0 %v3637, 32
    %v3641 = vpop.permute.xlu0 %3640
    %v3642 = vsel %vm230, %v3639, 0
    %v3644 = vsel %vm230, %v3641, 0
    %3646 = vmatpush.msra.mxu0 0.0
    %3647 = vmatpush.msra.mxu0 0.0
    %3648 = vmatpush.msra.mxu0 0.0
    %3649 = vmatpush.msra.mxu0 0.0
    %3650 = vmatpush.msra.mxu0 0.0
    %3651 = vmatpush.msra.mxu0 0.0
    %3652 = vmatpush.msra.mxu0 0.0
    %3653 = vmatpush.msra.mxu0 0.0
    %3654 = vmatpush.msra.mxu0 0.0
    %3655 = vmatpush.msra.mxu0 0.0
    %3656 = vmatpush.msra.mxu0 0.0
    %3657 = vmatpush.msra.mxu0 0.0
    %3658 = vmatpush.msra.mxu0 %v365
    %3659 = vmatpush.msra.mxu0 %v364
    %3660 = vmatpush.msra.mxu0 %v363
    %3661 = vmatpush.msra.mxu0 %v362
    %3662 = vmatmul.f32.gmra.mxu0 %v3642
    %v3663 = vpop.f32.mrf.mxu0
    %v3664 = vadd.f32 0.0, %v3663
    %3665 = vmatmul.f32.gmra.mxu0 %v3644
    %v3666 = vpop.f32.mrf.mxu0
    %v3667 = vadd.f32 0.0, %v3666
    %3668 = vdwg.mxu0
    %v3671 = vrot.slane %v3664, 1
    %v3672 = vrot.slane %v3664, 2
    %v3673 = vrot.slane %v3664, 3
    %v3674 = vrot.slane %v3664, 4
    %v3675 = vrot.slane %v3664, 5
    %v3676 = vrot.slane %v3664, 6
    %v3677 = vrot.slane %v3664, 7
    %v3678 = vrot.slane %v3667, 1
    %v3679 = vrot.slane %v3667, 2
    %v3680 = vrot.slane %v3667, 3
    %v3681 = vrot.slane %v3667, 4
    %v3682 = vrot.slane %v3667, 5
    %v3683 = vrot.slane %v3667, 6
    %v3684 = vrot.slane %v3667, 7
    %v3701 = vadd.f32 %v3578, %v3664
    %v3702 = vadd.f32 %v3579, %v3671
    %v3703 = vadd.f32 %v3580, %v3672
    %v3704 = vadd.f32 %v3581, %v3673
    %v3705 = vadd.f32 %v3582, %v3674
    %v3706 = vadd.f32 %v3583, %v3675
    %v3707 = vadd.f32 %v3584, %v3676
    %v3708 = vadd.f32 %v3585, %v3677
    %v3709 = vadd.f32 %v3586, %v3667
    %v3710 = vadd.f32 %v3587, %v3678
    %v3711 = vadd.f32 %v3588, %v3679
    %v3712 = vadd.f32 %v3589, %v3680
    %v3713 = vadd.f32 %v3590, %v3681
    %v3714 = vadd.f32 %v3591, %v3682
    %v3715 = vadd.f32 %v3592, %v3683
    %v3716 = vadd.f32 %v3593, %v3684
    %v3717 = vadd.f32 %v3701, %v512
    %v3718 = vadd.f32 %v3702, %v512
    %v3719 = vadd.f32 %v3703, %v512
    %v3720 = vadd.f32 %v3704, %v512
    %v3721 = vadd.f32 %v3705, %v512
    %v3722 = vadd.f32 %v3706, %v512
    %v3723 = vadd.f32 %v3707, %v512
    %v3724 = vadd.f32 %v3708, %v512
    %v3725 = vadd.f32 %v3709, %v512
    %v3726 = vadd.f32 %v3710, %v512
    %v3727 = vadd.f32 %v3711, %v512
    %v3728 = vadd.f32 %v3712, %v512
    %v3729 = vadd.f32 %v3713, %v512
    %v3730 = vadd.f32 %v3714, %v512
    %v3731 = vadd.f32 %v3715, %v512
    %v3732 = vadd.f32 %v3716, %v512
    %v3733 = vxor.u32 %v3717, 2147483648
    %v3734 = vxor.u32 %v3718, 2147483648
    %v3735 = vxor.u32 %v3719, 2147483648
    %v3736 = vxor.u32 %v3720, 2147483648
    %v3737 = vxor.u32 %v3721, 2147483648
    %v3738 = vxor.u32 %v3722, 2147483648
    %v3739 = vxor.u32 %v3723, 2147483648
    %v3740 = vxor.u32 %v3724, 2147483648
    %v3741 = vxor.u32 %v3725, 2147483648
    %v3742 = vxor.u32 %v3726, 2147483648
    %v3743 = vxor.u32 %v3727, 2147483648
    %v3744 = vxor.u32 %v3728, 2147483648
    %v3745 = vxor.u32 %v3729, 2147483648
    %v3746 = vxor.u32 %v3730, 2147483648
    %v3747 = vxor.u32 %v3731, 2147483648
    %v3748 = vxor.u32 %v3732, 2147483648
    %v3749 = vmul.f32 %v3733, 1.442695
    %v3750 = vpow.pop %v3749
    %v3751 = vmul.f32 %v3734, 1.442695
    %v3752 = vpow.pop %v3751
    %v3753 = vmul.f32 %v3735, 1.442695
    %v3754 = vpow.pop %v3753
    %v3755 = vmul.f32 %v3736, 1.442695
    %v3756 = vpow.pop %v3755
    %v3757 = vmul.f32 %v3737, 1.442695
    %v3758 = vpow.pop %v3757
    %v3759 = vmul.f32 %v3738, 1.442695
    %v3760 = vpow.pop %v3759
    %v3761 = vmul.f32 %v3739, 1.442695
    %v3762 = vpow.pop %v3761
    %v3763 = vmul.f32 %v3740, 1.442695
    %v3764 = vpow.pop %v3763
    %v3765 = vmul.f32 %v3741, 1.442695
    %v3766 = vpow.pop %v3765
    %v3767 = vmul.f32 %v3742, 1.442695
    %v3768 = vpow.pop %v3767
    %v3769 = vmul.f32 %v3743, 1.442695
    %v3770 = vpow.pop %v3769
    %v3771 = vmul.f32 %v3744, 1.442695
    %v3772 = vpow.pop %v3771
    %v3773 = vmul.f32 %v3745, 1.442695
    %v3774 = vpow.pop %v3773
    %v3775 = vmul.f32 %v3746, 1.442695
    %v3776 = vpow.pop %v3775
    %v3777 = vmul.f32 %v3747, 1.442695
    %v3778 = vpow.pop %v3777
    %v3779 = vmul.f32 %v3748, 1.442695
    %v3780 = vpow.pop %v3779
    %v3781 = vadd.f32 %v3750, 1.0
    %v3782 = vadd.f32 %v3752, 1.0
    %v3783 = vadd.f32 %v3754, 1.0
    %v3784 = vadd.f32 %v3756, 1.0
    %v3785 = vadd.f32 %v3758, 1.0
    %v3786 = vadd.f32 %v3760, 1.0
    %v3787 = vadd.f32 %v3762, 1.0
    %v3788 = vadd.f32 %v3764, 1.0
    %v3789 = vadd.f32 %v3766, 1.0
    %v3790 = vadd.f32 %v3768, 1.0
    %v3791 = vadd.f32 %v3770, 1.0
    %v3792 = vadd.f32 %v3772, 1.0
    %v3793 = vadd.f32 %v3774, 1.0
    %v3794 = vadd.f32 %v3776, 1.0
    %v3795 = vadd.f32 %v3778, 1.0
    %v3796 = vadd.f32 %v3780, 1.0
    %v3797 = vrcp.pop %v3781
    %v3798 = vmul.f32 %v3781, %v3797
    %v3799 = vsub.f32 1.0, %v3798
    %v3800 = vmul.f32 %v3797, %v3799
    %v3801 = vadd.f32 %v3797, %v3800
    %vm3802 = vweird.f32 %v3781
    %vm3803 = vweird.f32 %v3797
    %vm3804 = vmor %vm3802, %vm3803
    %v3805 = vsel %vm3804, %v3797, %v3801
    %v3806 = vand.u32 2147483647, %v3781
    %vm3807 = vcmp.eq.f32.partialorder %v3806, 8.507059e+37
    %v3808 = vand.u32 %v3781, 2147483648
    %v3809 = vor.u32 1.1754944e-38, %v3808
    %v3810 = vsel %vm3807, %v3809, %v3805
    %v3811 = vmul.f32 1.0, %v3810
    %v3812 = vrcp.pop %v3782
    %v3813 = vmul.f32 %v3782, %v3812
    %v3814 = vsub.f32 1.0, %v3813
    %v3815 = vmul.f32 %v3812, %v3814
    %v3816 = vadd.f32 %v3812, %v3815
    %vm3817 = vweird.f32 %v3782
    %vm3818 = vweird.f32 %v3812
    %vm3819 = vmor %vm3817, %vm3818
    %v3820 = vsel %vm3819, %v3812, %v3816
    %v3821 = vand.u32 2147483647, %v3782
    %vm3822 = vcmp.eq.f32.partialorder %v3821, 8.507059e+37
    %v3823 = vand.u32 %v3782, 2147483648
    %v3824 = vor.u32 1.1754944e-38, %v3823
    %v3825 = vsel %vm3822, %v3824, %v3820
    %v3826 = vmul.f32 1.0, %v3825
    %v3827 = vrcp.pop %v3783
    %v3828 = vmul.f32 %v3783, %v3827
    %v3829 = vsub.f32 1.0, %v3828
    %v3830 = vmul.f32 %v3827, %v3829
    %v3831 = vadd.f32 %v3827, %v3830
    %vm3832 = vweird.f32 %v3783
    %vm3833 = vweird.f32 %v3827
    %vm3834 = vmor %vm3832, %vm3833
    %v3835 = vsel %vm3834, %v3827, %v3831
    %v3836 = vand.u32 2147483647, %v3783
    %vm3837 = vcmp.eq.f32.partialorder %v3836, 8.507059e+37
    %v3838 = vand.u32 %v3783, 2147483648
    %v3839 = vor.u32 1.1754944e-38, %v3838
    %v3840 = vsel %vm3837, %v3839, %v3835
    %v3841 = vmul.f32 1.0, %v3840
    %v3842 = vrcp.pop %v3784
    %v3843 = vmul.f32 %v3784, %v3842
    %v3844 = vsub.f32 1.0, %v3843
    %v3845 = vmul.f32 %v3842, %v3844
    %v3846 = vadd.f32 %v3842, %v3845
    %vm3847 = vweird.f32 %v3784
    %vm3848 = vweird.f32 %v3842
    %vm3849 = vmor %vm3847, %vm3848
    %v3850 = vsel %vm3849, %v3842, %v3846
    %v3851 = vand.u32 2147483647, %v3784
    %vm3852 = vcmp.eq.f32.partialorder %v3851, 8.507059e+37
    %v3853 = vand.u32 %v3784, 2147483648
    %v3854 = vor.u32 1.1754944e-38, %v3853
    %v3855 = vsel %vm3852, %v3854, %v3850
    %v3856 = vmul.f32 1.0, %v3855
    %v3857 = vrcp.pop %v3785
    %v3858 = vmul.f32 %v3785, %v3857
    %v3859 = vsub.f32 1.0, %v3858
    %v3860 = vmul.f32 %v3857, %v3859
    %v3861 = vadd.f32 %v3857, %v3860
    %vm3862 = vweird.f32 %v3785
    %vm3863 = vweird.f32 %v3857
    %vm3864 = vmor %vm3862, %vm3863
    %v3865 = vsel %vm3864, %v3857, %v3861
    %v3866 = vand.u32 2147483647, %v3785
    %vm3867 = vcmp.eq.f32.partialorder %v3866, 8.507059e+37
    %v3868 = vand.u32 %v3785, 2147483648
    %v3869 = vor.u32 1.1754944e-38, %v3868
    %v3870 = vsel %vm3867, %v3869, %v3865
    %v3871 = vmul.f32 1.0, %v3870
    %v3872 = vrcp.pop %v3786
    %v3873 = vmul.f32 %v3786, %v3872
    %v3874 = vsub.f32 1.0, %v3873
    %v3875 = vmul.f32 %v3872, %v3874
    %v3876 = vadd.f32 %v3872, %v3875
    %vm3877 = vweird.f32 %v3786
    %vm3878 = vweird.f32 %v3872
    %vm3879 = vmor %vm3877, %vm3878
    %v3880 = vsel %vm3879, %v3872, %v3876
    %v3881 = vand.u32 2147483647, %v3786
    %vm3882 = vcmp.eq.f32.partialorder %v3881, 8.507059e+37
    %v3883 = vand.u32 %v3786, 2147483648
    %v3884 = vor.u32 1.1754944e-38, %v3883
    %v3885 = vsel %vm3882, %v3884, %v3880
    %v3886 = vmul.f32 1.0, %v3885
    %v3887 = vrcp.pop %v3787
    %v3888 = vmul.f32 %v3787, %v3887
    %v3889 = vsub.f32 1.0, %v3888
    %v3890 = vmul.f32 %v3887, %v3889
    %v3891 = vadd.f32 %v3887, %v3890
    %vm3892 = vweird.f32 %v3787
    %vm3893 = vweird.f32 %v3887
    %vm3894 = vmor %vm3892, %vm3893
    %v3895 = vsel %vm3894, %v3887, %v3891
    %v3896 = vand.u32 2147483647, %v3787
    %vm3897 = vcmp.eq.f32.partialorder %v3896, 8.507059e+37
    %v3898 = vand.u32 %v3787, 2147483648
    %v3899 = vor.u32 1.1754944e-38, %v3898
    %v3900 = vsel %vm3897, %v3899, %v3895
    %v3901 = vmul.f32 1.0, %v3900
    %v3902 = vrcp.pop %v3788
    %v3903 = vmul.f32 %v3788, %v3902
    %v3904 = vsub.f32 1.0, %v3903
    %v3905 = vmul.f32 %v3902, %v3904
    %v3906 = vadd.f32 %v3902, %v3905
    %vm3907 = vweird.f32 %v3788
    %vm3908 = vweird.f32 %v3902
    %vm3909 = vmor %vm3907, %vm3908
    %v3910 = vsel %vm3909, %v3902, %v3906
    %v3911 = vand.u32 2147483647, %v3788
    %vm3912 = vcmp.eq.f32.partialorder %v3911, 8.507059e+37
    %v3913 = vand.u32 %v3788, 2147483648
    %v3914 = vor.u32 1.1754944e-38, %v3913
    %v3915 = vsel %vm3912, %v3914, %v3910
    %v3916 = vmul.f32 1.0, %v3915
    %v3917 = vrcp.pop %v3789
    %v3918 = vmul.f32 %v3789, %v3917
    %v3919 = vsub.f32 1.0, %v3918
    %v3920 = vmul.f32 %v3917, %v3919
    %v3921 = vadd.f32 %v3917, %v3920
    %vm3922 = vweird.f32 %v3789
    %vm3923 = vweird.f32 %v3917
    %vm3924 = vmor %vm3922, %vm3923
    %v3925 = vsel %vm3924, %v3917, %v3921
    %v3926 = vand.u32 2147483647, %v3789
    %vm3927 = vcmp.eq.f32.partialorder %v3926, 8.507059e+37
    %v3928 = vand.u32 %v3789, 2147483648
    %v3929 = vor.u32 1.1754944e-38, %v3928
    %v3930 = vsel %vm3927, %v3929, %v3925
    %v3931 = vmul.f32 1.0, %v3930
    %v3932 = vrcp.pop %v3790
    %v3933 = vmul.f32 %v3790, %v3932
    %v3934 = vsub.f32 1.0, %v3933
    %v3935 = vmul.f32 %v3932, %v3934
    %v3936 = vadd.f32 %v3932, %v3935
    %vm3937 = vweird.f32 %v3790
    %vm3938 = vweird.f32 %v3932
    %vm3939 = vmor %vm3937, %vm3938
    %v3940 = vsel %vm3939, %v3932, %v3936
    %v3941 = vand.u32 2147483647, %v3790
    %vm3942 = vcmp.eq.f32.partialorder %v3941, 8.507059e+37
    %v3943 = vand.u32 %v3790, 2147483648
    %v3944 = vor.u32 1.1754944e-38, %v3943
    %v3945 = vsel %vm3942, %v3944, %v3940
    %v3946 = vmul.f32 1.0, %v3945
    %v3947 = vrcp.pop %v3791
    %v3948 = vmul.f32 %v3791, %v3947
    %v3949 = vsub.f32 1.0, %v3948
    %v3950 = vmul.f32 %v3947, %v3949
    %v3951 = vadd.f32 %v3947, %v3950
    %vm3952 = vweird.f32 %v3791
    %vm3953 = vweird.f32 %v3947
    %vm3954 = vmor %vm3952, %vm3953
    %v3955 = vsel %vm3954, %v3947, %v3951
    %v3956 = vand.u32 2147483647, %v3791
    %vm3957 = vcmp.eq.f32.partialorder %v3956, 8.507059e+37
    %v3958 = vand.u32 %v3791, 2147483648
    %v3959 = vor.u32 1.1754944e-38, %v3958
    %v3960 = vsel %vm3957, %v3959, %v3955
    %v3961 = vmul.f32 1.0, %v3960
    %v3962 = vrcp.pop %v3792
    %v3963 = vmul.f32 %v3792, %v3962
    %v3964 = vsub.f32 1.0, %v3963
    %v3965 = vmul.f32 %v3962, %v3964
    %v3966 = vadd.f32 %v3962, %v3965
    %vm3967 = vweird.f32 %v3792
    %vm3968 = vweird.f32 %v3962
    %vm3969 = vmor %vm3967, %vm3968
    %v3970 = vsel %vm3969, %v3962, %v3966
    %v3971 = vand.u32 2147483647, %v3792
    %vm3972 = vcmp.eq.f32.partialorder %v3971, 8.507059e+37
    %v3973 = vand.u32 %v3792, 2147483648
    %v3974 = vor.u32 1.1754944e-38, %v3973
    %v3975 = vsel %vm3972, %v3974, %v3970
    %v3976 = vmul.f32 1.0, %v3975
    %v3977 = vrcp.pop %v3793
    %v3978 = vmul.f32 %v3793, %v3977
    %v3979 = vsub.f32 1.0, %v3978
    %v3980 = vmul.f32 %v3977, %v3979
    %v3981 = vadd.f32 %v3977, %v3980
    %vm3982 = vweird.f32 %v3793
    %vm3983 = vweird.f32 %v3977
    %vm3984 = vmor %vm3982, %vm3983
    %v3985 = vsel %vm3984, %v3977, %v3981
    %v3986 = vand.u32 2147483647, %v3793
    %vm3987 = vcmp.eq.f32.partialorder %v3986, 8.507059e+37
    %v3988 = vand.u32 %v3793, 2147483648
    %v3989 = vor.u32 1.1754944e-38, %v3988
    %v3990 = vsel %vm3987, %v3989, %v3985
    %v3991 = vmul.f32 1.0, %v3990
    %v3992 = vrcp.pop %v3794
    %v3993 = vmul.f32 %v3794, %v3992
    %v3994 = vsub.f32 1.0, %v3993
    %v3995 = vmul.f32 %v3992, %v3994
    %v3996 = vadd.f32 %v3992, %v3995
    %vm3997 = vweird.f32 %v3794
    %vm3998 = vweird.f32 %v3992
    %vm3999 = vmor %vm3997, %vm3998
    %v4000 = vsel %vm3999, %v3992, %v3996
    %v4001 = vand.u32 2147483647, %v3794
    %vm4002 = vcmp.eq.f32.partialorder %v4001, 8.507059e+37
    %v4003 = vand.u32 %v3794, 2147483648
    %v4004 = vor.u32 1.1754944e-38, %v4003
    %v4005 = vsel %vm4002, %v4004, %v4000
    %v4006 = vmul.f32 1.0, %v4005
    %v4007 = vrcp.pop %v3795
    %v4008 = vmul.f32 %v3795, %v4007
    %v4009 = vsub.f32 1.0, %v4008
    %v4010 = vmul.f32 %v4007, %v4009
    %v4011 = vadd.f32 %v4007, %v4010
    %vm4012 = vweird.f32 %v3795
    %vm4013 = vweird.f32 %v4007
    %vm4014 = vmor %vm4012, %vm4013
    %v4015 = vsel %vm4014, %v4007, %v4011
    %v4016 = vand.u32 2147483647, %v3795
    %vm4017 = vcmp.eq.f32.partialorder %v4016, 8.507059e+37
    %v4018 = vand.u32 %v3795, 2147483648
    %v4019 = vor.u32 1.1754944e-38, %v4018
    %v4020 = vsel %vm4017, %v4019, %v4015
    %v4021 = vmul.f32 1.0, %v4020
    %v4022 = vrcp.pop %v3796
    %v4023 = vmul.f32 %v3796, %v4022
    %v4024 = vsub.f32 1.0, %v4023
    %v4025 = vmul.f32 %v4022, %v4024
    %v4026 = vadd.f32 %v4022, %v4025
    %vm4027 = vweird.f32 %v3796
    %vm4028 = vweird.f32 %v4022
    %vm4029 = vmor %vm4027, %vm4028
    %v4030 = vsel %vm4029, %v4022, %v4026
    %v4031 = vand.u32 2147483647, %v3796
    %vm4032 = vcmp.eq.f32.partialorder %v4031, 8.507059e+37
    %v4033 = vand.u32 %v3796, 2147483648
    %v4034 = vor.u32 1.1754944e-38, %v4033
    %v4035 = vsel %vm4032, %v4034, %v4030
    %v4036 = vmul.f32 1.0, %v4035
    %v4037 = vtanh.pop %v3717
    %v4038 = vtanh.pop %v3718
    %v4039 = vtanh.pop %v3719
    %v4040 = vtanh.pop %v3720
    %v4041 = vtanh.pop %v3721
    %v4042 = vtanh.pop %v3722
    %v4043 = vtanh.pop %v3723
    %v4044 = vtanh.pop %v3724
    %v4045 = vtanh.pop %v3725
    %v4046 = vtanh.pop %v3726
    %v4047 = vtanh.pop %v3727
    %v4048 = vtanh.pop %v3728
    %v4049 = vtanh.pop %v3729
    %v4050 = vtanh.pop %v3730
    %v4051 = vtanh.pop %v3731
    %v4052 = vtanh.pop %v3732
    %v4053 = vmul.f32 %v3811, %v3414
    %v4054 = vmul.f32 %v3826, %v3415
    %v4055 = vmul.f32 %v3841, %v3416
    %v4056 = vmul.f32 %v3856, %v3417
    %v4057 = vmul.f32 %v3871, %v3418
    %v4058 = vmul.f32 %v3886, %v3419
    %v4059 = vmul.f32 %v3901, %v3420
    %v4060 = vmul.f32 %v3916, %v3421
    %v4061 = vmul.f32 %v3931, %v3422
    %v4062 = vmul.f32 %v3946, %v3423
    %v4063 = vmul.f32 %v3961, %v3424
    %v4064 = vmul.f32 %v3976, %v3425
    %v4065 = vmul.f32 %v3991, %v3426
    %v4066 = vmul.f32 %v4006, %v3427
    %v4067 = vmul.f32 %v4021, %v3428
    %v4068 = vmul.f32 %v4036, %v3429
    %4085 = vrot.lane.b32.xlu0 %v4037, 64
    %v4086 = vpop.permute.xlu0 %4085
    %4087 = vrot.lane.b32.xlu0 %v4038, 64
    %v4088 = vpop.permute.xlu0 %4087
    %4089 = vrot.lane.b32.xlu0 %v4039, 64
    %v4090 = vpop.permute.xlu0 %4089
    %4091 = vrot.lane.b32.xlu0 %v4040, 64
    %v4092 = vpop.permute.xlu0 %4091
    %4093 = vrot.lane.b32.xlu0 %v4041, 64
    %v4094 = vpop.permute.xlu0 %4093
    %4095 = vrot.lane.b32.xlu0 %v4042, 64
    %v4096 = vpop.permute.xlu0 %4095
    %4097 = vrot.lane.b32.xlu0 %v4043, 64
    %v4098 = vpop.permute.xlu0 %4097
    %4099 = vrot.lane.b32.xlu0 %v4044, 64
    %v4100 = vpop.permute.xlu0 %4099
    %4101 = vrot.lane.b32.xlu0 %v4045, 64
    %v4102 = vpop.permute.xlu0 %4101
    %4103 = vrot.lane.b32.xlu0 %v4046, 64
    %v4104 = vpop.permute.xlu0 %4103
    %4105 = vrot.lane.b32.xlu0 %v4047, 64
    %v4106 = vpop.permute.xlu0 %4105
    %4107 = vrot.lane.b32.xlu0 %v4048, 64
    %v4108 = vpop.permute.xlu0 %4107
    %4109 = vrot.lane.b32.xlu0 %v4049, 64
    %v4110 = vpop.permute.xlu0 %4109
    %4111 = vrot.lane.b32.xlu0 %v4050, 64
    %v4112 = vpop.permute.xlu0 %4111
    %4113 = vrot.lane.b32.xlu0 %v4051, 64
    %v4114 = vpop.permute.xlu0 %4113
    %4115 = vrot.lane.b32.xlu0 %v4052, 64
    %v4116 = vpop.permute.xlu0 %4115
    %v4133 = vmul.f32 %v3811, %v4086
    %v4134 = vmul.f32 %v3826, %v4088
    %v4135 = vmul.f32 %v3841, %v4090
    %v4136 = vmul.f32 %v3856, %v4092
    %v4137 = vmul.f32 %v3871, %v4094
    %v4138 = vmul.f32 %v3886, %v4096
    %v4139 = vmul.f32 %v3901, %v4098
    %v4140 = vmul.f32 %v3916, %v4100
    %v4141 = vmul.f32 %v3931, %v4102
    %v4142 = vmul.f32 %v3946, %v4104
    %v4143 = vmul.f32 %v3961, %v4106
    %v4144 = vmul.f32 %v3976, %v4108
    %v4145 = vmul.f32 %v3991, %v4110
    %v4146 = vmul.f32 %v4006, %v4112
    %v4147 = vmul.f32 %v4021, %v4114
    %v4148 = vmul.f32 %v4036, %v4116
    %4165 = vrot.lane.b32.xlu0 %v4133, 32
    %v4166 = vpop.permute.xlu0 %4165
    %4167 = vrot.lane.b32.xlu0 %v4134, 32
    %v4168 = vpop.permute.xlu0 %4167
    %4169 = vrot.lane.b32.xlu0 %v4135, 32
    %v4170 = vpop.permute.xlu0 %4169
    %4171 = vrot.lane.b32.xlu0 %v4136, 32
    %v4172 = vpop.permute.xlu0 %4171
    %4173 = vrot.lane.b32.xlu0 %v4137, 32
    %v4174 = vpop.permute.xlu0 %4173
    %4175 = vrot.lane.b32.xlu0 %v4138, 32
    %v4176 = vpop.permute.xlu0 %4175
    %4177 = vrot.lane.b32.xlu0 %v4139, 32
    %v4178 = vpop.permute.xlu0 %4177
    %4179 = vrot.lane.b32.xlu0 %v4140, 32
    %v4180 = vpop.permute.xlu0 %4179
    %4181 = vrot.lane.b32.xlu0 %v4141, 32
    %v4182 = vpop.permute.xlu0 %4181
    %4183 = vrot.lane.b32.xlu0 %v4142, 32
    %v4184 = vpop.permute.xlu0 %4183
    %4185 = vrot.lane.b32.xlu0 %v4143, 32
    %v4186 = vpop.permute.xlu0 %4185
    %4187 = vrot.lane.b32.xlu0 %v4144, 32
    %v4188 = vpop.permute.xlu0 %4187
    %4189 = vrot.lane.b32.xlu0 %v4145, 32
    %v4190 = vpop.permute.xlu0 %4189
    %4191 = vrot.lane.b32.xlu0 %v4146, 32
    %v4192 = vpop.permute.xlu0 %4191
    %4193 = vrot.lane.b32.xlu0 %v4147, 32
    %v4194 = vpop.permute.xlu0 %4193
    %4195 = vrot.lane.b32.xlu0 %v4148, 32
    %v4196 = vpop.permute.xlu0 %4195
    %v4213 = vadd.f32 %v4053, %v4166
    %v4214 = vadd.f32 %v4054, %v4168
    %v4215 = vadd.f32 %v4055, %v4170
    %v4216 = vadd.f32 %v4056, %v4172
    %v4217 = vadd.f32 %v4057, %v4174
    %v4218 = vadd.f32 %v4058, %v4176
    %v4219 = vadd.f32 %v4059, %v4178
    %v4220 = vadd.f32 %v4060, %v4180
    %v4221 = vadd.f32 %v4061, %v4182
    %v4222 = vadd.f32 %v4062, %v4184
    %v4223 = vadd.f32 %v4063, %v4186
    %v4224 = vadd.f32 %v4064, %v4188
    %v4225 = vadd.f32 %v4065, %v4190
    %v4226 = vadd.f32 %v4066, %v4192
    %v4227 = vadd.f32 %v4067, %v4194
    %v4228 = vadd.f32 %v4068, %v4196
    %v4229 = vtanh.pop %v4213
    %v4230 = vtanh.pop %v4214
    %v4231 = vtanh.pop %v4215
    %v4232 = vtanh.pop %v4216
    %v4233 = vtanh.pop %v4217
    %v4234 = vtanh.pop %v4218
    %v4235 = vtanh.pop %v4219
    %v4236 = vtanh.pop %v4220
    %v4237 = vtanh.pop %v4221
    %v4238 = vtanh.pop %v4222
    %v4239 = vtanh.pop %v4223
    %v4240 = vtanh.pop %v4224
    %v4241 = vtanh.pop %v4225
    %v4242 = vtanh.pop %v4226
    %v4243 = vtanh.pop %v4227
    %v4244 = vtanh.pop %v4228
    %4261 = vrot.lane.b32.xlu0 %v4229, 64
    %v4262 = vpop.permute.xlu0 %4261
    %4263 = vrot.lane.b32.xlu0 %v4230, 64
    %v4264 = vpop.permute.xlu0 %4263
    %4265 = vrot.lane.b32.xlu0 %v4231, 64
    %v4266 = vpop.permute.xlu0 %4265
    %4267 = vrot.lane.b32.xlu0 %v4232, 64
    %v4268 = vpop.permute.xlu0 %4267
    %4269 = vrot.lane.b32.xlu0 %v4233, 64
    %v4270 = vpop.permute.xlu0 %4269
    %4271 = vrot.lane.b32.xlu0 %v4234, 64
    %v4272 = vpop.permute.xlu0 %4271
    %4273 = vrot.lane.b32.xlu0 %v4235, 64
    %v4274 = vpop.permute.xlu0 %4273
    %4275 = vrot.lane.b32.xlu0 %v4236, 64
    %v4276 = vpop.permute.xlu0 %4275
    %4277 = vrot.lane.b32.xlu0 %v4237, 64
    %v4278 = vpop.permute.xlu0 %4277
    %4279 = vrot.lane.b32.xlu0 %v4238, 64
    %v4280 = vpop.permute.xlu0 %4279
    %4281 = vrot.lane.b32.xlu0 %v4239, 64
    %v4282 = vpop.permute.xlu0 %4281
    %4283 = vrot.lane.b32.xlu0 %v4240, 64
    %v4284 = vpop.permute.xlu0 %4283
    %4285 = vrot.lane.b32.xlu0 %v4241, 64
    %v4286 = vpop.permute.xlu0 %4285
    %4287 = vrot.lane.b32.xlu0 %v4242, 64
    %v4288 = vpop.permute.xlu0 %4287
    %4289 = vrot.lane.b32.xlu0 %v4243, 64
    %v4290 = vpop.permute.xlu0 %4289
    %4291 = vrot.lane.b32.xlu0 %v4244, 64
    %v4292 = vpop.permute.xlu0 %4291
    %v4309 = vmul.f32 %v3811, %v4262
    %v4310 = vmul.f32 %v3826, %v4264
    %v4311 = vmul.f32 %v3841, %v4266
    %v4312 = vmul.f32 %v3856, %v4268
    %v4313 = vmul.f32 %v3871, %v4270
    %v4314 = vmul.f32 %v3886, %v4272
    %v4315 = vmul.f32 %v3901, %v4274
    %v4316 = vmul.f32 %v3916, %v4276
    %v4317 = vmul.f32 %v3931, %v4278
    %v4318 = vmul.f32 %v3946, %v4280
    %v4319 = vmul.f32 %v3961, %v4282
    %v4320 = vmul.f32 %v3976, %v4284
    %v4321 = vmul.f32 %v3991, %v4286
    %v4322 = vmul.f32 %v4006, %v4288
    %v4323 = vmul.f32 %v4021, %v4290
    %v4324 = vmul.f32 %v4036, %v4292
    %v4325 = vld [vmem:[#allocation2 + $0x5] sm:$0x1]
    %v4326 = vld [vmem:[#allocation2 + $0xd] sm:$0x1]
    %v4327 = vld [vmem:[#allocation2 + $0x15] sm:$0x1]
    %v4328 = vld [vmem:[#allocation2 + $0x1d] sm:$0x1]
    %v4329 = vld [vmem:[#allocation2 + $0x25] sm:$0x1]
    %v4330 = vld [vmem:[#allocation2 + $0x2d] sm:$0x1]
    %v4331 = vld [vmem:[#allocation2 + $0x35] sm:$0x1]
    %v4332 = vld [vmem:[#allocation2 + $0x3d] sm:$0x1]
    %v4333 = vld [vmem:[#allocation2 + $0x45] sm:$0x1]
    %v4334 = vld [vmem:[#allocation2 + $0x4d] sm:$0x1]
    %v4335 = vld [vmem:[#allocation2 + $0x55] sm:$0x1]
    %v4336 = vld [vmem:[#allocation2 + $0x5d] sm:$0x1]
    %v4337 = vld [vmem:[#allocation2 + $0x65] sm:$0x1]
    %v4338 = vld [vmem:[#allocation2 + $0x6d] sm:$0x1]
    %v4339 = vld [vmem:[#allocation2 + $0x75] sm:$0x1]
    %v4340 = vld [vmem:[#allocation2 + $0x7d] sm:$0x1]
    %4341 = vset.pattern.permute.xlu0 5
    %4342 = vperm.xlu0 %4341, %v360
    %v4343 = vpop.permute.xlu0 %4342
    %4344 = vset.pattern.permute.xlu0 5
    %4345 = vperm.xlu0 %4344, %v361
    %v4346 = vpop.permute.xlu0 %4345
    %v4347 = vrot.slane %v4343, 1
    %v4348 = vrot.slane %v4343, 2
    %v4349 = vrot.slane %v4343, 3
    %v4350 = vrot.slane %v4343, 4
    %v4351 = vrot.slane %v4343, 5
    %v4352 = vrot.slane %v4343, 6
    %v4353 = vrot.slane %v4343, 7
    %v4354 = vrot.slane %v4346, 1
    %v4355 = vrot.slane %v4346, 2
    %v4356 = vrot.slane %v4346, 3
    %v4357 = vrot.slane %v4346, 4
    %v4358 = vrot.slane %v4346, 5
    %v4359 = vrot.slane %v4346, 6
    %v4360 = vrot.slane %v4346, 7
    %v4377 = vmul.f32 %v4325, %v4343
    %v4378 = vmul.f32 %v4326, %v4347
    %v4379 = vmul.f32 %v4327, %v4348
    %v4380 = vmul.f32 %v4328, %v4349
    %v4381 = vmul.f32 %v4329, %v4350
    %v4382 = vmul.f32 %v4330, %v4351
    %v4383 = vmul.f32 %v4331, %v4352
    %v4384 = vmul.f32 %v4332, %v4353
    %v4385 = vmul.f32 %v4333, %v4346
    %v4386 = vmul.f32 %v4334, %v4354
    %v4387 = vmul.f32 %v4335, %v4355
    %v4388 = vmul.f32 %v4336, %v4356
    %v4389 = vmul.f32 %v4337, %v4357
    %v4390 = vmul.f32 %v4338, %v4358
    %v4391 = vmul.f32 %v4339, %v4359
    %v4392 = vmul.f32 %v4340, %v4360
    %v4409 = vrot.slane %v4310, 7
    %v4410 = vsel %vm1207, %v4409, %v4309
    %v4411 = vrot.slane %v4311, 6
    %v4412 = vsel %vm1210, %v4411, %v4410
    %v4413 = vrot.slane %v4312, 5
    %v4414 = vsel %vm1213, %v4413, %v4412
    %v4415 = vrot.slane %v4313, 4
    %v4416 = vsel %vm1216, %v4415, %v4414
    %v4417 = vrot.slane %v4314, 3
    %v4418 = vsel %vm1219, %v4417, %v4416
    %v4419 = vrot.slane %v4315, 2
    %v4420 = vsel %vm1222, %v4419, %v4418
    %v4421 = vrot.slane %v4316, 1
    %v4422 = vsel %vm1225, %v4421, %v4420
    %v4423 = vrot.slane %v4318, 7
    %v4424 = vsel %vm1207, %v4423, %v4317
    %v4425 = vrot.slane %v4319, 6
    %v4426 = vsel %vm1210, %v4425, %v4424
    %v4427 = vrot.slane %v4320, 5
    %v4428 = vsel %vm1213, %v4427, %v4426
    %v4429 = vrot.slane %v4321, 4
    %v4430 = vsel %vm1216, %v4429, %v4428
    %v4431 = vrot.slane %v4322, 3
    %v4432 = vsel %vm1219, %v4431, %v4430
    %v4433 = vrot.slane %v4323, 2
    %v4434 = vsel %vm1222, %v4433, %v4432
    %v4435 = vrot.slane %v4324, 1
    %v4436 = vsel %vm1225, %v4435, %v4434
    %4437 = vrot.lane.b32.xlu0 %v4422, 32
    %v4438 = vpop.permute.xlu0 %4437
    %4439 = vrot.lane.b32.xlu0 %v4436, 32
    %v4440 = vpop.permute.xlu0 %4439
    %v4441 = vsel %vm230, %v4438, 0
    %v4443 = vsel %vm230, %v4440, 0
    %4445 = vmatpush.msra.mxu0 0.0
    %4446 = vmatpush.msra.mxu0 0.0
    %4447 = vmatpush.msra.mxu0 0.0
    %4448 = vmatpush.msra.mxu0 0.0
    %4449 = vmatpush.msra.mxu0 0.0
    %4450 = vmatpush.msra.mxu0 0.0
    %4451 = vmatpush.msra.mxu0 0.0
    %4452 = vmatpush.msra.mxu0 0.0
    %4453 = vmatpush.msra.mxu0 0.0
    %4454 = vmatpush.msra.mxu0 0.0
    %4455 = vmatpush.msra.mxu0 0.0
    %4456 = vmatpush.msra.mxu0 0.0
    %4457 = vmatpush.msra.mxu0 %v365
    %4458 = vmatpush.msra.mxu0 %v364
    %4459 = vmatpush.msra.mxu0 %v363
    %4460 = vmatpush.msra.mxu0 %v362
    %4461 = vmatmul.f32.gmra.mxu0 %v4441
    %v4462 = vpop.f32.mrf.mxu0
    %v4463 = vadd.f32 0.0, %v4462
    %4464 = vmatmul.f32.gmra.mxu0 %v4443
    %v4465 = vpop.f32.mrf.mxu0
    %v4466 = vadd.f32 0.0, %v4465
    %4467 = vdwg.mxu0
    %v4470 = vrot.slane %v4463, 1
    %v4471 = vrot.slane %v4463, 2
    %v4472 = vrot.slane %v4463, 3
    %v4473 = vrot.slane %v4463, 4
    %v4474 = vrot.slane %v4463, 5
    %v4475 = vrot.slane %v4463, 6
    %v4476 = vrot.slane %v4463, 7
    %v4477 = vrot.slane %v4466, 1
    %v4478 = vrot.slane %v4466, 2
    %v4479 = vrot.slane %v4466, 3
    %v4480 = vrot.slane %v4466, 4
    %v4481 = vrot.slane %v4466, 5
    %v4482 = vrot.slane %v4466, 6
    %v4483 = vrot.slane %v4466, 7
    %v4500 = vadd.f32 %v4377, %v4463
    %v4501 = vadd.f32 %v4378, %v4470
    %v4502 = vadd.f32 %v4379, %v4471
    %v4503 = vadd.f32 %v4380, %v4472
    %v4504 = vadd.f32 %v4381, %v4473
    %v4505 = vadd.f32 %v4382, %v4474
    %v4506 = vadd.f32 %v4383, %v4475
    %v4507 = vadd.f32 %v4384, %v4476
    %v4508 = vadd.f32 %v4385, %v4466
    %v4509 = vadd.f32 %v4386, %v4477
    %v4510 = vadd.f32 %v4387, %v4478
    %v4511 = vadd.f32 %v4388, %v4479
    %v4512 = vadd.f32 %v4389, %v4480
    %v4513 = vadd.f32 %v4390, %v4481
    %v4514 = vadd.f32 %v4391, %v4482
    %v4515 = vadd.f32 %v4392, %v4483
    %v4516 = vadd.f32 %v4500, %v512
    %v4517 = vadd.f32 %v4501, %v512
    %v4518 = vadd.f32 %v4502, %v512
    %v4519 = vadd.f32 %v4503, %v512
    %v4520 = vadd.f32 %v4504, %v512
    %v4521 = vadd.f32 %v4505, %v512
    %v4522 = vadd.f32 %v4506, %v512
    %v4523 = vadd.f32 %v4507, %v512
    %v4524 = vadd.f32 %v4508, %v512
    %v4525 = vadd.f32 %v4509, %v512
    %v4526 = vadd.f32 %v4510, %v512
    %v4527 = vadd.f32 %v4511, %v512
    %v4528 = vadd.f32 %v4512, %v512
    %v4529 = vadd.f32 %v4513, %v512
    %v4530 = vadd.f32 %v4514, %v512
    %v4531 = vadd.f32 %v4515, %v512
    %v4532 = vxor.u32 %v4516, 2147483648
    %v4533 = vxor.u32 %v4517, 2147483648
    %v4534 = vxor.u32 %v4518, 2147483648
    %v4535 = vxor.u32 %v4519, 2147483648
    %v4536 = vxor.u32 %v4520, 2147483648
    %v4537 = vxor.u32 %v4521, 2147483648
    %v4538 = vxor.u32 %v4522, 2147483648
    %v4539 = vxor.u32 %v4523, 2147483648
    %v4540 = vxor.u32 %v4524, 2147483648
    %v4541 = vxor.u32 %v4525, 2147483648
    %v4542 = vxor.u32 %v4526, 2147483648
    %v4543 = vxor.u32 %v4527, 2147483648
    %v4544 = vxor.u32 %v4528, 2147483648
    %v4545 = vxor.u32 %v4529, 2147483648
    %v4546 = vxor.u32 %v4530, 2147483648
    %v4547 = vxor.u32 %v4531, 2147483648
    %v4548 = vmul.f32 %v4532, 1.442695
    %v4549 = vpow.pop %v4548
    %v4550 = vmul.f32 %v4533, 1.442695
    %v4551 = vpow.pop %v4550
    %v4552 = vmul.f32 %v4534, 1.442695
    %v4553 = vpow.pop %v4552
    %v4554 = vmul.f32 %v4535, 1.442695
    %v4555 = vpow.pop %v4554
    %v4556 = vmul.f32 %v4536, 1.442695
    %v4557 = vpow.pop %v4556
    %v4558 = vmul.f32 %v4537, 1.442695
    %v4559 = vpow.pop %v4558
    %v4560 = vmul.f32 %v4538, 1.442695
    %v4561 = vpow.pop %v4560
    %v4562 = vmul.f32 %v4539, 1.442695
    %v4563 = vpow.pop %v4562
    %v4564 = vmul.f32 %v4540, 1.442695
    %v4565 = vpow.pop %v4564
    %v4566 = vmul.f32 %v4541, 1.442695
    %v4567 = vpow.pop %v4566
    %v4568 = vmul.f32 %v4542, 1.442695
    %v4569 = vpow.pop %v4568
    %v4570 = vmul.f32 %v4543, 1.442695
    %v4571 = vpow.pop %v4570
    %v4572 = vmul.f32 %v4544, 1.442695
    %v4573 = vpow.pop %v4572
    %v4574 = vmul.f32 %v4545, 1.442695
    %v4575 = vpow.pop %v4574
    %v4576 = vmul.f32 %v4546, 1.442695
    %v4577 = vpow.pop %v4576
    %v4578 = vmul.f32 %v4547, 1.442695
    %v4579 = vpow.pop %v4578
    %v4580 = vadd.f32 %v4549, 1.0
    %v4581 = vadd.f32 %v4551, 1.0
    %v4582 = vadd.f32 %v4553, 1.0
    %v4583 = vadd.f32 %v4555, 1.0
    %v4584 = vadd.f32 %v4557, 1.0
    %v4585 = vadd.f32 %v4559, 1.0
    %v4586 = vadd.f32 %v4561, 1.0
    %v4587 = vadd.f32 %v4563, 1.0
    %v4588 = vadd.f32 %v4565, 1.0
    %v4589 = vadd.f32 %v4567, 1.0
    %v4590 = vadd.f32 %v4569, 1.0
    %v4591 = vadd.f32 %v4571, 1.0
    %v4592 = vadd.f32 %v4573, 1.0
    %v4593 = vadd.f32 %v4575, 1.0
    %v4594 = vadd.f32 %v4577, 1.0
    %v4595 = vadd.f32 %v4579, 1.0
    %v4596 = vrcp.pop %v4580
    %v4597 = vmul.f32 %v4580, %v4596
    %v4598 = vsub.f32 1.0, %v4597
    %v4599 = vmul.f32 %v4596, %v4598
    %v4600 = vadd.f32 %v4596, %v4599
    %vm4601 = vweird.f32 %v4580
    %vm4602 = vweird.f32 %v4596
    %vm4603 = vmor %vm4601, %vm4602
    %v4604 = vsel %vm4603, %v4596, %v4600
    %v4605 = vand.u32 2147483647, %v4580
    %vm4606 = vcmp.eq.f32.partialorder %v4605, 8.507059e+37
    %v4607 = vand.u32 %v4580, 2147483648
    %v4608 = vor.u32 1.1754944e-38, %v4607
    %v4609 = vsel %vm4606, %v4608, %v4604
    %v4610 = vmul.f32 1.0, %v4609
    %v4611 = vrcp.pop %v4581
    %v4612 = vmul.f32 %v4581, %v4611
    %v4613 = vsub.f32 1.0, %v4612
    %v4614 = vmul.f32 %v4611, %v4613
    %v4615 = vadd.f32 %v4611, %v4614
    %vm4616 = vweird.f32 %v4581
    %vm4617 = vweird.f32 %v4611
    %vm4618 = vmor %vm4616, %vm4617
    %v4619 = vsel %vm4618, %v4611, %v4615
    %v4620 = vand.u32 2147483647, %v4581
    %vm4621 = vcmp.eq.f32.partialorder %v4620, 8.507059e+37
    %v4622 = vand.u32 %v4581, 2147483648
    %v4623 = vor.u32 1.1754944e-38, %v4622
    %v4624 = vsel %vm4621, %v4623, %v4619
    %v4625 = vmul.f32 1.0, %v4624
    %v4626 = vrcp.pop %v4582
    %v4627 = vmul.f32 %v4582, %v4626
    %v4628 = vsub.f32 1.0, %v4627
    %v4629 = vmul.f32 %v4626, %v4628
    %v4630 = vadd.f32 %v4626, %v4629
    %vm4631 = vweird.f32 %v4582
    %vm4632 = vweird.f32 %v4626
    %vm4633 = vmor %vm4631, %vm4632
    %v4634 = vsel %vm4633, %v4626, %v4630
    %v4635 = vand.u32 2147483647, %v4582
    %vm4636 = vcmp.eq.f32.partialorder %v4635, 8.507059e+37
    %v4637 = vand.u32 %v4582, 2147483648
    %v4638 = vor.u32 1.1754944e-38, %v4637
    %v4639 = vsel %vm4636, %v4638, %v4634
    %v4640 = vmul.f32 1.0, %v4639
    %v4641 = vrcp.pop %v4583
    %v4642 = vmul.f32 %v4583, %v4641
    %v4643 = vsub.f32 1.0, %v4642
    %v4644 = vmul.f32 %v4641, %v4643
    %v4645 = vadd.f32 %v4641, %v4644
    %vm4646 = vweird.f32 %v4583
    %vm4647 = vweird.f32 %v4641
    %vm4648 = vmor %vm4646, %vm4647
    %v4649 = vsel %vm4648, %v4641, %v4645
    %v4650 = vand.u32 2147483647, %v4583
    %vm4651 = vcmp.eq.f32.partialorder %v4650, 8.507059e+37
    %v4652 = vand.u32 %v4583, 2147483648
    %v4653 = vor.u32 1.1754944e-38, %v4652
    %v4654 = vsel %vm4651, %v4653, %v4649
    %v4655 = vmul.f32 1.0, %v4654
    %v4656 = vrcp.pop %v4584
    %v4657 = vmul.f32 %v4584, %v4656
    %v4658 = vsub.f32 1.0, %v4657
    %v4659 = vmul.f32 %v4656, %v4658
    %v4660 = vadd.f32 %v4656, %v4659
    %vm4661 = vweird.f32 %v4584
    %vm4662 = vweird.f32 %v4656
    %vm4663 = vmor %vm4661, %vm4662
    %v4664 = vsel %vm4663, %v4656, %v4660
    %v4665 = vand.u32 2147483647, %v4584
    %vm4666 = vcmp.eq.f32.partialorder %v4665, 8.507059e+37
    %v4667 = vand.u32 %v4584, 2147483648
    %v4668 = vor.u32 1.1754944e-38, %v4667
    %v4669 = vsel %vm4666, %v4668, %v4664
    %v4670 = vmul.f32 1.0, %v4669
    %v4671 = vrcp.pop %v4585
    %v4672 = vmul.f32 %v4585, %v4671
    %v4673 = vsub.f32 1.0, %v4672
    %v4674 = vmul.f32 %v4671, %v4673
    %v4675 = vadd.f32 %v4671, %v4674
    %vm4676 = vweird.f32 %v4585
    %vm4677 = vweird.f32 %v4671
    %vm4678 = vmor %vm4676, %vm4677
    %v4679 = vsel %vm4678, %v4671, %v4675
    %v4680 = vand.u32 2147483647, %v4585
    %vm4681 = vcmp.eq.f32.partialorder %v4680, 8.507059e+37
    %v4682 = vand.u32 %v4585, 2147483648
    %v4683 = vor.u32 1.1754944e-38, %v4682
    %v4684 = vsel %vm4681, %v4683, %v4679
    %v4685 = vmul.f32 1.0, %v4684
    %v4686 = vrcp.pop %v4586
    %v4687 = vmul.f32 %v4586, %v4686
    %v4688 = vsub.f32 1.0, %v4687
    %v4689 = vmul.f32 %v4686, %v4688
    %v4690 = vadd.f32 %v4686, %v4689
    %vm4691 = vweird.f32 %v4586
    %vm4692 = vweird.f32 %v4686
    %vm4693 = vmor %vm4691, %vm4692
    %v4694 = vsel %vm4693, %v4686, %v4690
    %v4695 = vand.u32 2147483647, %v4586
    %vm4696 = vcmp.eq.f32.partialorder %v4695, 8.507059e+37
    %v4697 = vand.u32 %v4586, 2147483648
    %v4698 = vor.u32 1.1754944e-38, %v4697
    %v4699 = vsel %vm4696, %v4698, %v4694
    %v4700 = vmul.f32 1.0, %v4699
    %v4701 = vrcp.pop %v4587
    %v4702 = vmul.f32 %v4587, %v4701
    %v4703 = vsub.f32 1.0, %v4702
    %v4704 = vmul.f32 %v4701, %v4703
    %v4705 = vadd.f32 %v4701, %v4704
    %vm4706 = vweird.f32 %v4587
    %vm4707 = vweird.f32 %v4701
    %vm4708 = vmor %vm4706, %vm4707
    %v4709 = vsel %vm4708, %v4701, %v4705
    %v4710 = vand.u32 2147483647, %v4587
    %vm4711 = vcmp.eq.f32.partialorder %v4710, 8.507059e+37
    %v4712 = vand.u32 %v4587, 2147483648
    %v4713 = vor.u32 1.1754944e-38, %v4712
    %v4714 = vsel %vm4711, %v4713, %v4709
    %v4715 = vmul.f32 1.0, %v4714
    %v4716 = vrcp.pop %v4588
    %v4717 = vmul.f32 %v4588, %v4716
    %v4718 = vsub.f32 1.0, %v4717
    %v4719 = vmul.f32 %v4716, %v4718
    %v4720 = vadd.f32 %v4716, %v4719
    %vm4721 = vweird.f32 %v4588
    %vm4722 = vweird.f32 %v4716
    %vm4723 = vmor %vm4721, %vm4722
    %v4724 = vsel %vm4723, %v4716, %v4720
    %v4725 = vand.u32 2147483647, %v4588
    %vm4726 = vcmp.eq.f32.partialorder %v4725, 8.507059e+37
    %v4727 = vand.u32 %v4588, 2147483648
    %v4728 = vor.u32 1.1754944e-38, %v4727
    %v4729 = vsel %vm4726, %v4728, %v4724
    %v4730 = vmul.f32 1.0, %v4729
    %v4731 = vrcp.pop %v4589
    %v4732 = vmul.f32 %v4589, %v4731
    %v4733 = vsub.f32 1.0, %v4732
    %v4734 = vmul.f32 %v4731, %v4733
    %v4735 = vadd.f32 %v4731, %v4734
    %vm4736 = vweird.f32 %v4589
    %vm4737 = vweird.f32 %v4731
    %vm4738 = vmor %vm4736, %vm4737
    %v4739 = vsel %vm4738, %v4731, %v4735
    %v4740 = vand.u32 2147483647, %v4589
    %vm4741 = vcmp.eq.f32.partialorder %v4740, 8.507059e+37
    %v4742 = vand.u32 %v4589, 2147483648
    %v4743 = vor.u32 1.1754944e-38, %v4742
    %v4744 = vsel %vm4741, %v4743, %v4739
    %v4745 = vmul.f32 1.0, %v4744
    %v4746 = vrcp.pop %v4590
    %v4747 = vmul.f32 %v4590, %v4746
    %v4748 = vsub.f32 1.0, %v4747
    %v4749 = vmul.f32 %v4746, %v4748
    %v4750 = vadd.f32 %v4746, %v4749
    %vm4751 = vweird.f32 %v4590
    %vm4752 = vweird.f32 %v4746
    %vm4753 = vmor %vm4751, %vm4752
    %v4754 = vsel %vm4753, %v4746, %v4750
    %v4755 = vand.u32 2147483647, %v4590
    %vm4756 = vcmp.eq.f32.partialorder %v4755, 8.507059e+37
    %v4757 = vand.u32 %v4590, 2147483648
    %v4758 = vor.u32 1.1754944e-38, %v4757
    %v4759 = vsel %vm4756, %v4758, %v4754
    %v4760 = vmul.f32 1.0, %v4759
    %v4761 = vrcp.pop %v4591
    %v4762 = vmul.f32 %v4591, %v4761
    %v4763 = vsub.f32 1.0, %v4762
    %v4764 = vmul.f32 %v4761, %v4763
    %v4765 = vadd.f32 %v4761, %v4764
    %vm4766 = vweird.f32 %v4591
    %vm4767 = vweird.f32 %v4761
    %vm4768 = vmor %vm4766, %vm4767
    %v4769 = vsel %vm4768, %v4761, %v4765
    %v4770 = vand.u32 2147483647, %v4591
    %vm4771 = vcmp.eq.f32.partialorder %v4770, 8.507059e+37
    %v4772 = vand.u32 %v4591, 2147483648
    %v4773 = vor.u32 1.1754944e-38, %v4772
    %v4774 = vsel %vm4771, %v4773, %v4769
    %v4775 = vmul.f32 1.0, %v4774
    %v4776 = vrcp.pop %v4592
    %v4777 = vmul.f32 %v4592, %v4776
    %v4778 = vsub.f32 1.0, %v4777
    %v4779 = vmul.f32 %v4776, %v4778
    %v4780 = vadd.f32 %v4776, %v4779
    %vm4781 = vweird.f32 %v4592
    %vm4782 = vweird.f32 %v4776
    %vm4783 = vmor %vm4781, %vm4782
    %v4784 = vsel %vm4783, %v4776, %v4780
    %v4785 = vand.u32 2147483647, %v4592
    %vm4786 = vcmp.eq.f32.partialorder %v4785, 8.507059e+37
    %v4787 = vand.u32 %v4592, 2147483648
    %v4788 = vor.u32 1.1754944e-38, %v4787
    %v4789 = vsel %vm4786, %v4788, %v4784
    %v4790 = vmul.f32 1.0, %v4789
    %v4791 = vrcp.pop %v4593
    %v4792 = vmul.f32 %v4593, %v4791
    %v4793 = vsub.f32 1.0, %v4792
    %v4794 = vmul.f32 %v4791, %v4793
    %v4795 = vadd.f32 %v4791, %v4794
    %vm4796 = vweird.f32 %v4593
    %vm4797 = vweird.f32 %v4791
    %vm4798 = vmor %vm4796, %vm4797
    %v4799 = vsel %vm4798, %v4791, %v4795
    %v4800 = vand.u32 2147483647, %v4593
    %vm4801 = vcmp.eq.f32.partialorder %v4800, 8.507059e+37
    %v4802 = vand.u32 %v4593, 2147483648
    %v4803 = vor.u32 1.1754944e-38, %v4802
    %v4804 = vsel %vm4801, %v4803, %v4799
    %v4805 = vmul.f32 1.0, %v4804
    %v4806 = vrcp.pop %v4594
    %v4807 = vmul.f32 %v4594, %v4806
    %v4808 = vsub.f32 1.0, %v4807
    %v4809 = vmul.f32 %v4806, %v4808
    %v4810 = vadd.f32 %v4806, %v4809
    %vm4811 = vweird.f32 %v4594
    %vm4812 = vweird.f32 %v4806
    %vm4813 = vmor %vm4811, %vm4812
    %v4814 = vsel %vm4813, %v4806, %v4810
    %v4815 = vand.u32 2147483647, %v4594
    %vm4816 = vcmp.eq.f32.partialorder %v4815, 8.507059e+37
    %v4817 = vand.u32 %v4594, 2147483648
    %v4818 = vor.u32 1.1754944e-38, %v4817
    %v4819 = vsel %vm4816, %v4818, %v4814
    %v4820 = vmul.f32 1.0, %v4819
    %v4821 = vrcp.pop %v4595
    %v4822 = vmul.f32 %v4595, %v4821
    %v4823 = vsub.f32 1.0, %v4822
    %v4824 = vmul.f32 %v4821, %v4823
    %v4825 = vadd.f32 %v4821, %v4824
    %vm4826 = vweird.f32 %v4595
    %vm4827 = vweird.f32 %v4821
    %vm4828 = vmor %vm4826, %vm4827
    %v4829 = vsel %vm4828, %v4821, %v4825
    %v4830 = vand.u32 2147483647, %v4595
    %vm4831 = vcmp.eq.f32.partialorder %v4830, 8.507059e+37
    %v4832 = vand.u32 %v4595, 2147483648
    %v4833 = vor.u32 1.1754944e-38, %v4832
    %v4834 = vsel %vm4831, %v4833, %v4829
    %v4835 = vmul.f32 1.0, %v4834
    %v4836 = vtanh.pop %v4516
    %v4837 = vtanh.pop %v4517
    %v4838 = vtanh.pop %v4518
    %v4839 = vtanh.pop %v4519
    %v4840 = vtanh.pop %v4520
    %v4841 = vtanh.pop %v4521
    %v4842 = vtanh.pop %v4522
    %v4843 = vtanh.pop %v4523
    %v4844 = vtanh.pop %v4524
    %v4845 = vtanh.pop %v4525
    %v4846 = vtanh.pop %v4526
    %v4847 = vtanh.pop %v4527
    %v4848 = vtanh.pop %v4528
    %v4849 = vtanh.pop %v4529
    %v4850 = vtanh.pop %v4530
    %v4851 = vtanh.pop %v4531
    %v4852 = vmul.f32 %v4610, %v4213
    %v4853 = vmul.f32 %v4625, %v4214
    %v4854 = vmul.f32 %v4640, %v4215
    %v4855 = vmul.f32 %v4655, %v4216
    %v4856 = vmul.f32 %v4670, %v4217
    %v4857 = vmul.f32 %v4685, %v4218
    %v4858 = vmul.f32 %v4700, %v4219
    %v4859 = vmul.f32 %v4715, %v4220
    %v4860 = vmul.f32 %v4730, %v4221
    %v4861 = vmul.f32 %v4745, %v4222
    %v4862 = vmul.f32 %v4760, %v4223
    %v4863 = vmul.f32 %v4775, %v4224
    %v4864 = vmul.f32 %v4790, %v4225
    %v4865 = vmul.f32 %v4805, %v4226
    %v4866 = vmul.f32 %v4820, %v4227
    %v4867 = vmul.f32 %v4835, %v4228
    %4884 = vrot.lane.b32.xlu0 %v4836, 64
    %v4885 = vpop.permute.xlu0 %4884
    %4886 = vrot.lane.b32.xlu0 %v4837, 64
    %v4887 = vpop.permute.xlu0 %4886
    %4888 = vrot.lane.b32.xlu0 %v4838, 64
    %v4889 = vpop.permute.xlu0 %4888
    %4890 = vrot.lane.b32.xlu0 %v4839, 64
    %v4891 = vpop.permute.xlu0 %4890
    %4892 = vrot.lane.b32.xlu0 %v4840, 64
    %v4893 = vpop.permute.xlu0 %4892
    %4894 = vrot.lane.b32.xlu0 %v4841, 64
    %v4895 = vpop.permute.xlu0 %4894
    %4896 = vrot.lane.b32.xlu0 %v4842, 64
    %v4897 = vpop.permute.xlu0 %4896
    %4898 = vrot.lane.b32.xlu0 %v4843, 64
    %v4899 = vpop.permute.xlu0 %4898
    %4900 = vrot.lane.b32.xlu0 %v4844, 64
    %v4901 = vpop.permute.xlu0 %4900
    %4902 = vrot.lane.b32.xlu0 %v4845, 64
    %v4903 = vpop.permute.xlu0 %4902
    %4904 = vrot.lane.b32.xlu0 %v4846, 64
    %v4905 = vpop.permute.xlu0 %4904
    %4906 = vrot.lane.b32.xlu0 %v4847, 64
    %v4907 = vpop.permute.xlu0 %4906
    %4908 = vrot.lane.b32.xlu0 %v4848, 64
    %v4909 = vpop.permute.xlu0 %4908
    %4910 = vrot.lane.b32.xlu0 %v4849, 64
    %v4911 = vpop.permute.xlu0 %4910
    %4912 = vrot.lane.b32.xlu0 %v4850, 64
    %v4913 = vpop.permute.xlu0 %4912
    %4914 = vrot.lane.b32.xlu0 %v4851, 64
    %v4915 = vpop.permute.xlu0 %4914
    %v4932 = vmul.f32 %v4610, %v4885
    %v4933 = vmul.f32 %v4625, %v4887
    %v4934 = vmul.f32 %v4640, %v4889
    %v4935 = vmul.f32 %v4655, %v4891
    %v4936 = vmul.f32 %v4670, %v4893
    %v4937 = vmul.f32 %v4685, %v4895
    %v4938 = vmul.f32 %v4700, %v4897
    %v4939 = vmul.f32 %v4715, %v4899
    %v4940 = vmul.f32 %v4730, %v4901
    %v4941 = vmul.f32 %v4745, %v4903
    %v4942 = vmul.f32 %v4760, %v4905
    %v4943 = vmul.f32 %v4775, %v4907
    %v4944 = vmul.f32 %v4790, %v4909
    %v4945 = vmul.f32 %v4805, %v4911
    %v4946 = vmul.f32 %v4820, %v4913
    %v4947 = vmul.f32 %v4835, %v4915
    %4964 = vrot.lane.b32.xlu0 %v4932, 32
    %v4965 = vpop.permute.xlu0 %4964
    %4966 = vrot.lane.b32.xlu0 %v4933, 32
    %v4967 = vpop.permute.xlu0 %4966
    %4968 = vrot.lane.b32.xlu0 %v4934, 32
    %v4969 = vpop.permute.xlu0 %4968
    %4970 = vrot.lane.b32.xlu0 %v4935, 32
    %v4971 = vpop.permute.xlu0 %4970
    %4972 = vrot.lane.b32.xlu0 %v4936, 32
    %v4973 = vpop.permute.xlu0 %4972
    %4974 = vrot.lane.b32.xlu0 %v4937, 32
    %v4975 = vpop.permute.xlu0 %4974
    %4976 = vrot.lane.b32.xlu0 %v4938, 32
    %v4977 = vpop.permute.xlu0 %4976
    %4978 = vrot.lane.b32.xlu0 %v4939, 32
    %v4979 = vpop.permute.xlu0 %4978
    %4980 = vrot.lane.b32.xlu0 %v4940, 32
    %v4981 = vpop.permute.xlu0 %4980
    %4982 = vrot.lane.b32.xlu0 %v4941, 32
    %v4983 = vpop.permute.xlu0 %4982
    %4984 = vrot.lane.b32.xlu0 %v4942, 32
    %v4985 = vpop.permute.xlu0 %4984
    %4986 = vrot.lane.b32.xlu0 %v4943, 32
    %v4987 = vpop.permute.xlu0 %4986
    %4988 = vrot.lane.b32.xlu0 %v4944, 32
    %v4989 = vpop.permute.xlu0 %4988
    %4990 = vrot.lane.b32.xlu0 %v4945, 32
    %v4991 = vpop.permute.xlu0 %4990
    %4992 = vrot.lane.b32.xlu0 %v4946, 32
    %v4993 = vpop.permute.xlu0 %4992
    %4994 = vrot.lane.b32.xlu0 %v4947, 32
    %v4995 = vpop.permute.xlu0 %4994
    %v5012 = vadd.f32 %v4852, %v4965
    %v5013 = vadd.f32 %v4853, %v4967
    %v5014 = vadd.f32 %v4854, %v4969
    %v5015 = vadd.f32 %v4855, %v4971
    %v5016 = vadd.f32 %v4856, %v4973
    %v5017 = vadd.f32 %v4857, %v4975
    %v5018 = vadd.f32 %v4858, %v4977
    %v5019 = vadd.f32 %v4859, %v4979
    %v5020 = vadd.f32 %v4860, %v4981
    %v5021 = vadd.f32 %v4861, %v4983
    %v5022 = vadd.f32 %v4862, %v4985
    %v5023 = vadd.f32 %v4863, %v4987
    %v5024 = vadd.f32 %v4864, %v4989
    %v5025 = vadd.f32 %v4865, %v4991
    %v5026 = vadd.f32 %v4866, %v4993
    %v5027 = vadd.f32 %v4867, %v4995
    %v5028 = vtanh.pop %v5012
    %v5029 = vtanh.pop %v5013
    %v5030 = vtanh.pop %v5014
    %v5031 = vtanh.pop %v5015
    %v5032 = vtanh.pop %v5016
    %v5033 = vtanh.pop %v5017
    %v5034 = vtanh.pop %v5018
    %v5035 = vtanh.pop %v5019
    %v5036 = vtanh.pop %v5020
    %v5037 = vtanh.pop %v5021
    %v5038 = vtanh.pop %v5022
    %v5039 = vtanh.pop %v5023
    %v5040 = vtanh.pop %v5024
    %v5041 = vtanh.pop %v5025
    %v5042 = vtanh.pop %v5026
    %v5043 = vtanh.pop %v5027
    %5060 = vrot.lane.b32.xlu0 %v5028, 64
    %v5061 = vpop.permute.xlu0 %5060
    %5062 = vrot.lane.b32.xlu0 %v5029, 64
    %v5063 = vpop.permute.xlu0 %5062
    %5064 = vrot.lane.b32.xlu0 %v5030, 64
    %v5065 = vpop.permute.xlu0 %5064
    %5066 = vrot.lane.b32.xlu0 %v5031, 64
    %v5067 = vpop.permute.xlu0 %5066
    %5068 = vrot.lane.b32.xlu0 %v5032, 64
    %v5069 = vpop.permute.xlu0 %5068
    %5070 = vrot.lane.b32.xlu0 %v5033, 64
    %v5071 = vpop.permute.xlu0 %5070
    %5072 = vrot.lane.b32.xlu0 %v5034, 64
    %v5073 = vpop.permute.xlu0 %5072
    %5074 = vrot.lane.b32.xlu0 %v5035, 64
    %v5075 = vpop.permute.xlu0 %5074
    %5076 = vrot.lane.b32.xlu0 %v5036, 64
    %v5077 = vpop.permute.xlu0 %5076
    %5078 = vrot.lane.b32.xlu0 %v5037, 64
    %v5079 = vpop.permute.xlu0 %5078
    %5080 = vrot.lane.b32.xlu0 %v5038, 64
    %v5081 = vpop.permute.xlu0 %5080
    %5082 = vrot.lane.b32.xlu0 %v5039, 64
    %v5083 = vpop.permute.xlu0 %5082
    %5084 = vrot.lane.b32.xlu0 %v5040, 64
    %v5085 = vpop.permute.xlu0 %5084
    %5086 = vrot.lane.b32.xlu0 %v5041, 64
    %v5087 = vpop.permute.xlu0 %5086
    %5088 = vrot.lane.b32.xlu0 %v5042, 64
    %v5089 = vpop.permute.xlu0 %5088
    %5090 = vrot.lane.b32.xlu0 %v5043, 64
    %v5091 = vpop.permute.xlu0 %5090
    %v5108 = vmul.f32 %v4610, %v5061
    %v5109 = vmul.f32 %v4625, %v5063
    %v5110 = vmul.f32 %v4640, %v5065
    %v5111 = vmul.f32 %v4655, %v5067
    %v5112 = vmul.f32 %v4670, %v5069
    %v5113 = vmul.f32 %v4685, %v5071
    %v5114 = vmul.f32 %v4700, %v5073
    %v5115 = vmul.f32 %v4715, %v5075
    %v5116 = vmul.f32 %v4730, %v5077
    %v5117 = vmul.f32 %v4745, %v5079
    %v5118 = vmul.f32 %v4760, %v5081
    %v5119 = vmul.f32 %v4775, %v5083
    %v5120 = vmul.f32 %v4790, %v5085
    %v5121 = vmul.f32 %v4805, %v5087
    %v5122 = vmul.f32 %v4820, %v5089
    %v5123 = vmul.f32 %v4835, %v5091
    %v5124 = vld [vmem:[#allocation2 + $0x6] sm:$0x1]
    %v5125 = vld [vmem:[#allocation2 + $0xe] sm:$0x1]
    %v5126 = vld [vmem:[#allocation2 + $0x16] sm:$0x1]
    %v5127 = vld [vmem:[#allocation2 + $0x1e] sm:$0x1]
    %v5128 = vld [vmem:[#allocation2 + $0x26] sm:$0x1]
    %v5129 = vld [vmem:[#allocation2 + $0x2e] sm:$0x1]
    %v5130 = vld [vmem:[#allocation2 + $0x36] sm:$0x1]
    %v5131 = vld [vmem:[#allocation2 + $0x3e] sm:$0x1]
    %v5132 = vld [vmem:[#allocation2 + $0x46] sm:$0x1]
    %v5133 = vld [vmem:[#allocation2 + $0x4e] sm:$0x1]
    %v5134 = vld [vmem:[#allocation2 + $0x56] sm:$0x1]
    %v5135 = vld [vmem:[#allocation2 + $0x5e] sm:$0x1]
    %v5136 = vld [vmem:[#allocation2 + $0x66] sm:$0x1]
    %v5137 = vld [vmem:[#allocation2 + $0x6e] sm:$0x1]
    %v5138 = vld [vmem:[#allocation2 + $0x76] sm:$0x1]
    %v5139 = vld [vmem:[#allocation2 + $0x7e] sm:$0x1]
    %5140 = vset.pattern.permute.xlu0 6
    %5141 = vperm.xlu0 %5140, %v360
    %v5142 = vpop.permute.xlu0 %5141
    %5143 = vset.pattern.permute.xlu0 6
    %5144 = vperm.xlu0 %5143, %v361
    %v5145 = vpop.permute.xlu0 %5144
    %v5146 = vrot.slane %v5142, 1
    %v5147 = vrot.slane %v5142, 2
    %v5148 = vrot.slane %v5142, 3
    %v5149 = vrot.slane %v5142, 4
    %v5150 = vrot.slane %v5142, 5
    %v5151 = vrot.slane %v5142, 6
    %v5152 = vrot.slane %v5142, 7
    %v5153 = vrot.slane %v5145, 1
    %v5154 = vrot.slane %v5145, 2
    %v5155 = vrot.slane %v5145, 3
    %v5156 = vrot.slane %v5145, 4
    %v5157 = vrot.slane %v5145, 5
    %v5158 = vrot.slane %v5145, 6
    %v5159 = vrot.slane %v5145, 7
    %v5176 = vmul.f32 %v5124, %v5142
    %v5177 = vmul.f32 %v5125, %v5146
    %v5178 = vmul.f32 %v5126, %v5147
    %v5179 = vmul.f32 %v5127, %v5148
    %v5180 = vmul.f32 %v5128, %v5149
    %v5181 = vmul.f32 %v5129, %v5150
    %v5182 = vmul.f32 %v5130, %v5151
    %v5183 = vmul.f32 %v5131, %v5152
    %v5184 = vmul.f32 %v5132, %v5145
    %v5185 = vmul.f32 %v5133, %v5153
    %v5186 = vmul.f32 %v5134, %v5154
    %v5187 = vmul.f32 %v5135, %v5155
    %v5188 = vmul.f32 %v5136, %v5156
    %v5189 = vmul.f32 %v5137, %v5157
    %v5190 = vmul.f32 %v5138, %v5158
    %v5191 = vmul.f32 %v5139, %v5159
    %v5208 = vrot.slane %v5109, 7
    %v5209 = vsel %vm1207, %v5208, %v5108
    %v5210 = vrot.slane %v5110, 6
    %v5211 = vsel %vm1210, %v5210, %v5209
    %v5212 = vrot.slane %v5111, 5
    %v5213 = vsel %vm1213, %v5212, %v5211
    %v5214 = vrot.slane %v5112, 4
    %v5215 = vsel %vm1216, %v5214, %v5213
    %v5216 = vrot.slane %v5113, 3
    %v5217 = vsel %vm1219, %v5216, %v5215
    %v5218 = vrot.slane %v5114, 2
    %v5219 = vsel %vm1222, %v5218, %v5217
    %v5220 = vrot.slane %v5115, 1
    %v5221 = vsel %vm1225, %v5220, %v5219
    %v5222 = vrot.slane %v5117, 7
    %v5223 = vsel %vm1207, %v5222, %v5116
    %v5224 = vrot.slane %v5118, 6
    %v5225 = vsel %vm1210, %v5224, %v5223
    %v5226 = vrot.slane %v5119, 5
    %v5227 = vsel %vm1213, %v5226, %v5225
    %v5228 = vrot.slane %v5120, 4
    %v5229 = vsel %vm1216, %v5228, %v5227
    %v5230 = vrot.slane %v5121, 3
    %v5231 = vsel %vm1219, %v5230, %v5229
    %v5232 = vrot.slane %v5122, 2
    %v5233 = vsel %vm1222, %v5232, %v5231
    %v5234 = vrot.slane %v5123, 1
    %v5235 = vsel %vm1225, %v5234, %v5233
    %5236 = vrot.lane.b32.xlu0 %v5221, 32
    %v5237 = vpop.permute.xlu0 %5236
    %5238 = vrot.lane.b32.xlu0 %v5235, 32
    %v5239 = vpop.permute.xlu0 %5238
    %v5240 = vsel %vm230, %v5237, 0
    %v5242 = vsel %vm230, %v5239, 0
    %5244 = vmatpush.msra.mxu0 0.0
    %5245 = vmatpush.msra.mxu0 0.0
    %5246 = vmatpush.msra.mxu0 0.0
    %5247 = vmatpush.msra.mxu0 0.0
    %5248 = vmatpush.msra.mxu0 0.0
    %5249 = vmatpush.msra.mxu0 0.0
    %5250 = vmatpush.msra.mxu0 0.0
    %5251 = vmatpush.msra.mxu0 0.0
    %5252 = vmatpush.msra.mxu0 0.0
    %5253 = vmatpush.msra.mxu0 0.0
    %5254 = vmatpush.msra.mxu0 0.0
    %5255 = vmatpush.msra.mxu0 0.0
    %5256 = vmatpush.msra.mxu0 %v365
    %5257 = vmatpush.msra.mxu0 %v364
    %5258 = vmatpush.msra.mxu0 %v363
    %5259 = vmatpush.msra.mxu0 %v362
    %5260 = vmatmul.f32.gmra.mxu0 %v5240
    %v5261 = vpop.f32.mrf.mxu0
    %v5262 = vadd.f32 0.0, %v5261
    %5263 = vmatmul.f32.gmra.mxu0 %v5242
    %v5264 = vpop.f32.mrf.mxu0
    %v5265 = vadd.f32 0.0, %v5264
    %5266 = vdwg.mxu0
    %v5269 = vrot.slane %v5262, 1
    %v5270 = vrot.slane %v5262, 2
    %v5271 = vrot.slane %v5262, 3
    %v5272 = vrot.slane %v5262, 4
    %v5273 = vrot.slane %v5262, 5
    %v5274 = vrot.slane %v5262, 6
    %v5275 = vrot.slane %v5262, 7
    %v5276 = vrot.slane %v5265, 1
    %v5277 = vrot.slane %v5265, 2
    %v5278 = vrot.slane %v5265, 3
    %v5279 = vrot.slane %v5265, 4
    %v5280 = vrot.slane %v5265, 5
    %v5281 = vrot.slane %v5265, 6
    %v5282 = vrot.slane %v5265, 7
    %v5299 = vadd.f32 %v5176, %v5262
    %v5300 = vadd.f32 %v5177, %v5269
    %v5301 = vadd.f32 %v5178, %v5270
    %v5302 = vadd.f32 %v5179, %v5271
    %v5303 = vadd.f32 %v5180, %v5272
    %v5304 = vadd.f32 %v5181, %v5273
    %v5305 = vadd.f32 %v5182, %v5274
    %v5306 = vadd.f32 %v5183, %v5275
    %v5307 = vadd.f32 %v5184, %v5265
    %v5308 = vadd.f32 %v5185, %v5276
    %v5309 = vadd.f32 %v5186, %v5277
    %v5310 = vadd.f32 %v5187, %v5278
    %v5311 = vadd.f32 %v5188, %v5279
    %v5312 = vadd.f32 %v5189, %v5280
    %v5313 = vadd.f32 %v5190, %v5281
    %v5314 = vadd.f32 %v5191, %v5282
    %v5315 = vadd.f32 %v5299, %v512
    %v5316 = vadd.f32 %v5300, %v512
    %v5317 = vadd.f32 %v5301, %v512
    %v5318 = vadd.f32 %v5302, %v512
    %v5319 = vadd.f32 %v5303, %v512
    %v5320 = vadd.f32 %v5304, %v512
    %v5321 = vadd.f32 %v5305, %v512
    %v5322 = vadd.f32 %v5306, %v512
    %v5323 = vadd.f32 %v5307, %v512
    %v5324 = vadd.f32 %v5308, %v512
    %v5325 = vadd.f32 %v5309, %v512
    %v5326 = vadd.f32 %v5310, %v512
    %v5327 = vadd.f32 %v5311, %v512
    %v5328 = vadd.f32 %v5312, %v512
    %v5329 = vadd.f32 %v5313, %v512
    %v5330 = vadd.f32 %v5314, %v512
    %v5331 = vxor.u32 %v5315, 2147483648
    %v5332 = vxor.u32 %v5316, 2147483648
    %v5333 = vxor.u32 %v5317, 2147483648
    %v5334 = vxor.u32 %v5318, 2147483648
    %v5335 = vxor.u32 %v5319, 2147483648
    %v5336 = vxor.u32 %v5320, 2147483648
    %v5337 = vxor.u32 %v5321, 2147483648
    %v5338 = vxor.u32 %v5322, 2147483648
    %v5339 = vxor.u32 %v5323, 2147483648
    %v5340 = vxor.u32 %v5324, 2147483648
    %v5341 = vxor.u32 %v5325, 2147483648
    %v5342 = vxor.u32 %v5326, 2147483648
    %v5343 = vxor.u32 %v5327, 2147483648
    %v5344 = vxor.u32 %v5328, 2147483648
    %v5345 = vxor.u32 %v5329, 2147483648
    %v5346 = vxor.u32 %v5330, 2147483648
    %v5347 = vmul.f32 %v5331, 1.442695
    %v5348 = vpow.pop %v5347
    %v5349 = vmul.f32 %v5332, 1.442695
    %v5350 = vpow.pop %v5349
    %v5351 = vmul.f32 %v5333, 1.442695
    %v5352 = vpow.pop %v5351
    %v5353 = vmul.f32 %v5334, 1.442695
    %v5354 = vpow.pop %v5353
    %v5355 = vmul.f32 %v5335, 1.442695
    %v5356 = vpow.pop %v5355
    %v5357 = vmul.f32 %v5336, 1.442695
    %v5358 = vpow.pop %v5357
    %v5359 = vmul.f32 %v5337, 1.442695
    %v5360 = vpow.pop %v5359
    %v5361 = vmul.f32 %v5338, 1.442695
    %v5362 = vpow.pop %v5361
    %v5363 = vmul.f32 %v5339, 1.442695
    %v5364 = vpow.pop %v5363
    %v5365 = vmul.f32 %v5340, 1.442695
    %v5366 = vpow.pop %v5365
    %v5367 = vmul.f32 %v5341, 1.442695
    %v5368 = vpow.pop %v5367
    %v5369 = vmul.f32 %v5342, 1.442695
    %v5370 = vpow.pop %v5369
    %v5371 = vmul.f32 %v5343, 1.442695
    %v5372 = vpow.pop %v5371
    %v5373 = vmul.f32 %v5344, 1.442695
    %v5374 = vpow.pop %v5373
    %v5375 = vmul.f32 %v5345, 1.442695
    %v5376 = vpow.pop %v5375
    %v5377 = vmul.f32 %v5346, 1.442695
    %v5378 = vpow.pop %v5377
    %v5379 = vadd.f32 %v5348, 1.0
    %v5380 = vadd.f32 %v5350, 1.0
    %v5381 = vadd.f32 %v5352, 1.0
    %v5382 = vadd.f32 %v5354, 1.0
    %v5383 = vadd.f32 %v5356, 1.0
    %v5384 = vadd.f32 %v5358, 1.0
    %v5385 = vadd.f32 %v5360, 1.0
    %v5386 = vadd.f32 %v5362, 1.0
    %v5387 = vadd.f32 %v5364, 1.0
    %v5388 = vadd.f32 %v5366, 1.0
    %v5389 = vadd.f32 %v5368, 1.0
    %v5390 = vadd.f32 %v5370, 1.0
    %v5391 = vadd.f32 %v5372, 1.0
    %v5392 = vadd.f32 %v5374, 1.0
    %v5393 = vadd.f32 %v5376, 1.0
    %v5394 = vadd.f32 %v5378, 1.0
    %v5395 = vrcp.pop %v5379
    %v5396 = vmul.f32 %v5379, %v5395
    %v5397 = vsub.f32 1.0, %v5396
    %v5398 = vmul.f32 %v5395, %v5397
    %v5399 = vadd.f32 %v5395, %v5398
    %vm5400 = vweird.f32 %v5379
    %vm5401 = vweird.f32 %v5395
    %vm5402 = vmor %vm5400, %vm5401
    %v5403 = vsel %vm5402, %v5395, %v5399
    %v5404 = vand.u32 2147483647, %v5379
    %vm5405 = vcmp.eq.f32.partialorder %v5404, 8.507059e+37
    %v5406 = vand.u32 %v5379, 2147483648
    %v5407 = vor.u32 1.1754944e-38, %v5406
    %v5408 = vsel %vm5405, %v5407, %v5403
    %v5409 = vmul.f32 1.0, %v5408
    %v5410 = vrcp.pop %v5380
    %v5411 = vmul.f32 %v5380, %v5410
    %v5412 = vsub.f32 1.0, %v5411
    %v5413 = vmul.f32 %v5410, %v5412
    %v5414 = vadd.f32 %v5410, %v5413
    %vm5415 = vweird.f32 %v5380
    %vm5416 = vweird.f32 %v5410
    %vm5417 = vmor %vm5415, %vm5416
    %v5418 = vsel %vm5417, %v5410, %v5414
    %v5419 = vand.u32 2147483647, %v5380
    %vm5420 = vcmp.eq.f32.partialorder %v5419, 8.507059e+37
    %v5421 = vand.u32 %v5380, 2147483648
    %v5422 = vor.u32 1.1754944e-38, %v5421
    %v5423 = vsel %vm5420, %v5422, %v5418
    %v5424 = vmul.f32 1.0, %v5423
    %v5425 = vrcp.pop %v5381
    %v5426 = vmul.f32 %v5381, %v5425
    %v5427 = vsub.f32 1.0, %v5426
    %v5428 = vmul.f32 %v5425, %v5427
    %v5429 = vadd.f32 %v5425, %v5428
    %vm5430 = vweird.f32 %v5381
    %vm5431 = vweird.f32 %v5425
    %vm5432 = vmor %vm5430, %vm5431
    %v5433 = vsel %vm5432, %v5425, %v5429
    %v5434 = vand.u32 2147483647, %v5381
    %vm5435 = vcmp.eq.f32.partialorder %v5434, 8.507059e+37
    %v5436 = vand.u32 %v5381, 2147483648
    %v5437 = vor.u32 1.1754944e-38, %v5436
    %v5438 = vsel %vm5435, %v5437, %v5433
    %v5439 = vmul.f32 1.0, %v5438
    %v5440 = vrcp.pop %v5382
    %v5441 = vmul.f32 %v5382, %v5440
    %v5442 = vsub.f32 1.0, %v5441
    %v5443 = vmul.f32 %v5440, %v5442
    %v5444 = vadd.f32 %v5440, %v5443
    %vm5445 = vweird.f32 %v5382
    %vm5446 = vweird.f32 %v5440
    %vm5447 = vmor %vm5445, %vm5446
    %v5448 = vsel %vm5447, %v5440, %v5444
    %v5449 = vand.u32 2147483647, %v5382
    %vm5450 = vcmp.eq.f32.partialorder %v5449, 8.507059e+37
    %v5451 = vand.u32 %v5382, 2147483648
    %v5452 = vor.u32 1.1754944e-38, %v5451
    %v5453 = vsel %vm5450, %v5452, %v5448
    %v5454 = vmul.f32 1.0, %v5453
    %v5455 = vrcp.pop %v5383
    %v5456 = vmul.f32 %v5383, %v5455
    %v5457 = vsub.f32 1.0, %v5456
    %v5458 = vmul.f32 %v5455, %v5457
    %v5459 = vadd.f32 %v5455, %v5458
    %vm5460 = vweird.f32 %v5383
    %vm5461 = vweird.f32 %v5455
    %vm5462 = vmor %vm5460, %vm5461
    %v5463 = vsel %vm5462, %v5455, %v5459
    %v5464 = vand.u32 2147483647, %v5383
    %vm5465 = vcmp.eq.f32.partialorder %v5464, 8.507059e+37
    %v5466 = vand.u32 %v5383, 2147483648
    %v5467 = vor.u32 1.1754944e-38, %v5466
    %v5468 = vsel %vm5465, %v5467, %v5463
    %v5469 = vmul.f32 1.0, %v5468
    %v5470 = vrcp.pop %v5384
    %v5471 = vmul.f32 %v5384, %v5470
    %v5472 = vsub.f32 1.0, %v5471
    %v5473 = vmul.f32 %v5470, %v5472
    %v5474 = vadd.f32 %v5470, %v5473
    %vm5475 = vweird.f32 %v5384
    %vm5476 = vweird.f32 %v5470
    %vm5477 = vmor %vm5475, %vm5476
    %v5478 = vsel %vm5477, %v5470, %v5474
    %v5479 = vand.u32 2147483647, %v5384
    %vm5480 = vcmp.eq.f32.partialorder %v5479, 8.507059e+37
    %v5481 = vand.u32 %v5384, 2147483648
    %v5482 = vor.u32 1.1754944e-38, %v5481
    %v5483 = vsel %vm5480, %v5482, %v5478
    %v5484 = vmul.f32 1.0, %v5483
    %v5485 = vrcp.pop %v5385
    %v5486 = vmul.f32 %v5385, %v5485
    %v5487 = vsub.f32 1.0, %v5486
    %v5488 = vmul.f32 %v5485, %v5487
    %v5489 = vadd.f32 %v5485, %v5488
    %vm5490 = vweird.f32 %v5385
    %vm5491 = vweird.f32 %v5485
    %vm5492 = vmor %vm5490, %vm5491
    %v5493 = vsel %vm5492, %v5485, %v5489
    %v5494 = vand.u32 2147483647, %v5385
    %vm5495 = vcmp.eq.f32.partialorder %v5494, 8.507059e+37
    %v5496 = vand.u32 %v5385, 2147483648
    %v5497 = vor.u32 1.1754944e-38, %v5496
    %v5498 = vsel %vm5495, %v5497, %v5493
    %v5499 = vmul.f32 1.0, %v5498
    %v5500 = vrcp.pop %v5386
    %v5501 = vmul.f32 %v5386, %v5500
    %v5502 = vsub.f32 1.0, %v5501
    %v5503 = vmul.f32 %v5500, %v5502
    %v5504 = vadd.f32 %v5500, %v5503
    %vm5505 = vweird.f32 %v5386
    %vm5506 = vweird.f32 %v5500
    %vm5507 = vmor %vm5505, %vm5506
    %v5508 = vsel %vm5507, %v5500, %v5504
    %v5509 = vand.u32 2147483647, %v5386
    %vm5510 = vcmp.eq.f32.partialorder %v5509, 8.507059e+37
    %v5511 = vand.u32 %v5386, 2147483648
    %v5512 = vor.u32 1.1754944e-38, %v5511
    %v5513 = vsel %vm5510, %v5512, %v5508
    %v5514 = vmul.f32 1.0, %v5513
    %v5515 = vrcp.pop %v5387
    %v5516 = vmul.f32 %v5387, %v5515
    %v5517 = vsub.f32 1.0, %v5516
    %v5518 = vmul.f32 %v5515, %v5517
    %v5519 = vadd.f32 %v5515, %v5518
    %vm5520 = vweird.f32 %v5387
    %vm5521 = vweird.f32 %v5515
    %vm5522 = vmor %vm5520, %vm5521
    %v5523 = vsel %vm5522, %v5515, %v5519
    %v5524 = vand.u32 2147483647, %v5387
    %vm5525 = vcmp.eq.f32.partialorder %v5524, 8.507059e+37
    %v5526 = vand.u32 %v5387, 2147483648
    %v5527 = vor.u32 1.1754944e-38, %v5526
    %v5528 = vsel %vm5525, %v5527, %v5523
    %v5529 = vmul.f32 1.0, %v5528
    %v5530 = vrcp.pop %v5388
    %v5531 = vmul.f32 %v5388, %v5530
    %v5532 = vsub.f32 1.0, %v5531
    %v5533 = vmul.f32 %v5530, %v5532
    %v5534 = vadd.f32 %v5530, %v5533
    %vm5535 = vweird.f32 %v5388
    %vm5536 = vweird.f32 %v5530
    %vm5537 = vmor %vm5535, %vm5536
    %v5538 = vsel %vm5537, %v5530, %v5534
    %v5539 = vand.u32 2147483647, %v5388
    %vm5540 = vcmp.eq.f32.partialorder %v5539, 8.507059e+37
    %v5541 = vand.u32 %v5388, 2147483648
    %v5542 = vor.u32 1.1754944e-38, %v5541
    %v5543 = vsel %vm5540, %v5542, %v5538
    %v5544 = vmul.f32 1.0, %v5543
    %v5545 = vrcp.pop %v5389
    %v5546 = vmul.f32 %v5389, %v5545
    %v5547 = vsub.f32 1.0, %v5546
    %v5548 = vmul.f32 %v5545, %v5547
    %v5549 = vadd.f32 %v5545, %v5548
    %vm5550 = vweird.f32 %v5389
    %vm5551 = vweird.f32 %v5545
    %vm5552 = vmor %vm5550, %vm5551
    %v5553 = vsel %vm5552, %v5545, %v5549
    %v5554 = vand.u32 2147483647, %v5389
    %vm5555 = vcmp.eq.f32.partialorder %v5554, 8.507059e+37
    %v5556 = vand.u32 %v5389, 2147483648
    %v5557 = vor.u32 1.1754944e-38, %v5556
    %v5558 = vsel %vm5555, %v5557, %v5553
    %v5559 = vmul.f32 1.0, %v5558
    %v5560 = vrcp.pop %v5390
    %v5561 = vmul.f32 %v5390, %v5560
    %v5562 = vsub.f32 1.0, %v5561
    %v5563 = vmul.f32 %v5560, %v5562
    %v5564 = vadd.f32 %v5560, %v5563
    %vm5565 = vweird.f32 %v5390
    %vm5566 = vweird.f32 %v5560
    %vm5567 = vmor %vm5565, %vm5566
    %v5568 = vsel %vm5567, %v5560, %v5564
    %v5569 = vand.u32 2147483647, %v5390
    %vm5570 = vcmp.eq.f32.partialorder %v5569, 8.507059e+37
    %v5571 = vand.u32 %v5390, 2147483648
    %v5572 = vor.u32 1.1754944e-38, %v5571
    %v5573 = vsel %vm5570, %v5572, %v5568
    %v5574 = vmul.f32 1.0, %v5573
    %v5575 = vrcp.pop %v5391
    %v5576 = vmul.f32 %v5391, %v5575
    %v5577 = vsub.f32 1.0, %v5576
    %v5578 = vmul.f32 %v5575, %v5577
    %v5579 = vadd.f32 %v5575, %v5578
    %vm5580 = vweird.f32 %v5391
    %vm5581 = vweird.f32 %v5575
    %vm5582 = vmor %vm5580, %vm5581
    %v5583 = vsel %vm5582, %v5575, %v5579
    %v5584 = vand.u32 2147483647, %v5391
    %vm5585 = vcmp.eq.f32.partialorder %v5584, 8.507059e+37
    %v5586 = vand.u32 %v5391, 2147483648
    %v5587 = vor.u32 1.1754944e-38, %v5586
    %v5588 = vsel %vm5585, %v5587, %v5583
    %v5589 = vmul.f32 1.0, %v5588
    %v5590 = vrcp.pop %v5392
    %v5591 = vmul.f32 %v5392, %v5590
    %v5592 = vsub.f32 1.0, %v5591
    %v5593 = vmul.f32 %v5590, %v5592
    %v5594 = vadd.f32 %v5590, %v5593
    %vm5595 = vweird.f32 %v5392
    %vm5596 = vweird.f32 %v5590
    %vm5597 = vmor %vm5595, %vm5596
    %v5598 = vsel %vm5597, %v5590, %v5594
    %v5599 = vand.u32 2147483647, %v5392
    %vm5600 = vcmp.eq.f32.partialorder %v5599, 8.507059e+37
    %v5601 = vand.u32 %v5392, 2147483648
    %v5602 = vor.u32 1.1754944e-38, %v5601
    %v5603 = vsel %vm5600, %v5602, %v5598
    %v5604 = vmul.f32 1.0, %v5603
    %v5605 = vrcp.pop %v5393
    %v5606 = vmul.f32 %v5393, %v5605
    %v5607 = vsub.f32 1.0, %v5606
    %v5608 = vmul.f32 %v5605, %v5607
    %v5609 = vadd.f32 %v5605, %v5608
    %vm5610 = vweird.f32 %v5393
    %vm5611 = vweird.f32 %v5605
    %vm5612 = vmor %vm5610, %vm5611
    %v5613 = vsel %vm5612, %v5605, %v5609
    %v5614 = vand.u32 2147483647, %v5393
    %vm5615 = vcmp.eq.f32.partialorder %v5614, 8.507059e+37
    %v5616 = vand.u32 %v5393, 2147483648
    %v5617 = vor.u32 1.1754944e-38, %v5616
    %v5618 = vsel %vm5615, %v5617, %v5613
    %v5619 = vmul.f32 1.0, %v5618
    %v5620 = vrcp.pop %v5394
    %v5621 = vmul.f32 %v5394, %v5620
    %v5622 = vsub.f32 1.0, %v5621
    %v5623 = vmul.f32 %v5620, %v5622
    %v5624 = vadd.f32 %v5620, %v5623
    %vm5625 = vweird.f32 %v5394
    %vm5626 = vweird.f32 %v5620
    %vm5627 = vmor %vm5625, %vm5626
    %v5628 = vsel %vm5627, %v5620, %v5624
    %v5629 = vand.u32 2147483647, %v5394
    %vm5630 = vcmp.eq.f32.partialorder %v5629, 8.507059e+37
    %v5631 = vand.u32 %v5394, 2147483648
    %v5632 = vor.u32 1.1754944e-38, %v5631
    %v5633 = vsel %vm5630, %v5632, %v5628
    %v5634 = vmul.f32 1.0, %v5633
    %v5635 = vtanh.pop %v5315
    %v5636 = vtanh.pop %v5316
    %v5637 = vtanh.pop %v5317
    %v5638 = vtanh.pop %v5318
    %v5639 = vtanh.pop %v5319
    %v5640 = vtanh.pop %v5320
    %v5641 = vtanh.pop %v5321
    %v5642 = vtanh.pop %v5322
    %v5643 = vtanh.pop %v5323
    %v5644 = vtanh.pop %v5324
    %v5645 = vtanh.pop %v5325
    %v5646 = vtanh.pop %v5326
    %v5647 = vtanh.pop %v5327
    %v5648 = vtanh.pop %v5328
    %v5649 = vtanh.pop %v5329
    %v5650 = vtanh.pop %v5330
    %v5651 = vmul.f32 %v5409, %v5012
    %v5652 = vmul.f32 %v5424, %v5013
    %v5653 = vmul.f32 %v5439, %v5014
    %v5654 = vmul.f32 %v5454, %v5015
    %v5655 = vmul.f32 %v5469, %v5016
    %v5656 = vmul.f32 %v5484, %v5017
    %v5657 = vmul.f32 %v5499, %v5018
    %v5658 = vmul.f32 %v5514, %v5019
    %v5659 = vmul.f32 %v5529, %v5020
    %v5660 = vmul.f32 %v5544, %v5021
    %v5661 = vmul.f32 %v5559, %v5022
    %v5662 = vmul.f32 %v5574, %v5023
    %v5663 = vmul.f32 %v5589, %v5024
    %v5664 = vmul.f32 %v5604, %v5025
    %v5665 = vmul.f32 %v5619, %v5026
    %v5666 = vmul.f32 %v5634, %v5027
    %5683 = vrot.lane.b32.xlu0 %v5635, 64
    %v5684 = vpop.permute.xlu0 %5683
    %5685 = vrot.lane.b32.xlu0 %v5636, 64
    %v5686 = vpop.permute.xlu0 %5685
    %5687 = vrot.lane.b32.xlu0 %v5637, 64
    %v5688 = vpop.permute.xlu0 %5687
    %5689 = vrot.lane.b32.xlu0 %v5638, 64
    %v5690 = vpop.permute.xlu0 %5689
    %5691 = vrot.lane.b32.xlu0 %v5639, 64
    %v5692 = vpop.permute.xlu0 %5691
    %5693 = vrot.lane.b32.xlu0 %v5640, 64
    %v5694 = vpop.permute.xlu0 %5693
    %5695 = vrot.lane.b32.xlu0 %v5641, 64
    %v5696 = vpop.permute.xlu0 %5695
    %5697 = vrot.lane.b32.xlu0 %v5642, 64
    %v5698 = vpop.permute.xlu0 %5697
    %5699 = vrot.lane.b32.xlu0 %v5643, 64
    %v5700 = vpop.permute.xlu0 %5699
    %5701 = vrot.lane.b32.xlu0 %v5644, 64
    %v5702 = vpop.permute.xlu0 %5701
    %5703 = vrot.lane.b32.xlu0 %v5645, 64
    %v5704 = vpop.permute.xlu0 %5703
    %5705 = vrot.lane.b32.xlu0 %v5646, 64
    %v5706 = vpop.permute.xlu0 %5705
    %5707 = vrot.lane.b32.xlu0 %v5647, 64
    %v5708 = vpop.permute.xlu0 %5707
    %5709 = vrot.lane.b32.xlu0 %v5648, 64
    %v5710 = vpop.permute.xlu0 %5709
    %5711 = vrot.lane.b32.xlu0 %v5649, 64
    %v5712 = vpop.permute.xlu0 %5711
    %5713 = vrot.lane.b32.xlu0 %v5650, 64
    %v5714 = vpop.permute.xlu0 %5713
    %v5731 = vmul.f32 %v5409, %v5684
    %v5732 = vmul.f32 %v5424, %v5686
    %v5733 = vmul.f32 %v5439, %v5688
    %v5734 = vmul.f32 %v5454, %v5690
    %v5735 = vmul.f32 %v5469, %v5692
    %v5736 = vmul.f32 %v5484, %v5694
    %v5737 = vmul.f32 %v5499, %v5696
    %v5738 = vmul.f32 %v5514, %v5698
    %v5739 = vmul.f32 %v5529, %v5700
    %v5740 = vmul.f32 %v5544, %v5702
    %v5741 = vmul.f32 %v5559, %v5704
    %v5742 = vmul.f32 %v5574, %v5706
    %v5743 = vmul.f32 %v5589, %v5708
    %v5744 = vmul.f32 %v5604, %v5710
    %v5745 = vmul.f32 %v5619, %v5712
    %v5746 = vmul.f32 %v5634, %v5714
    %5763 = vrot.lane.b32.xlu0 %v5731, 32
    %v5764 = vpop.permute.xlu0 %5763
    %5765 = vrot.lane.b32.xlu0 %v5732, 32
    %v5766 = vpop.permute.xlu0 %5765
    %5767 = vrot.lane.b32.xlu0 %v5733, 32
    %v5768 = vpop.permute.xlu0 %5767
    %5769 = vrot.lane.b32.xlu0 %v5734, 32
    %v5770 = vpop.permute.xlu0 %5769
    %5771 = vrot.lane.b32.xlu0 %v5735, 32
    %v5772 = vpop.permute.xlu0 %5771
    %5773 = vrot.lane.b32.xlu0 %v5736, 32
    %v5774 = vpop.permute.xlu0 %5773
    %5775 = vrot.lane.b32.xlu0 %v5737, 32
    %v5776 = vpop.permute.xlu0 %5775
    %5777 = vrot.lane.b32.xlu0 %v5738, 32
    %v5778 = vpop.permute.xlu0 %5777
    %5779 = vrot.lane.b32.xlu0 %v5739, 32
    %v5780 = vpop.permute.xlu0 %5779
    %5781 = vrot.lane.b32.xlu0 %v5740, 32
    %v5782 = vpop.permute.xlu0 %5781
    %5783 = vrot.lane.b32.xlu0 %v5741, 32
    %v5784 = vpop.permute.xlu0 %5783
    %5785 = vrot.lane.b32.xlu0 %v5742, 32
    %v5786 = vpop.permute.xlu0 %5785
    %5787 = vrot.lane.b32.xlu0 %v5743, 32
    %v5788 = vpop.permute.xlu0 %5787
    %5789 = vrot.lane.b32.xlu0 %v5744, 32
    %v5790 = vpop.permute.xlu0 %5789
    %5791 = vrot.lane.b32.xlu0 %v5745, 32
    %v5792 = vpop.permute.xlu0 %5791
    %5793 = vrot.lane.b32.xlu0 %v5746, 32
    %v5794 = vpop.permute.xlu0 %5793
    %v5811 = vadd.f32 %v5651, %v5764
    %v5812 = vadd.f32 %v5652, %v5766
    %v5813 = vadd.f32 %v5653, %v5768
    %v5814 = vadd.f32 %v5654, %v5770
    %v5815 = vadd.f32 %v5655, %v5772
    %v5816 = vadd.f32 %v5656, %v5774
    %v5817 = vadd.f32 %v5657, %v5776
    %v5818 = vadd.f32 %v5658, %v5778
    %v5819 = vadd.f32 %v5659, %v5780
    %v5820 = vadd.f32 %v5660, %v5782
    %v5821 = vadd.f32 %v5661, %v5784
    %v5822 = vadd.f32 %v5662, %v5786
    %v5823 = vadd.f32 %v5663, %v5788
    %v5824 = vadd.f32 %v5664, %v5790
    %v5825 = vadd.f32 %v5665, %v5792
    %v5826 = vadd.f32 %v5666, %v5794
    %v5827 = vtanh.pop %v5811
    %v5828 = vtanh.pop %v5812
    %v5829 = vtanh.pop %v5813
    %v5830 = vtanh.pop %v5814
    %v5831 = vtanh.pop %v5815
    %v5832 = vtanh.pop %v5816
    %v5833 = vtanh.pop %v5817
    %v5834 = vtanh.pop %v5818
    %v5835 = vtanh.pop %v5819
    %v5836 = vtanh.pop %v5820
    %v5837 = vtanh.pop %v5821
    %v5838 = vtanh.pop %v5822
    %v5839 = vtanh.pop %v5823
    %v5840 = vtanh.pop %v5824
    %v5841 = vtanh.pop %v5825
    %v5842 = vtanh.pop %v5826
    %5859 = vrot.lane.b32.xlu0 %v5827, 64
    %v5860 = vpop.permute.xlu0 %5859
    %5861 = vrot.lane.b32.xlu0 %v5828, 64
    %v5862 = vpop.permute.xlu0 %5861
    %5863 = vrot.lane.b32.xlu0 %v5829, 64
    %v5864 = vpop.permute.xlu0 %5863
    %5865 = vrot.lane.b32.xlu0 %v5830, 64
    %v5866 = vpop.permute.xlu0 %5865
    %5867 = vrot.lane.b32.xlu0 %v5831, 64
    %v5868 = vpop.permute.xlu0 %5867
    %5869 = vrot.lane.b32.xlu0 %v5832, 64
    %v5870 = vpop.permute.xlu0 %5869
    %5871 = vrot.lane.b32.xlu0 %v5833, 64
    %v5872 = vpop.permute.xlu0 %5871
    %5873 = vrot.lane.b32.xlu0 %v5834, 64
    %v5874 = vpop.permute.xlu0 %5873
    %5875 = vrot.lane.b32.xlu0 %v5835, 64
    %v5876 = vpop.permute.xlu0 %5875
    %5877 = vrot.lane.b32.xlu0 %v5836, 64
    %v5878 = vpop.permute.xlu0 %5877
    %5879 = vrot.lane.b32.xlu0 %v5837, 64
    %v5880 = vpop.permute.xlu0 %5879
    %5881 = vrot.lane.b32.xlu0 %v5838, 64
    %v5882 = vpop.permute.xlu0 %5881
    %5883 = vrot.lane.b32.xlu0 %v5839, 64
    %v5884 = vpop.permute.xlu0 %5883
    %5885 = vrot.lane.b32.xlu0 %v5840, 64
    %v5886 = vpop.permute.xlu0 %5885
    %5887 = vrot.lane.b32.xlu0 %v5841, 64
    %v5888 = vpop.permute.xlu0 %5887
    %5889 = vrot.lane.b32.xlu0 %v5842, 64
    %v5890 = vpop.permute.xlu0 %5889
    %v5907 = vmul.f32 %v5409, %v5860
    %v5908 = vmul.f32 %v5424, %v5862
    %v5909 = vmul.f32 %v5439, %v5864
    %v5910 = vmul.f32 %v5454, %v5866
    %v5911 = vmul.f32 %v5469, %v5868
    %v5912 = vmul.f32 %v5484, %v5870
    %v5913 = vmul.f32 %v5499, %v5872
    %v5914 = vmul.f32 %v5514, %v5874
    %v5915 = vmul.f32 %v5529, %v5876
    %v5916 = vmul.f32 %v5544, %v5878
    %v5917 = vmul.f32 %v5559, %v5880
    %v5918 = vmul.f32 %v5574, %v5882
    %v5919 = vmul.f32 %v5589, %v5884
    %v5920 = vmul.f32 %v5604, %v5886
    %v5921 = vmul.f32 %v5619, %v5888
    %v5922 = vmul.f32 %v5634, %v5890
    %v5923 = vld [vmem:[#allocation2 + $0x7] sm:$0x1]
    %v5924 = vld [vmem:[#allocation2 + $0xf] sm:$0x1]
    %v5925 = vld [vmem:[#allocation2 + $0x17] sm:$0x1]
    %v5926 = vld [vmem:[#allocation2 + $0x1f] sm:$0x1]
    %v5927 = vld [vmem:[#allocation2 + $0x27] sm:$0x1]
    %v5928 = vld [vmem:[#allocation2 + $0x2f] sm:$0x1]
    %v5929 = vld [vmem:[#allocation2 + $0x37] sm:$0x1]
    %v5930 = vld [vmem:[#allocation2 + $0x3f] sm:$0x1]
    %v5931 = vld [vmem:[#allocation2 + $0x47] sm:$0x1]
    %v5932 = vld [vmem:[#allocation2 + $0x4f] sm:$0x1]
    %v5933 = vld [vmem:[#allocation2 + $0x57] sm:$0x1]
    %v5934 = vld [vmem:[#allocation2 + $0x5f] sm:$0x1]
    %v5935 = vld [vmem:[#allocation2 + $0x67] sm:$0x1]
    %v5936 = vld [vmem:[#allocation2 + $0x6f] sm:$0x1]
    %v5937 = vld [vmem:[#allocation2 + $0x77] sm:$0x1]
    %v5938 = vld [vmem:[#allocation2 + $0x7f] sm:$0x1]
    %5939 = vset.pattern.permute.xlu0 7
    %5940 = vperm.xlu0 %5939, %v360
    %v5941 = vpop.permute.xlu0 %5940
    %5942 = vset.pattern.permute.xlu0 7
    %5943 = vperm.xlu0 %5942, %v361
    %v5944 = vpop.permute.xlu0 %5943
    %v5945 = vrot.slane %v5941, 1
    %v5946 = vrot.slane %v5941, 2
    %v5947 = vrot.slane %v5941, 3
    %v5948 = vrot.slane %v5941, 4
    %v5949 = vrot.slane %v5941, 5
    %v5950 = vrot.slane %v5941, 6
    %v5951 = vrot.slane %v5941, 7
    %v5952 = vrot.slane %v5944, 1
    %v5953 = vrot.slane %v5944, 2
    %v5954 = vrot.slane %v5944, 3
    %v5955 = vrot.slane %v5944, 4
    %v5956 = vrot.slane %v5944, 5
    %v5957 = vrot.slane %v5944, 6
    %v5958 = vrot.slane %v5944, 7
    %v5975 = vmul.f32 %v5923, %v5941
    %v5976 = vmul.f32 %v5924, %v5945
    %v5977 = vmul.f32 %v5925, %v5946
    %v5978 = vmul.f32 %v5926, %v5947
    %v5979 = vmul.f32 %v5927, %v5948
    %v5980 = vmul.f32 %v5928, %v5949
    %v5981 = vmul.f32 %v5929, %v5950
    %v5982 = vmul.f32 %v5930, %v5951
    %v5983 = vmul.f32 %v5931, %v5944
    %v5984 = vmul.f32 %v5932, %v5952
    %v5985 = vmul.f32 %v5933, %v5953
    %v5986 = vmul.f32 %v5934, %v5954
    %v5987 = vmul.f32 %v5935, %v5955
    %v5988 = vmul.f32 %v5936, %v5956
    %v5989 = vmul.f32 %v5937, %v5957
    %v5990 = vmul.f32 %v5938, %v5958
    %v6007 = vrot.slane %v5908, 7
    %v6008 = vsel %vm1207, %v6007, %v5907
    %v6009 = vrot.slane %v5909, 6
    %v6010 = vsel %vm1210, %v6009, %v6008
    %v6011 = vrot.slane %v5910, 5
    %v6012 = vsel %vm1213, %v6011, %v6010
    %v6013 = vrot.slane %v5911, 4
    %v6014 = vsel %vm1216, %v6013, %v6012
    %v6015 = vrot.slane %v5912, 3
    %v6016 = vsel %vm1219, %v6015, %v6014
    %v6017 = vrot.slane %v5913, 2
    %v6018 = vsel %vm1222, %v6017, %v6016
    %v6019 = vrot.slane %v5914, 1
    %v6020 = vsel %vm1225, %v6019, %v6018
    %v6021 = vrot.slane %v5916, 7
    %v6022 = vsel %vm1207, %v6021, %v5915
    %v6023 = vrot.slane %v5917, 6
    %v6024 = vsel %vm1210, %v6023, %v6022
    %v6025 = vrot.slane %v5918, 5
    %v6026 = vsel %vm1213, %v6025, %v6024
    %v6027 = vrot.slane %v5919, 4
    %v6028 = vsel %vm1216, %v6027, %v6026
    %v6029 = vrot.slane %v5920, 3
    %v6030 = vsel %vm1219, %v6029, %v6028
    %v6031 = vrot.slane %v5921, 2
    %v6032 = vsel %vm1222, %v6031, %v6030
    %v6033 = vrot.slane %v5922, 1
    %v6034 = vsel %vm1225, %v6033, %v6032
    %6035 = vrot.lane.b32.xlu0 %v6020, 32
    %v6036 = vpop.permute.xlu0 %6035
    %6037 = vrot.lane.b32.xlu0 %v6034, 32
    %v6038 = vpop.permute.xlu0 %6037
    %v6039 = vsel %vm230, %v6036, 0
    %v6041 = vsel %vm230, %v6038, 0
    %6043 = vmatpush.msra.mxu0 0.0
    %6044 = vmatpush.msra.mxu0 0.0
    %6045 = vmatpush.msra.mxu0 0.0
    %6046 = vmatpush.msra.mxu0 0.0
    %6047 = vmatpush.msra.mxu0 0.0
    %6048 = vmatpush.msra.mxu0 0.0
    %6049 = vmatpush.msra.mxu0 0.0
    %6050 = vmatpush.msra.mxu0 0.0
    %6051 = vmatpush.msra.mxu0 0.0
    %6052 = vmatpush.msra.mxu0 0.0
    %6053 = vmatpush.msra.mxu0 0.0
    %6054 = vmatpush.msra.mxu0 0.0
    %6055 = vmatpush.msra.mxu0 %v365
    %6056 = vmatpush.msra.mxu0 %v364
    %6057 = vmatpush.msra.mxu0 %v363
    %6058 = vmatpush.msra.mxu0 %v362
    %6059 = vmatmul.f32.gmra.mxu0 %v6039
    %v6060 = vpop.f32.mrf.mxu0
    %v6061 = vadd.f32 0.0, %v6060
    %6062 = vmatmul.f32.gmra.mxu0 %v6041
    %v6063 = vpop.f32.mrf.mxu0
    %v6064 = vadd.f32 0.0, %v6063
    %6065 = vdwg.mxu0
    %v6068 = vrot.slane %v6061, 1
    %v6069 = vrot.slane %v6061, 2
    %v6070 = vrot.slane %v6061, 3
    %v6071 = vrot.slane %v6061, 4
    %v6072 = vrot.slane %v6061, 5
    %v6073 = vrot.slane %v6061, 6
    %v6074 = vrot.slane %v6061, 7
    %v6075 = vrot.slane %v6064, 1
    %v6076 = vrot.slane %v6064, 2
    %v6077 = vrot.slane %v6064, 3
    %v6078 = vrot.slane %v6064, 4
    %v6079 = vrot.slane %v6064, 5
    %v6080 = vrot.slane %v6064, 6
    %v6081 = vrot.slane %v6064, 7
    %v6098 = vadd.f32 %v5975, %v6061
    %v6099 = vadd.f32 %v5976, %v6068
    %v6100 = vadd.f32 %v5977, %v6069
    %v6101 = vadd.f32 %v5978, %v6070
    %v6102 = vadd.f32 %v5979, %v6071
    %v6103 = vadd.f32 %v5980, %v6072
    %v6104 = vadd.f32 %v5981, %v6073
    %v6105 = vadd.f32 %v5982, %v6074
    %v6106 = vadd.f32 %v5983, %v6064
    %v6107 = vadd.f32 %v5984, %v6075
    %v6108 = vadd.f32 %v5985, %v6076
    %v6109 = vadd.f32 %v5986, %v6077
    %v6110 = vadd.f32 %v5987, %v6078
    %v6111 = vadd.f32 %v5988, %v6079
    %v6112 = vadd.f32 %v5989, %v6080
    %v6113 = vadd.f32 %v5990, %v6081
    %v6114 = vadd.f32 %v6098, %v512
    %v6115 = vadd.f32 %v6099, %v512
    %v6116 = vadd.f32 %v6100, %v512
    %v6117 = vadd.f32 %v6101, %v512
    %v6118 = vadd.f32 %v6102, %v512
    %v6119 = vadd.f32 %v6103, %v512
    %v6120 = vadd.f32 %v6104, %v512
    %v6121 = vadd.f32 %v6105, %v512
    %v6122 = vadd.f32 %v6106, %v512
    %v6123 = vadd.f32 %v6107, %v512
    %v6124 = vadd.f32 %v6108, %v512
    %v6125 = vadd.f32 %v6109, %v512
    %v6126 = vadd.f32 %v6110, %v512
    %v6127 = vadd.f32 %v6111, %v512
    %v6128 = vadd.f32 %v6112, %v512
    %v6129 = vadd.f32 %v6113, %v512
    %v6130 = vxor.u32 %v6114, 2147483648
    %v6131 = vxor.u32 %v6115, 2147483648
    %v6132 = vxor.u32 %v6116, 2147483648
    %v6133 = vxor.u32 %v6117, 2147483648
    %v6134 = vxor.u32 %v6118, 2147483648
    %v6135 = vxor.u32 %v6119, 2147483648
    %v6136 = vxor.u32 %v6120, 2147483648
    %v6137 = vxor.u32 %v6121, 2147483648
    %v6138 = vxor.u32 %v6122, 2147483648
    %v6139 = vxor.u32 %v6123, 2147483648
    %v6140 = vxor.u32 %v6124, 2147483648
    %v6141 = vxor.u32 %v6125, 2147483648
    %v6142 = vxor.u32 %v6126, 2147483648
    %v6143 = vxor.u32 %v6127, 2147483648
    %v6144 = vxor.u32 %v6128, 2147483648
    %v6145 = vxor.u32 %v6129, 2147483648
    %v6146 = vmul.f32 %v6130, 1.442695
    %v6147 = vpow.pop %v6146
    %v6148 = vmul.f32 %v6131, 1.442695
    %v6149 = vpow.pop %v6148
    %v6150 = vmul.f32 %v6132, 1.442695
    %v6151 = vpow.pop %v6150
    %v6152 = vmul.f32 %v6133, 1.442695
    %v6153 = vpow.pop %v6152
    %v6154 = vmul.f32 %v6134, 1.442695
    %v6155 = vpow.pop %v6154
    %v6156 = vmul.f32 %v6135, 1.442695
    %v6157 = vpow.pop %v6156
    %v6158 = vmul.f32 %v6136, 1.442695
    %v6159 = vpow.pop %v6158
    %v6160 = vmul.f32 %v6137, 1.442695
    %v6161 = vpow.pop %v6160
    %v6162 = vmul.f32 %v6138, 1.442695
    %v6163 = vpow.pop %v6162
    %v6164 = vmul.f32 %v6139, 1.442695
    %v6165 = vpow.pop %v6164
    %v6166 = vmul.f32 %v6140, 1.442695
    %v6167 = vpow.pop %v6166
    %v6168 = vmul.f32 %v6141, 1.442695
    %v6169 = vpow.pop %v6168
    %v6170 = vmul.f32 %v6142, 1.442695
    %v6171 = vpow.pop %v6170
    %v6172 = vmul.f32 %v6143, 1.442695
    %v6173 = vpow.pop %v6172
    %v6174 = vmul.f32 %v6144, 1.442695
    %v6175 = vpow.pop %v6174
    %v6176 = vmul.f32 %v6145, 1.442695
    %v6177 = vpow.pop %v6176
    %v6178 = vadd.f32 %v6147, 1.0
    %v6179 = vadd.f32 %v6149, 1.0
    %v6180 = vadd.f32 %v6151, 1.0
    %v6181 = vadd.f32 %v6153, 1.0
    %v6182 = vadd.f32 %v6155, 1.0
    %v6183 = vadd.f32 %v6157, 1.0
    %v6184 = vadd.f32 %v6159, 1.0
    %v6185 = vadd.f32 %v6161, 1.0
    %v6186 = vadd.f32 %v6163, 1.0
    %v6187 = vadd.f32 %v6165, 1.0
    %v6188 = vadd.f32 %v6167, 1.0
    %v6189 = vadd.f32 %v6169, 1.0
    %v6190 = vadd.f32 %v6171, 1.0
    %v6191 = vadd.f32 %v6173, 1.0
    %v6192 = vadd.f32 %v6175, 1.0
    %v6193 = vadd.f32 %v6177, 1.0
    %v6194 = vrcp.pop %v6178
    %v6195 = vmul.f32 %v6178, %v6194
    %v6196 = vsub.f32 1.0, %v6195
    %v6197 = vmul.f32 %v6194, %v6196
    %v6198 = vadd.f32 %v6194, %v6197
    %vm6199 = vweird.f32 %v6178
    %vm6200 = vweird.f32 %v6194
    %vm6201 = vmor %vm6199, %vm6200
    %v6202 = vsel %vm6201, %v6194, %v6198
    %v6203 = vand.u32 2147483647, %v6178
    %vm6204 = vcmp.eq.f32.partialorder %v6203, 8.507059e+37
    %v6205 = vand.u32 %v6178, 2147483648
    %v6206 = vor.u32 1.1754944e-38, %v6205
    %v6207 = vsel %vm6204, %v6206, %v6202
    %v6208 = vmul.f32 1.0, %v6207
    %v6209 = vrcp.pop %v6179
    %v6210 = vmul.f32 %v6179, %v6209
    %v6211 = vsub.f32 1.0, %v6210
    %v6212 = vmul.f32 %v6209, %v6211
    %v6213 = vadd.f32 %v6209, %v6212
    %vm6214 = vweird.f32 %v6179
    %vm6215 = vweird.f32 %v6209
    %vm6216 = vmor %vm6214, %vm6215
    %v6217 = vsel %vm6216, %v6209, %v6213
    %v6218 = vand.u32 2147483647, %v6179
    %vm6219 = vcmp.eq.f32.partialorder %v6218, 8.507059e+37
    %v6220 = vand.u32 %v6179, 2147483648
    %v6221 = vor.u32 1.1754944e-38, %v6220
    %v6222 = vsel %vm6219, %v6221, %v6217
    %v6223 = vmul.f32 1.0, %v6222
    %v6224 = vrcp.pop %v6180
    %v6225 = vmul.f32 %v6180, %v6224
    %v6226 = vsub.f32 1.0, %v6225
    %v6227 = vmul.f32 %v6224, %v6226
    %v6228 = vadd.f32 %v6224, %v6227
    %vm6229 = vweird.f32 %v6180
    %vm6230 = vweird.f32 %v6224
    %vm6231 = vmor %vm6229, %vm6230
    %v6232 = vsel %vm6231, %v6224, %v6228
    %v6233 = vand.u32 2147483647, %v6180
    %vm6234 = vcmp.eq.f32.partialorder %v6233, 8.507059e+37
    %v6235 = vand.u32 %v6180, 2147483648
    %v6236 = vor.u32 1.1754944e-38, %v6235
    %v6237 = vsel %vm6234, %v6236, %v6232
    %v6238 = vmul.f32 1.0, %v6237
    %v6239 = vrcp.pop %v6181
    %v6240 = vmul.f32 %v6181, %v6239
    %v6241 = vsub.f32 1.0, %v6240
    %v6242 = vmul.f32 %v6239, %v6241
    %v6243 = vadd.f32 %v6239, %v6242
    %vm6244 = vweird.f32 %v6181
    %vm6245 = vweird.f32 %v6239
    %vm6246 = vmor %vm6244, %vm6245
    %v6247 = vsel %vm6246, %v6239, %v6243
    %v6248 = vand.u32 2147483647, %v6181
    %vm6249 = vcmp.eq.f32.partialorder %v6248, 8.507059e+37
    %v6250 = vand.u32 %v6181, 2147483648
    %v6251 = vor.u32 1.1754944e-38, %v6250
    %v6252 = vsel %vm6249, %v6251, %v6247
    %v6253 = vmul.f32 1.0, %v6252
    %v6254 = vrcp.pop %v6182
    %v6255 = vmul.f32 %v6182, %v6254
    %v6256 = vsub.f32 1.0, %v6255
    %v6257 = vmul.f32 %v6254, %v6256
    %v6258 = vadd.f32 %v6254, %v6257
    %vm6259 = vweird.f32 %v6182
    %vm6260 = vweird.f32 %v6254
    %vm6261 = vmor %vm6259, %vm6260
    %v6262 = vsel %vm6261, %v6254, %v6258
    %v6263 = vand.u32 2147483647, %v6182
    %vm6264 = vcmp.eq.f32.partialorder %v6263, 8.507059e+37
    %v6265 = vand.u32 %v6182, 2147483648
    %v6266 = vor.u32 1.1754944e-38, %v6265
    %v6267 = vsel %vm6264, %v6266, %v6262
    %v6268 = vmul.f32 1.0, %v6267
    %v6269 = vrcp.pop %v6183
    %v6270 = vmul.f32 %v6183, %v6269
    %v6271 = vsub.f32 1.0, %v6270
    %v6272 = vmul.f32 %v6269, %v6271
    %v6273 = vadd.f32 %v6269, %v6272
    %vm6274 = vweird.f32 %v6183
    %vm6275 = vweird.f32 %v6269
    %vm6276 = vmor %vm6274, %vm6275
    %v6277 = vsel %vm6276, %v6269, %v6273
    %v6278 = vand.u32 2147483647, %v6183
    %vm6279 = vcmp.eq.f32.partialorder %v6278, 8.507059e+37
    %v6280 = vand.u32 %v6183, 2147483648
    %v6281 = vor.u32 1.1754944e-38, %v6280
    %v6282 = vsel %vm6279, %v6281, %v6277
    %v6283 = vmul.f32 1.0, %v6282
    %v6284 = vrcp.pop %v6184
    %v6285 = vmul.f32 %v6184, %v6284
    %v6286 = vsub.f32 1.0, %v6285
    %v6287 = vmul.f32 %v6284, %v6286
    %v6288 = vadd.f32 %v6284, %v6287
    %vm6289 = vweird.f32 %v6184
    %vm6290 = vweird.f32 %v6284
    %vm6291 = vmor %vm6289, %vm6290
    %v6292 = vsel %vm6291, %v6284, %v6288
    %v6293 = vand.u32 2147483647, %v6184
    %vm6294 = vcmp.eq.f32.partialorder %v6293, 8.507059e+37
    %v6295 = vand.u32 %v6184, 2147483648
    %v6296 = vor.u32 1.1754944e-38, %v6295
    %v6297 = vsel %vm6294, %v6296, %v6292
    %v6298 = vmul.f32 1.0, %v6297
    %v6299 = vrcp.pop %v6185
    %v6300 = vmul.f32 %v6185, %v6299
    %v6301 = vsub.f32 1.0, %v6300
    %v6302 = vmul.f32 %v6299, %v6301
    %v6303 = vadd.f32 %v6299, %v6302
    %vm6304 = vweird.f32 %v6185
    %vm6305 = vweird.f32 %v6299
    %vm6306 = vmor %vm6304, %vm6305
    %v6307 = vsel %vm6306, %v6299, %v6303
    %v6308 = vand.u32 2147483647, %v6185
    %vm6309 = vcmp.eq.f32.partialorder %v6308, 8.507059e+37
    %v6310 = vand.u32 %v6185, 2147483648
    %v6311 = vor.u32 1.1754944e-38, %v6310
    %v6312 = vsel %vm6309, %v6311, %v6307
    %v6313 = vmul.f32 1.0, %v6312
    %v6314 = vrcp.pop %v6186
    %v6315 = vmul.f32 %v6186, %v6314
    %v6316 = vsub.f32 1.0, %v6315
    %v6317 = vmul.f32 %v6314, %v6316
    %v6318 = vadd.f32 %v6314, %v6317
    %vm6319 = vweird.f32 %v6186
    %vm6320 = vweird.f32 %v6314
    %vm6321 = vmor %vm6319, %vm6320
    %v6322 = vsel %vm6321, %v6314, %v6318
    %v6323 = vand.u32 2147483647, %v6186
    %vm6324 = vcmp.eq.f32.partialorder %v6323, 8.507059e+37
    %v6325 = vand.u32 %v6186, 2147483648
    %v6326 = vor.u32 1.1754944e-38, %v6325
    %v6327 = vsel %vm6324, %v6326, %v6322
    %v6328 = vmul.f32 1.0, %v6327
    %v6329 = vrcp.pop %v6187
    %v6330 = vmul.f32 %v6187, %v6329
    %v6331 = vsub.f32 1.0, %v6330
    %v6332 = vmul.f32 %v6329, %v6331
    %v6333 = vadd.f32 %v6329, %v6332
    %vm6334 = vweird.f32 %v6187
    %vm6335 = vweird.f32 %v6329
    %vm6336 = vmor %vm6334, %vm6335
    %v6337 = vsel %vm6336, %v6329, %v6333
    %v6338 = vand.u32 2147483647, %v6187
    %vm6339 = vcmp.eq.f32.partialorder %v6338, 8.507059e+37
    %v6340 = vand.u32 %v6187, 2147483648
    %v6341 = vor.u32 1.1754944e-38, %v6340
    %v6342 = vsel %vm6339, %v6341, %v6337
    %v6343 = vmul.f32 1.0, %v6342
    %v6344 = vrcp.pop %v6188
    %v6345 = vmul.f32 %v6188, %v6344
    %v6346 = vsub.f32 1.0, %v6345
    %v6347 = vmul.f32 %v6344, %v6346
    %v6348 = vadd.f32 %v6344, %v6347
    %vm6349 = vweird.f32 %v6188
    %vm6350 = vweird.f32 %v6344
    %vm6351 = vmor %vm6349, %vm6350
    %v6352 = vsel %vm6351, %v6344, %v6348
    %v6353 = vand.u32 2147483647, %v6188
    %vm6354 = vcmp.eq.f32.partialorder %v6353, 8.507059e+37
    %v6355 = vand.u32 %v6188, 2147483648
    %v6356 = vor.u32 1.1754944e-38, %v6355
    %v6357 = vsel %vm6354, %v6356, %v6352
    %v6358 = vmul.f32 1.0, %v6357
    %v6359 = vrcp.pop %v6189
    %v6360 = vmul.f32 %v6189, %v6359
    %v6361 = vsub.f32 1.0, %v6360
    %v6362 = vmul.f32 %v6359, %v6361
    %v6363 = vadd.f32 %v6359, %v6362
    %vm6364 = vweird.f32 %v6189
    %vm6365 = vweird.f32 %v6359
    %vm6366 = vmor %vm6364, %vm6365
    %v6367 = vsel %vm6366, %v6359, %v6363
    %v6368 = vand.u32 2147483647, %v6189
    %vm6369 = vcmp.eq.f32.partialorder %v6368, 8.507059e+37
    %v6370 = vand.u32 %v6189, 2147483648
    %v6371 = vor.u32 1.1754944e-38, %v6370
    %v6372 = vsel %vm6369, %v6371, %v6367
    %v6373 = vmul.f32 1.0, %v6372
    %v6374 = vrcp.pop %v6190
    %v6375 = vmul.f32 %v6190, %v6374
    %v6376 = vsub.f32 1.0, %v6375
    %v6377 = vmul.f32 %v6374, %v6376
    %v6378 = vadd.f32 %v6374, %v6377
    %vm6379 = vweird.f32 %v6190
    %vm6380 = vweird.f32 %v6374
    %vm6381 = vmor %vm6379, %vm6380
    %v6382 = vsel %vm6381, %v6374, %v6378
    %v6383 = vand.u32 2147483647, %v6190
    %vm6384 = vcmp.eq.f32.partialorder %v6383, 8.507059e+37
    %v6385 = vand.u32 %v6190, 2147483648
    %v6386 = vor.u32 1.1754944e-38, %v6385
    %v6387 = vsel %vm6384, %v6386, %v6382
    %v6388 = vmul.f32 1.0, %v6387
    %v6389 = vrcp.pop %v6191
    %v6390 = vmul.f32 %v6191, %v6389
    %v6391 = vsub.f32 1.0, %v6390
    %v6392 = vmul.f32 %v6389, %v6391
    %v6393 = vadd.f32 %v6389, %v6392
    %vm6394 = vweird.f32 %v6191
    %vm6395 = vweird.f32 %v6389
    %vm6396 = vmor %vm6394, %vm6395
    %v6397 = vsel %vm6396, %v6389, %v6393
    %v6398 = vand.u32 2147483647, %v6191
    %vm6399 = vcmp.eq.f32.partialorder %v6398, 8.507059e+37
    %v6400 = vand.u32 %v6191, 2147483648
    %v6401 = vor.u32 1.1754944e-38, %v6400
    %v6402 = vsel %vm6399, %v6401, %v6397
    %v6403 = vmul.f32 1.0, %v6402
    %v6404 = vrcp.pop %v6192
    %v6405 = vmul.f32 %v6192, %v6404
    %v6406 = vsub.f32 1.0, %v6405
    %v6407 = vmul.f32 %v6404, %v6406
    %v6408 = vadd.f32 %v6404, %v6407
    %vm6409 = vweird.f32 %v6192
    %vm6410 = vweird.f32 %v6404
    %vm6411 = vmor %vm6409, %vm6410
    %v6412 = vsel %vm6411, %v6404, %v6408
    %v6413 = vand.u32 2147483647, %v6192
    %vm6414 = vcmp.eq.f32.partialorder %v6413, 8.507059e+37
    %v6415 = vand.u32 %v6192, 2147483648
    %v6416 = vor.u32 1.1754944e-38, %v6415
    %v6417 = vsel %vm6414, %v6416, %v6412
    %v6418 = vmul.f32 1.0, %v6417
    %v6419 = vrcp.pop %v6193
    %v6420 = vmul.f32 %v6193, %v6419
    %v6421 = vsub.f32 1.0, %v6420
    %v6422 = vmul.f32 %v6419, %v6421
    %v6423 = vadd.f32 %v6419, %v6422
    %vm6424 = vweird.f32 %v6193
    %vm6425 = vweird.f32 %v6419
    %vm6426 = vmor %vm6424, %vm6425
    %v6427 = vsel %vm6426, %v6419, %v6423
    %v6428 = vand.u32 2147483647, %v6193
    %vm6429 = vcmp.eq.f32.partialorder %v6428, 8.507059e+37
    %v6430 = vand.u32 %v6193, 2147483648
    %v6431 = vor.u32 1.1754944e-38, %v6430
    %v6432 = vsel %vm6429, %v6431, %v6427
    %v6433 = vmul.f32 1.0, %v6432
    %v6434 = vtanh.pop %v6114
    %v6435 = vtanh.pop %v6115
    %v6436 = vtanh.pop %v6116
    %v6437 = vtanh.pop %v6117
    %v6438 = vtanh.pop %v6118
    %v6439 = vtanh.pop %v6119
    %v6440 = vtanh.pop %v6120
    %v6441 = vtanh.pop %v6121
    %v6442 = vtanh.pop %v6122
    %v6443 = vtanh.pop %v6123
    %v6444 = vtanh.pop %v6124
    %v6445 = vtanh.pop %v6125
    %v6446 = vtanh.pop %v6126
    %v6447 = vtanh.pop %v6127
    %v6448 = vtanh.pop %v6128
    %v6449 = vtanh.pop %v6129
    %v6450 = vmul.f32 %v6208, %v5811
    %v6451 = vmul.f32 %v6223, %v5812
    %v6452 = vmul.f32 %v6238, %v5813
    %v6453 = vmul.f32 %v6253, %v5814
    %v6454 = vmul.f32 %v6268, %v5815
    %v6455 = vmul.f32 %v6283, %v5816
    %v6456 = vmul.f32 %v6298, %v5817
    %v6457 = vmul.f32 %v6313, %v5818
    %v6458 = vmul.f32 %v6328, %v5819
    %v6459 = vmul.f32 %v6343, %v5820
    %v6460 = vmul.f32 %v6358, %v5821
    %v6461 = vmul.f32 %v6373, %v5822
    %v6462 = vmul.f32 %v6388, %v5823
    %v6463 = vmul.f32 %v6403, %v5824
    %v6464 = vmul.f32 %v6418, %v5825
    %v6465 = vmul.f32 %v6433, %v5826
    %6482 = vrot.lane.b32.xlu0 %v6434, 64
    %v6483 = vpop.permute.xlu0 %6482
    %6484 = vrot.lane.b32.xlu0 %v6435, 64
    %v6485 = vpop.permute.xlu0 %6484
    %6486 = vrot.lane.b32.xlu0 %v6436, 64
    %v6487 = vpop.permute.xlu0 %6486
    %6488 = vrot.lane.b32.xlu0 %v6437, 64
    %v6489 = vpop.permute.xlu0 %6488
    %6490 = vrot.lane.b32.xlu0 %v6438, 64
    %v6491 = vpop.permute.xlu0 %6490
    %6492 = vrot.lane.b32.xlu0 %v6439, 64
    %v6493 = vpop.permute.xlu0 %6492
    %6494 = vrot.lane.b32.xlu0 %v6440, 64
    %v6495 = vpop.permute.xlu0 %6494
    %6496 = vrot.lane.b32.xlu0 %v6441, 64
    %v6497 = vpop.permute.xlu0 %6496
    %6498 = vrot.lane.b32.xlu0 %v6442, 64
    %v6499 = vpop.permute.xlu0 %6498
    %6500 = vrot.lane.b32.xlu0 %v6443, 64
    %v6501 = vpop.permute.xlu0 %6500
    %6502 = vrot.lane.b32.xlu0 %v6444, 64
    %v6503 = vpop.permute.xlu0 %6502
    %6504 = vrot.lane.b32.xlu0 %v6445, 64
    %v6505 = vpop.permute.xlu0 %6504
    %6506 = vrot.lane.b32.xlu0 %v6446, 64
    %v6507 = vpop.permute.xlu0 %6506
    %6508 = vrot.lane.b32.xlu0 %v6447, 64
    %v6509 = vpop.permute.xlu0 %6508
    %6510 = vrot.lane.b32.xlu0 %v6448, 64
    %v6511 = vpop.permute.xlu0 %6510
    %6512 = vrot.lane.b32.xlu0 %v6449, 64
    %v6513 = vpop.permute.xlu0 %6512
    %v6530 = vmul.f32 %v6208, %v6483
    %v6531 = vmul.f32 %v6223, %v6485
    %v6532 = vmul.f32 %v6238, %v6487
    %v6533 = vmul.f32 %v6253, %v6489
    %v6534 = vmul.f32 %v6268, %v6491
    %v6535 = vmul.f32 %v6283, %v6493
    %v6536 = vmul.f32 %v6298, %v6495
    %v6537 = vmul.f32 %v6313, %v6497
    %v6538 = vmul.f32 %v6328, %v6499
    %v6539 = vmul.f32 %v6343, %v6501
    %v6540 = vmul.f32 %v6358, %v6503
    %v6541 = vmul.f32 %v6373, %v6505
    %v6542 = vmul.f32 %v6388, %v6507
    %v6543 = vmul.f32 %v6403, %v6509
    %v6544 = vmul.f32 %v6418, %v6511
    %v6545 = vmul.f32 %v6433, %v6513
    %6562 = vrot.lane.b32.xlu0 %v6530, 32
    %v6563 = vpop.permute.xlu0 %6562
    %6564 = vrot.lane.b32.xlu0 %v6531, 32
    %v6565 = vpop.permute.xlu0 %6564
    %6566 = vrot.lane.b32.xlu0 %v6532, 32
    %v6567 = vpop.permute.xlu0 %6566
    %6568 = vrot.lane.b32.xlu0 %v6533, 32
    %v6569 = vpop.permute.xlu0 %6568
    %6570 = vrot.lane.b32.xlu0 %v6534, 32
    %v6571 = vpop.permute.xlu0 %6570
    %6572 = vrot.lane.b32.xlu0 %v6535, 32
    %v6573 = vpop.permute.xlu0 %6572
    %6574 = vrot.lane.b32.xlu0 %v6536, 32
    %v6575 = vpop.permute.xlu0 %6574
    %6576 = vrot.lane.b32.xlu0 %v6537, 32
    %v6577 = vpop.permute.xlu0 %6576
    %6578 = vrot.lane.b32.xlu0 %v6538, 32
    %v6579 = vpop.permute.xlu0 %6578
    %6580 = vrot.lane.b32.xlu0 %v6539, 32
    %v6581 = vpop.permute.xlu0 %6580
    %6582 = vrot.lane.b32.xlu0 %v6540, 32
    %v6583 = vpop.permute.xlu0 %6582
    %6584 = vrot.lane.b32.xlu0 %v6541, 32
    %v6585 = vpop.permute.xlu0 %6584
    %6586 = vrot.lane.b32.xlu0 %v6542, 32
    %v6587 = vpop.permute.xlu0 %6586
    %6588 = vrot.lane.b32.xlu0 %v6543, 32
    %v6589 = vpop.permute.xlu0 %6588
    %6590 = vrot.lane.b32.xlu0 %v6544, 32
    %v6591 = vpop.permute.xlu0 %6590
    %6592 = vrot.lane.b32.xlu0 %v6545, 32
    %v6593 = vpop.permute.xlu0 %6592
    %v6610 = vadd.f32 %v6450, %v6563
    %v6611 = vadd.f32 %v6451, %v6565
    %v6612 = vadd.f32 %v6452, %v6567
    %v6613 = vadd.f32 %v6453, %v6569
    %v6614 = vadd.f32 %v6454, %v6571
    %v6615 = vadd.f32 %v6455, %v6573
    %v6616 = vadd.f32 %v6456, %v6575
    %v6617 = vadd.f32 %v6457, %v6577
    %v6618 = vadd.f32 %v6458, %v6579
    %v6619 = vadd.f32 %v6459, %v6581
    %v6620 = vadd.f32 %v6460, %v6583
    %v6621 = vadd.f32 %v6461, %v6585
    %v6622 = vadd.f32 %v6462, %v6587
    %v6623 = vadd.f32 %v6463, %v6589
    %v6624 = vadd.f32 %v6464, %v6591
    %v6625 = vadd.f32 %v6465, %v6593
    %v6626 = vtanh.pop %v6610
    %v6627 = vtanh.pop %v6611
    %v6628 = vtanh.pop %v6612
    %v6629 = vtanh.pop %v6613
    %v6630 = vtanh.pop %v6614
    %v6631 = vtanh.pop %v6615
    %v6632 = vtanh.pop %v6616
    %v6633 = vtanh.pop %v6617
    %v6634 = vtanh.pop %v6618
    %v6635 = vtanh.pop %v6619
    %v6636 = vtanh.pop %v6620
    %v6637 = vtanh.pop %v6621
    %v6638 = vtanh.pop %v6622
    %v6639 = vtanh.pop %v6623
    %v6640 = vtanh.pop %v6624
    %v6641 = vtanh.pop %v6625
    %6658 = vrot.lane.b32.xlu0 %v6626, 64
    %v6659 = vpop.permute.xlu0 %6658
    %6660 = vrot.lane.b32.xlu0 %v6627, 64
    %v6661 = vpop.permute.xlu0 %6660
    %6662 = vrot.lane.b32.xlu0 %v6628, 64
    %v6663 = vpop.permute.xlu0 %6662
    %6664 = vrot.lane.b32.xlu0 %v6629, 64
    %v6665 = vpop.permute.xlu0 %6664
    %6666 = vrot.lane.b32.xlu0 %v6630, 64
    %v6667 = vpop.permute.xlu0 %6666
    %6668 = vrot.lane.b32.xlu0 %v6631, 64
    %v6669 = vpop.permute.xlu0 %6668
    %6670 = vrot.lane.b32.xlu0 %v6632, 64
    %v6671 = vpop.permute.xlu0 %6670
    %6672 = vrot.lane.b32.xlu0 %v6633, 64
    %v6673 = vpop.permute.xlu0 %6672
    %6674 = vrot.lane.b32.xlu0 %v6634, 64
    %v6675 = vpop.permute.xlu0 %6674
    %6676 = vrot.lane.b32.xlu0 %v6635, 64
    %v6677 = vpop.permute.xlu0 %6676
    %6678 = vrot.lane.b32.xlu0 %v6636, 64
    %v6679 = vpop.permute.xlu0 %6678
    %6680 = vrot.lane.b32.xlu0 %v6637, 64
    %v6681 = vpop.permute.xlu0 %6680
    %6682 = vrot.lane.b32.xlu0 %v6638, 64
    %v6683 = vpop.permute.xlu0 %6682
    %6684 = vrot.lane.b32.xlu0 %v6639, 64
    %v6685 = vpop.permute.xlu0 %6684
    %6686 = vrot.lane.b32.xlu0 %v6640, 64
    %v6687 = vpop.permute.xlu0 %6686
    %6688 = vrot.lane.b32.xlu0 %v6641, 64
    %v6689 = vpop.permute.xlu0 %6688
    %v6706 = vmul.f32 %v6208, %v6659
    %v6707 = vmul.f32 %v6223, %v6661
    %v6708 = vmul.f32 %v6238, %v6663
    %v6709 = vmul.f32 %v6253, %v6665
    %v6710 = vmul.f32 %v6268, %v6667
    %v6711 = vmul.f32 %v6283, %v6669
    %v6712 = vmul.f32 %v6298, %v6671
    %v6713 = vmul.f32 %v6313, %v6673
    %v6714 = vmul.f32 %v6328, %v6675
    %v6715 = vmul.f32 %v6343, %v6677
    %v6716 = vmul.f32 %v6358, %v6679
    %v6717 = vmul.f32 %v6373, %v6681
    %v6718 = vmul.f32 %v6388, %v6683
    %v6719 = vmul.f32 %v6403, %v6685
    %v6720 = vmul.f32 %v6418, %v6687
    %v6721 = vmul.f32 %v6433, %v6689
    %v6738 = vrot.slane %v6707, 7
    %v6739 = vsel %vm1207, %v6738, %v6706
    %v6740 = vrot.slane %v6708, 6
    %v6741 = vsel %vm1210, %v6740, %v6739
    %v6742 = vrot.slane %v6709, 5
    %v6743 = vsel %vm1213, %v6742, %v6741
    %v6744 = vrot.slane %v6710, 4
    %v6745 = vsel %vm1216, %v6744, %v6743
    %v6746 = vrot.slane %v6711, 3
    %v6747 = vsel %vm1219, %v6746, %v6745
    %v6748 = vrot.slane %v6712, 2
    %v6749 = vsel %vm1222, %v6748, %v6747
    %v6750 = vrot.slane %v6713, 1
    %v6751 = vsel %vm1225, %v6750, %v6749
    %v6752 = vrot.slane %v6715, 7
    %v6753 = vsel %vm1207, %v6752, %v6714
    %v6754 = vrot.slane %v6716, 6
    %v6755 = vsel %vm1210, %v6754, %v6753
    %v6756 = vrot.slane %v6717, 5
    %v6757 = vsel %vm1213, %v6756, %v6755
    %v6758 = vrot.slane %v6718, 4
    %v6759 = vsel %vm1216, %v6758, %v6757
    %v6760 = vrot.slane %v6719, 3
    %v6761 = vsel %vm1219, %v6760, %v6759
    %v6762 = vrot.slane %v6720, 2
    %v6763 = vsel %vm1222, %v6762, %v6761
    %v6764 = vrot.slane %v6721, 1
    %v6765 = vsel %vm1225, %v6764, %v6763
    %6766 = vrot.lane.b32.xlu0 %v6751, 32
    %v6767 = vpop.permute.xlu0 %6766
    %6768 = vrot.lane.b32.xlu0 %v6765, 32
    %v6769 = vpop.permute.xlu0 %6768
    %6772 = vst.msk [vmem:[#allocation9] sm:$0xff] %vm230, %v6767
    %6773 = vst.msk [vmem:[#allocation9 + $0x8] sm:$0xff] %vm230, %v6769
    // Predicated region
    $region42: #{tpu_custom_call.1} parent=1 // pred_check
      _
    $region43: #{tpu_custom_call.1} parent=1 // pred_check_branch
      %6775 = sbr.rel (0) target = $region45
    $region44: #{tpu_custom_call.1} parent=1 // pred_region
      %6777 = vsyncadd [#allocation5], 0
      %s6778 = sshll.u32 [#allocation9], 4
      %s6779 = int_to_ptr.vmem [resolvable:$true] %s6778
      %s6780 = sshll.u32 %s7, 4
      %s6781 = int_to_ptr.hbm [resolvable:$true] %s6780
      %6786 = dma.vmem_to_hbm [thread:$0]  %s6779, 256, %s6781, [#allocation5], 128, 128, 8
    $region45: #{tpu_custom_call.1} parent=1 // pred_fallthru
      _
    // Predicated region
    $region46: #{tpu_custom_call.1} parent=1 // pred_check
      _
    $region47: #{tpu_custom_call.1} parent=1 // pred_check_branch
      %6788 = sbr.rel (0) target = $region49
    $region48: #{tpu_custom_call.1} parent=1 // pred_region
      %6790 = dma.done [#allocation5], 256
    $region49: #{tpu_custom_call.1} parent=1 // pred_fallthru
      _
    %6791 = vsyncpa [#allocation4], 1
    %6792 = vsyncpa [#allocation7], 1
    %6793 = vsyncpa [#allocation5], 1

</llo_original>
